<compile_context>
chip_gen: v7x
topology: tpu7x:2x2x1
jax: 0.10.0
libtpu: 0.0.40
codegen_flags: <defaults>
</compile_context>

<pallas_src>
import functools

import jax
import jax.numpy as jnp
from jax.experimental import pallas as pl
from jax.experimental.pallas import tpu as pltpu


def _spatial_attention_kernel(x_ref, w_ref, o_ref, sum_ref, max_ref, fpad_ref,
                              *, C, K, P, W, L, PAD):
    # x_ref:    (Bn, Ct, L)        VMEM   lane-dense channel slabs (this chunk)
    # w_ref:    (2*K*K,)           SMEM   conv weights flattened [c, ky, kx]
    # o_ref:    (Bn, 1, L)         VMEM   lane-dense output attention maps
    # sum_ref:  (Bn, L)    f32     VMEM   running channel sum
    # max_ref:  (Bn, L)    f32     VMEM   running channel max
    # fpad_ref: (2, Bn, Lpad) f32  VMEM   flattened, halo-padded [avg, max]
    c_i = pl.program_id(1)
    n_c = pl.num_programs(1)
    Bn, Ct, _ = x_ref.shape

    # ---- init running sum / max on the first channel chunk ----
    @pl.when(c_i == 0)
    def _init():
        sum_ref[...] = jnp.zeros(sum_ref.shape, sum_ref.dtype)
        max_ref[...] = jnp.full(max_ref.shape, -jnp.inf, max_ref.dtype)

    # ---- single pass over this chunk: each channel slab is read once ----
    s = sum_ref[...]
    m = max_ref[...]
    for c in range(Ct):                       # static (small) unrolled loop
        slab = x_ref[:, c, :].astype(jnp.float32)   # (Bn, L) lane-dense
        s = s + slab
        m = jnp.maximum(m, slab)
    sum_ref[...] = s
    max_ref[...] = m

    # ---- last chunk: 7x7 zero-padded conv + sigmoid + lane-dense store ----
    @pl.when(c_i == n_c - 1)
    def _finalize():
        avg = sum_ref[...] * (1.0 / C)        # (Bn, L)
        mx = max_ref[...]

        # Zero only the P*(W+1)-wide halos; interior is fully rewritten.
        zeros_halo = jnp.zeros((2, Bn, PAD), jnp.float32)
        fpad_ref[:, :, pl.ds(0, PAD)] = zeros_halo
        fpad_ref[:, :, pl.ds(PAD + L, PAD)] = zeros_halo
        fpad_ref[0, :, pl.ds(PAD, L)] = avg
        fpad_ref[1, :, pl.ds(PAD, L)] = mx

        # Per-kx column-validity masks (left/right zero-padding). Row padding
        # is handled by the zero halo in the flattened layout.
        xcoord = jax.lax.broadcasted_iota(jnp.int32, (Bn, L), 1) % W
        col_ok = []
        for kx in range(K):
            dx = kx - P
            if dx > 0:
                col_ok.append(xcoord < (W - dx))
            elif dx < 0:
                col_ok.append(xcoord >= (-dx))
            else:
                col_ok.append(None)

        # 2*K*K shifted MACs with 4 independent accumulators.
        accs = [jnp.zeros((Bn, L), jnp.float32) for _ in range(4)]
        for c in range(2):
            for ky in range(K):
                a = 2 * c + (ky & 1)
                for kx in range(K):
                    wv = w_ref[c * K * K + ky * K + kx]          # SMEM scalar
                    win = fpad_ref[c, :, pl.ds(ky * W + kx, L)]  # (Bn, L)
                    if col_ok[kx] is not None:
                        win = jnp.where(col_ok[kx], win, 0.0)
                    accs[a] = accs[a] + wv * win
        total = (accs[0] + accs[1]) + (accs[2] + accs[3])

        o_ref[:, 0, :] = jax.nn.sigmoid(total).astype(o_ref.dtype)


def _largest_divisor_leq(n, cap):
    cap = max(1, min(n, cap))
    for d in range(cap, 0, -1):
        if n % d == 0:
            return d
    return 1


def spatial_attention_forward(x_nchw, conv_w):
    """x_nchw: (N, C, H, W); conv_w: (1, 2, K, K)  ->  (N, 1, H, W)."""
    N, C, H, W = x_nchw.shape
    K = conv_w.shape[-1]
    P = K // 2
    L = H * W
    PAD = P * (W + 1)            # flattened halo: P rows of W plus P columns
    Lpad = L + 2 * PAD

    # Free metadata reshapes to lane-dense layouts (contiguous NCHW).
    x_flat = x_nchw.reshape(N, C, L)
    w_flat = conv_w.reshape(-1).astype(jnp.float32)     # (2*K*K,)

    # Batch images per step (<=8 for sublane packing) while keeping >=2 steps
    # on the parallel N axis when possible (v7x has 2 TensorCores).
    Bn = 1 if N <= 1 else _largest_divisor_leq(N, min(8, N // 2))
    # Channel chunk: full C when small / not 8-divisible (always a legal
    # block), otherwise a multiple of 8 to satisfy the sublane constraint.
    if C <= 32 or C % 8 != 0:
        Ct = C
    else:
        Ct = 16 if C % 16 == 0 else 8

    grid = (N // Bn, C // Ct)

    kernel = functools.partial(_spatial_attention_kernel,
                               C=C, K=K, P=P, W=W, L=L, PAD=PAD)

    # Explicit VMEM budget: 2x double-buffered x block + out + scratch.
    def _pad_to(v, m):
        return ((v + m - 1) // m) * m
    itemsize = jnp.dtype(x_nchw.dtype).itemsize
    lanes_L = _pad_to(L, 128)
    lanes_Lp = _pad_to(Lpad, 128)
    x_block = Bn * _pad_to(Ct, 8) * lanes_L * itemsize * 2
    o_block = Bn * 8 * lanes_L * itemsize * 2
    scratch = (2 * _pad_to(Bn, 8) * lanes_L + 2 * _pad_to(Bn, 8) * lanes_Lp) * 4
    vmem_limit = int(min(64 * 1024 * 1024,
                         max(4 * 1024 * 1024, 2 * (x_block + o_block + scratch))))

    out_flat = pl.pallas_call(
        kernel,
        out_shape=jax.ShapeDtypeStruct((N, 1, L), x_nchw.dtype),
        grid=grid,
        in_specs=[
            pl.BlockSpec((Bn, Ct, L), lambda n, c: (n, c, 0)),
            pl.BlockSpec(memory_space=pltpu.MemorySpace.SMEM),
        ],
        out_specs=pl.BlockSpec((Bn, 1, L), lambda n, c: (n, 0, 0)),
        scratch_shapes=[
            pltpu.VMEM((Bn, L), jnp.float32),        # running sum
            pltpu.VMEM((Bn, L), jnp.float32),        # running max
            pltpu.VMEM((2, Bn, Lpad), jnp.float32),  # padded [avg, max]
        ],
        compiler_params=pltpu.CompilerParams(
            dimension_semantics=("parallel", "arbitrary"),
            vmem_limit_bytes=vmem_limit),
    )(x_flat, w_flat)

    return out_flat.reshape(N, 1, H, W)


def reference_forward(x, conv_w):
    avg = jnp.mean(x, axis=1, keepdims=True)
    mx = jnp.max(x, axis=1, keepdims=True)
    feat = jnp.concatenate([avg, mx], axis=1)                    # (N, 2, H, W)
    y = jax.lax.conv_general_dilated(
        feat, conv_w, window_strides=(1, 1), padding="SAME",
        dimension_numbers=("NCHW", "OIHW", "NCHW"))
    return jax.nn.sigmoid(y)


if __name__ == "__main__":
    key = jax.random.PRNGKey(0)
    k_x, k_w = jax.random.split(key, 2)

    N, C, H, W, K = 2, 4, 16, 16, 7

    x = jax.random.normal(k_x, (N, C, H, W), dtype=jnp.float32)
    conv_w = jax.random.normal(k_w, (1, 2, K, K), dtype=jnp.float32) * 0.1

    out = spatial_attention_forward(x, conv_w)
    out = jax.block_until_ready(out)

    ref = reference_forward(x, conv_w)
    assert out.shape == (N, 1, H, W), out.shape
    assert jnp.allclose(out, ref, rtol=1e-4, atol=1e-4), float(
        jnp.max(jnp.abs(out - ref)))

    print("KERNEL_OK")
</pallas_src>

<mosaic_0001>
module attributes {stable_mosaic.version = 11 : i64} {
  func.func @_spatial_attention_kernel(%arg0: i32, %arg1: i32, %arg2: memref<1x4x256xf32, #tpu.memory_space<vmem>>, %arg3: memref<98xf32, #tpu.memory_space<smem>>, %arg4: memref<1x1x256xf32, #tpu.memory_space<vmem>>, %arg5: memref<1x256xf32, #tpu.memory_space<vmem>>, %arg6: memref<1x256xf32, #tpu.memory_space<vmem>>, %arg7: memref<2x1x358xf32, #tpu.memory_space<vmem>>) attributes {dimension_semantics = [#tpu.dimension_semantics<parallel>, #tpu.dimension_semantics<arbitrary>], iteration_bounds = array<i64: 2, 1>, scalar_prefetch = 0 : i64, scratch_operands = 3 : i64, tpu.core_type = #tpu.core_type<tc>, window_params = [{transform_indices = @transform_0, window_bounds = array<i64: 1, 4, 256>}, {transform_indices = @transform_1, window_bounds = array<i64: 98>}, {transform_indices = @transform_2, window_bounds = array<i64: 1, 1, 256>}]} {
    %c0_i32 = arith.constant 0 : i32
    %0 = arith.cmpi eq, %arg1, %c0_i32 : i32
    %1 = arith.extui %0 : i1 to i32
    %c0_i32_0 = arith.constant 0 : i32
    %2 = arith.cmpi ne, %1, %c0_i32_0 : i32
    scf.if %2 {
      %cst = arith.constant 0.000000e+00 : f32
      %26 = vector.broadcast %cst : f32 to vector<1x256xf32>
      %c0_19 = arith.constant 0 : index
      %c0_20 = arith.constant 0 : index
      %27 = vector.load %arg5[%c0_19, %c0_20] : memref<1x256xf32, #tpu.memory_space<vmem>>, vector<1x256xf32>
      tpu.vector_store %arg5[%c0_19, %c0_20], %26 {strides = array<i32>} : memref<1x256xf32, #tpu.memory_space<vmem>>, vector<1x256xf32>,
      %cst_21 = arith.constant 0xFF800000 : f32
      %28 = vector.broadcast %cst_21 : f32 to vector<1x256xf32>
      %c0_22 = arith.constant 0 : index
      %c0_23 = arith.constant 0 : index
      %29 = vector.load %arg6[%c0_22, %c0_23] : memref<1x256xf32, #tpu.memory_space<vmem>>, vector<1x256xf32>
      tpu.vector_store %arg6[%c0_22, %c0_23], %28 {strides = array<i32>} : memref<1x256xf32, #tpu.memory_space<vmem>>, vector<1x256xf32>,
    } else {
    }
    %c0 = arith.constant 0 : index
    %c0_1 = arith.constant 0 : index
    %3 = vector.load %arg5[%c0, %c0_1] : memref<1x256xf32, #tpu.memory_space<vmem>>, vector<1x256xf32>
    %c0_2 = arith.constant 0 : index
    %c0_3 = arith.constant 0 : index
    %4 = vector.load %arg6[%c0_2, %c0_3] : memref<1x256xf32, #tpu.memory_space<vmem>>, vector<1x256xf32>
    %c0_4 = arith.constant 0 : index
    %c0_5 = arith.constant 0 : index
    %c0_6 = arith.constant 0 : index
    %5 = vector.load %arg2[%c0_4, %c0_5, %c0_6] : memref<1x4x256xf32, #tpu.memory_space<vmem>>, vector<1x1x256xf32>
    %6 = vector.shape_cast %5 : vector<1x1x256xf32> to vector<1x256xf32>
    %7 = arith.addf %3, %6 : vector<1x256xf32>
    %8 = arith.maximumf %4, %6 : vector<1x256xf32>
    %c0_7 = arith.constant 0 : index
    %c1 = arith.constant 1 : index
    %c0_8 = arith.constant 0 : index
    %9 = vector.load %arg2[%c0_7, %c1, %c0_8] : memref<1x4x256xf32, #tpu.memory_space<vmem>>, vector<1x1x256xf32>
    %10 = vector.shape_cast %9 : vector<1x1x256xf32> to vector<1x256xf32>
    %11 = arith.addf %7, %10 : vector<1x256xf32>
    %12 = arith.maximumf %8, %10 : vector<1x256xf32>
    %c0_9 = arith.constant 0 : index
    %c2 = arith.constant 2 : index
    %c0_10 = arith.constant 0 : index
    %13 = vector.load %arg2[%c0_9, %c2, %c0_10] : memref<1x4x256xf32, #tpu.memory_space<vmem>>, vector<1x1x256xf32>
    %14 = vector.shape_cast %13 : vector<1x1x256xf32> to vector<1x256xf32>
    %15 = arith.addf %11, %14 : vector<1x256xf32>
    %16 = arith.maximumf %12, %14 : vector<1x256xf32>
    %c0_11 = arith.constant 0 : index
    %c3 = arith.constant 3 : index
    %c0_12 = arith.constant 0 : index
    %17 = vector.load %arg2[%c0_11, %c3, %c0_12] : memref<1x4x256xf32, #tpu.memory_space<vmem>>, vector<1x1x256xf32>
    %18 = vector.shape_cast %17 : vector<1x1x256xf32> to vector<1x256xf32>
    %19 = arith.addf %15, %18 : vector<1x256xf32>
    %20 = arith.maximumf %16, %18 : vector<1x256xf32>
    %c0_13 = arith.constant 0 : index
    %c0_14 = arith.constant 0 : index
    %21 = vector.load %arg5[%c0_13, %c0_14] : memref<1x256xf32, #tpu.memory_space<vmem>>, vector<1x256xf32>
    tpu.vector_store %arg5[%c0_13, %c0_14], %19 {strides = array<i32>} : memref<1x256xf32, #tpu.memory_space<vmem>>, vector<1x256xf32>,
    %c0_15 = arith.constant 0 : index
    %c0_16 = arith.constant 0 : index
    %22 = vector.load %arg6[%c0_15, %c0_16] : memref<1x256xf32, #tpu.memory_space<vmem>>, vector<1x256xf32>
    tpu.vector_store %arg6[%c0_15, %c0_16], %20 {strides = array<i32>} : memref<1x256xf32, #tpu.memory_space<vmem>>, vector<1x256xf32>,
    %c0_i32_17 = arith.constant 0 : i32
    %23 = arith.cmpi eq, %arg1, %c0_i32_17 : i32
    %24 = arith.extui %23 : i1 to i32
    %c0_i32_18 = arith.constant 0 : i32
    %25 = arith.cmpi ne, %24, %c0_i32_18 : i32
    scf.if %25 {
      %c0_19 = arith.constant 0 : index
      %c0_20 = arith.constant 0 : index
      %26 = vector.load %arg5[%c0_19, %c0_20] : memref<1x256xf32, #tpu.memory_space<vmem>>, vector<1x256xf32>
      %cst = arith.constant 2.500000e-01 : f32
      %27 = vector.broadcast %cst : f32 to vector<1x256xf32>
      %28 = arith.mulf %26, %27 : vector<1x256xf32>
      %c0_21 = arith.constant 0 : index
      %c0_22 = arith.constant 0 : index
      %29 = vector.load %arg6[%c0_21, %c0_22] : memref<1x256xf32, #tpu.memory_space<vmem>>, vector<1x256xf32>
      %cst_23 = arith.constant 0.000000e+00 : f32
      %30 = vector.broadcast %cst_23 : f32 to vector<2x1x51xf32>
      %c0_24 = arith.constant 0 : index
      %c0_25 = arith.constant 0 : index
      %c0_26 = arith.constant 0 : index
      %31 = vector.load %arg7[%c0_24, %c0_25, %c0_26] : memref<2x1x358xf32, #tpu.memory_space<vmem>>, vector<2x1x51xf32>
      tpu.vector_store %arg7[%c0_24, %c0_25, %c0_26], %30 {strides = array<i32>} : memref<2x1x358xf32, #tpu.memory_space<vmem>>, vector<2x1x51xf32>,
      %c0_27 = arith.constant 0 : index
      %c0_28 = arith.constant 0 : index
      %c307 = arith.constant 307 : index
      %32 = vector.load %arg7[%c0_27, %c0_28, %c307] : memref<2x1x358xf32, #tpu.memory_space<vmem>>, vector<2x1x51xf32>
      tpu.vector_store %arg7[%c0_27, %c0_28, %c307], %30 {strides = array<i32>} : memref<2x1x358xf32, #tpu.memory_space<vmem>>, vector<2x1x51xf32>,
      %c0_29 = arith.constant 0 : index
      %c0_30 = arith.constant 0 : index
      %c51 = arith.constant 51 : index
      %33 = vector.load %arg7[%c0_29, %c0_30, %c51] : memref<2x1x358xf32, #tpu.memory_space<vmem>>, vector<1x1x256xf32>
      %34 = vector.shape_cast %33 : vector<1x1x256xf32> to vector<1x256xf32>
      %35 = vector.shape_cast %28 : vector<1x256xf32> to vector<1x1x256xf32>
      tpu.vector_store %arg7[%c0_29, %c0_30, %c51], %35 {strides = array<i32>} : memref<2x1x358xf32, #tpu.memory_space<vmem>>, vector<1x1x256xf32>,
      %c1_31 = arith.constant 1 : index
      %c0_32 = arith.constant 0 : index
      %c51_33 = arith.constant 51 : index
      %36 = vector.load %arg7[%c1_31, %c0_32, %c51_33] : memref<2x1x358xf32, #tpu.memory_space<vmem>>, vector<1x1x256xf32>
      %37 = vector.shape_cast %36 : vector<1x1x256xf32> to vector<1x256xf32>
      %38 = vector.shape_cast %29 : vector<1x256xf32> to vector<1x1x256xf32>
      tpu.vector_store %arg7[%c1_31, %c0_32, %c51_33], %38 {strides = array<i32>} : memref<2x1x358xf32, #tpu.memory_space<vmem>>, vector<1x1x256xf32>,
      %39 = tpu.iota {dimensions = array<i32: 1>} : vector<1x256xi32>
      %c16_i32 = arith.constant 16 : i32
      %c0_i32_34 = arith.constant 0 : i32
      %40 = arith.cmpi eq, %c16_i32, %c0_i32_34 : i32
      %c1_i32 = arith.constant 1 : i32
      %41 = arith.select %40, %c1_i32, %c16_i32 : i32
      %42 = vector.broadcast %41 : i32 to vector<1x256xi32>
      %43 = arith.remsi %39, %42 : vector<1x256xi32>
      %c0_i32_35 = arith.constant 0 : i32
      %44 = vector.broadcast %c0_i32_35 : i32 to vector<1x256xi32>
      %45 = arith.cmpi ne, %43, %44 : vector<1x256xi32>
      %c0_i32_36 = arith.constant 0 : i32
      %46 = vector.broadcast %c0_i32_36 : i32 to vector<1x256xi32>
      %47 = arith.cmpi slt, %43, %46 : vector<1x256xi32>
      %c0_i32_37 = arith.constant 0 : i32
      %48 = arith.cmpi slt, %41, %c0_i32_37 : i32
      %49 = vector.broadcast %48 : i1 to vector<1x256xi1>
      %50 = vector.broadcast %49 : vector<1x256xi1> to vector<1x256xi1>
      %51 = arith.xori %47, %50 : vector<1x256xi1>
      %52 = arith.andi %51, %45 : vector<1x256xi1>
      %53 = vector.broadcast %41 : i32 to vector<1x256xi32>
      %54 = arith.addi %43, %53 : vector<1x256xi32>
      %55 = arith.select %52, %54, %43 : vector<1x256xi1>, vector<1x256xi32>
      %c3_i32 = arith.constant 3 : i32
      %56 = vector.broadcast %c3_i32 : i32 to vector<1x256xi32>
      %57 = arith.cmpi sge, %55, %56 : vector<1x256xi32>
      %c2_i32 = arith.constant 2 : i32
      %58 = vector.broadcast %c2_i32 : i32 to vector<1x256xi32>
      %59 = arith.cmpi sge, %55, %58 : vector<1x256xi32>
      %c1_i32_38 = arith.constant 1 : i32
      %60 = vector.broadcast %c1_i32_38 : i32 to vector<1x256xi32>
      %61 = arith.cmpi sge, %55, %60 : vector<1x256xi32>
      %c15_i32 = arith.constant 15 : i32
      %62 = vector.broadcast %c15_i32 : i32 to vector<1x256xi32>
      %63 = arith.cmpi slt, %55, %62 : vector<1x256xi32>
      %c14_i32 = arith.constant 14 : i32
      %64 = vector.broadcast %c14_i32 : i32 to vector<1x256xi32>
      %65 = arith.cmpi slt, %55, %64 : vector<1x256xi32>
      %c13_i32 = arith.constant 13 : i32
      %66 = vector.broadcast %c13_i32 : i32 to vector<1x256xi32>
      %67 = arith.cmpi slt, %55, %66 : vector<1x256xi32>
      %cst_39 = arith.constant 0.000000e+00 : f32
      %68 = vector.broadcast %cst_39 : f32 to vector<1x256xf32>
      %cst_40 = arith.constant 0.000000e+00 : f32
      %69 = vector.broadcast %cst_40 : f32 to vector<1x256xf32>
      %cst_41 = arith.constant 0.000000e+00 : f32
      %70 = vector.broadcast %cst_41 : f32 to vector<1x256xf32>
      %cst_42 = arith.constant 0.000000e+00 : f32
      %71 = vector.broadcast %cst_42 : f32 to vector<1x256xf32>
      %c0_43 = arith.constant 0 : index
      %72 = memref.load %arg3[%c0_43] : memref<98xf32, #tpu.memory_space<smem>>
      %c0_44 = arith.constant 0 : index
      %c0_45 = arith.constant 0 : index
      %c0_46 = arith.constant 0 : index
      %73 = vector.load %arg7[%c0_44, %c0_45, %c0_46] : memref<2x1x358xf32, #tpu.memory_space<vmem>>, vector<1x1x256xf32>
      %74 = vector.shape_cast %73 : vector<1x1x256xf32> to vector<1x256xf32>
      %cst_47 = arith.constant 0.000000e+00 : f32
      %75 = vector.broadcast %cst_47 : f32 to vector<1x256xf32>
      %76 = arith.select %57, %74, %75 : vector<1x256xi1>, vector<1x256xf32>
      %77 = vector.broadcast %72 : f32 to vector<1x256xf32>
      %78 = arith.mulf %77, %76 : vector<1x256xf32>
      %79 = arith.addf %68, %78 : vector<1x256xf32>
      %c1_48 = arith.constant 1 : index
      %80 = memref.load %arg3[%c1_48] : memref<98xf32, #tpu.memory_space<smem>>
      %c0_49 = arith.constant 0 : index
      %c0_50 = arith.constant 0 : index
      %c1_51 = arith.constant 1 : index
      %81 = vector.load %arg7[%c0_49, %c0_50, %c1_51] : memref<2x1x358xf32, #tpu.memory_space<vmem>>, vector<1x1x256xf32>
      %82 = vector.shape_cast %81 : vector<1x1x256xf32> to vector<1x256xf32>
      %cst_52 = arith.constant 0.000000e+00 : f32
      %83 = vector.broadcast %cst_52 : f32 to vector<1x256xf32>
      %84 = arith.select %59, %82, %83 : vector<1x256xi1>, vector<1x256xf32>
      %85 = vector.broadcast %80 : f32 to vector<1x256xf32>
      %86 = arith.mulf %85, %84 : vector<1x256xf32>
      %87 = arith.addf %79, %86 : vector<1x256xf32>
      %c2_53 = arith.constant 2 : index
      %88 = memref.load %arg3[%c2_53] : memref<98xf32, #tpu.memory_space<smem>>
      %c0_54 = arith.constant 0 : index
      %c0_55 = arith.constant 0 : index
      %c2_56 = arith.constant 2 : index
      %89 = vector.load %arg7[%c0_54, %c0_55, %c2_56] : memref<2x1x358xf32, #tpu.memory_space<vmem>>, vector<1x1x256xf32>
      %90 = vector.shape_cast %89 : vector<1x1x256xf32> to vector<1x256xf32>
      %cst_57 = arith.constant 0.000000e+00 : f32
      %91 = vector.broadcast %cst_57 : f32 to vector<1x256xf32>
      %92 = arith.select %61, %90, %91 : vector<1x256xi1>, vector<1x256xf32>
      %93 = vector.broadcast %88 : f32 to vector<1x256xf32>
      %94 = arith.mulf %93, %92 : vector<1x256xf32>
      %95 = arith.addf %87, %94 : vector<1x256xf32>
      %c3_58 = arith.constant 3 : index
      %96 = memref.load %arg3[%c3_58] : memref<98xf32, #tpu.memory_space<smem>>
      %c0_59 = arith.constant 0 : index
      %c0_60 = arith.constant 0 : index
      %c3_61 = arith.constant 3 : index
      %97 = vector.load %arg7[%c0_59, %c0_60, %c3_61] : memref<2x1x358xf32, #tpu.memory_space<vmem>>, vector<1x1x256xf32>
      %98 = vector.shape_cast %97 : vector<1x1x256xf32> to vector<1x256xf32>
      %99 = vector.broadcast %96 : f32 to vector<1x256xf32>
      %100 = arith.mulf %99, %98 : vector<1x256xf32>
      %101 = arith.addf %95, %100 : vector<1x256xf32>
      %c4 = arith.constant 4 : index
      %102 = memref.load %arg3[%c4] : memref<98xf32, #tpu.memory_space<smem>>
      %c0_62 = arith.constant 0 : index
      %c0_63 = arith.constant 0 : index
      %c4_64 = arith.constant 4 : index
      %103 = vector.load %arg7[%c0_62, %c0_63, %c4_64] : memref<2x1x358xf32, #tpu.memory_space<vmem>>, vector<1x1x256xf32>
      %104 = vector.shape_cast %103 : vector<1x1x256xf32> to vector<1x256xf32>
      %cst_65 = arith.constant 0.000000e+00 : f32
      %105 = vector.broadcast %cst_65 : f32 to vector<1x256xf32>
      %106 = arith.select %63, %104, %105 : vector<1x256xi1>, vector<1x256xf32>
      %107 = vector.broadcast %102 : f32 to vector<1x256xf32>
      %108 = arith.mulf %107, %106 : vector<1x256xf32>
      %109 = arith.addf %101, %108 : vector<1x256xf32>
      %c5 = arith.constant 5 : index
      %110 = memref.load %arg3[%c5] : memref<98xf32, #tpu.memory_space<smem>>
      %c0_66 = arith.constant 0 : index
      %c0_67 = arith.constant 0 : index
      %c5_68 = arith.constant 5 : index
      %111 = vector.load %arg7[%c0_66, %c0_67, %c5_68] : memref<2x1x358xf32, #tpu.memory_space<vmem>>, vector<1x1x256xf32>
      %112 = vector.shape_cast %111 : vector<1x1x256xf32> to vector<1x256xf32>
      %cst_69 = arith.constant 0.000000e+00 : f32
      %113 = vector.broadcast %cst_69 : f32 to vector<1x256xf32>
      %114 = arith.select %65, %112, %113 : vector<1x256xi1>, vector<1x256xf32>
      %115 = vector.broadcast %110 : f32 to vector<1x256xf32>
      %116 = arith.mulf %115, %114 : vector<1x256xf32>
      %117 = arith.addf %109, %116 : vector<1x256xf32>
      %c6 = arith.constant 6 : index
      %118 = memref.load %arg3[%c6] : memref<98xf32, #tpu.memory_space<smem>>
      %c0_70 = arith.constant 0 : index
      %c0_71 = arith.constant 0 : index
      %c6_72 = arith.constant 6 : index
      %119 = vector.load %arg7[%c0_70, %c0_71, %c6_72] : memref<2x1x358xf32, #tpu.memory_space<vmem>>, vector<1x1x256xf32>
      %120 = vector.shape_cast %119 : vector<1x1x256xf32> to vector<1x256xf32>
      %cst_73 = arith.constant 0.000000e+00 : f32
      %121 = vector.broadcast %cst_73 : f32 to vector<1x256xf32>
      %122 = arith.select %67, %120, %121 : vector<1x256xi1>, vector<1x256xf32>
      %123 = vector.broadcast %118 : f32 to vector<1x256xf32>
      %124 = arith.mulf %123, %122 : vector<1x256xf32>
      %125 = arith.addf %117, %124 : vector<1x256xf32>
      %c7 = arith.constant 7 : index
      %126 = memref.load %arg3[%c7] : memref<98xf32, #tpu.memory_space<smem>>
      %c0_74 = arith.constant 0 : index
      %c0_75 = arith.constant 0 : index
      %c16 = arith.constant 16 : index
      %127 = vector.load %arg7[%c0_74, %c0_75, %c16] : memref<2x1x358xf32, #tpu.memory_space<vmem>>, vector<1x1x256xf32>
      %128 = vector.shape_cast %127 : vector<1x1x256xf32> to vector<1x256xf32>
      %cst_76 = arith.constant 0.000000e+00 : f32
      %129 = vector.broadcast %cst_76 : f32 to vector<1x256xf32>
      %130 = arith.select %57, %128, %129 : vector<1x256xi1>, vector<1x256xf32>
      %131 = vector.broadcast %126 : f32 to vector<1x256xf32>
      %132 = arith.mulf %131, %130 : vector<1x256xf32>
      %133 = arith.addf %69, %132 : vector<1x256xf32>
      %c8 = arith.constant 8 : index
      %134 = memref.load %arg3[%c8] : memref<98xf32, #tpu.memory_space<smem>>
      %c0_77 = arith.constant 0 : index
      %c0_78 = arith.constant 0 : index
      %c17 = arith.constant 17 : index
      %135 = vector.load %arg7[%c0_77, %c0_78, %c17] : memref<2x1x358xf32, #tpu.memory_space<vmem>>, vector<1x1x256xf32>
      %136 = vector.shape_cast %135 : vector<1x1x256xf32> to vector<1x256xf32>
      %cst_79 = arith.constant 0.000000e+00 : f32
      %137 = vector.broadcast %cst_79 : f32 to vector<1x256xf32>
      %138 = arith.select %59, %136, %137 : vector<1x256xi1>, vector<1x256xf32>
      %139 = vector.broadcast %134 : f32 to vector<1x256xf32>
      %140 = arith.mulf %139, %138 : vector<1x256xf32>
      %141 = arith.addf %133, %140 : vector<1x256xf32>
      %c9 = arith.constant 9 : index
      %142 = memref.load %arg3[%c9] : memref<98xf32, #tpu.memory_space<smem>>
      %c0_80 = arith.constant 0 : index
      %c0_81 = arith.constant 0 : index
      %c18 = arith.constant 18 : index
      %143 = vector.load %arg7[%c0_80, %c0_81, %c18] : memref<2x1x358xf32, #tpu.memory_space<vmem>>, vector<1x1x256xf32>
      %144 = vector.shape_cast %143 : vector<1x1x256xf32> to vector<1x256xf32>
      %cst_82 = arith.constant 0.000000e+00 : f32
      %145 = vector.broadcast %cst_82 : f32 to vector<1x256xf32>
      %146 = arith.select %61, %144, %145 : vector<1x256xi1>, vector<1x256xf32>
      %147 = vector.broadcast %142 : f32 to vector<1x256xf32>
      %148 = arith.mulf %147, %146 : vector<1x256xf32>
      %149 = arith.addf %141, %148 : vector<1x256xf32>
      %c10 = arith.constant 10 : index
      %150 = memref.load %arg3[%c10] : memref<98xf32, #tpu.memory_space<smem>>
      %c0_83 = arith.constant 0 : index
      %c0_84 = arith.constant 0 : index
      %c19 = arith.constant 19 : index
      %151 = vector.load %arg7[%c0_83, %c0_84, %c19] : memref<2x1x358xf32, #tpu.memory_space<vmem>>, vector<1x1x256xf32>
      %152 = vector.shape_cast %151 : vector<1x1x256xf32> to vector<1x256xf32>
      %153 = vector.broadcast %150 : f32 to vector<1x256xf32>
      %154 = arith.mulf %153, %152 : vector<1x256xf32>
      %155 = arith.addf %149, %154 : vector<1x256xf32>
      %c11 = arith.constant 11 : index
      %156 = memref.load %arg3[%c11] : memref<98xf32, #tpu.memory_space<smem>>
      %c0_85 = arith.constant 0 : index
      %c0_86 = arith.constant 0 : index
      %c20 = arith.constant 20 : index
      %157 = vector.load %arg7[%c0_85, %c0_86, %c20] : memref<2x1x358xf32, #tpu.memory_space<vmem>>, vector<1x1x256xf32>
      %158 = vector.shape_cast %157 : vector<1x1x256xf32> to vector<1x256xf32>
      %cst_87 = arith.constant 0.000000e+00 : f32
      %159 = vector.broadcast %cst_87 : f32 to vector<1x256xf32>
      %160 = arith.select %63, %158, %159 : vector<1x256xi1>, vector<1x256xf32>
      %161 = vector.broadcast %156 : f32 to vector<1x256xf32>
      %162 = arith.mulf %161, %160 : vector<1x256xf32>
      %163 = arith.addf %155, %162 : vector<1x256xf32>
      %c12 = arith.constant 12 : index
      %164 = memref.load %arg3[%c12] : memref<98xf32, #tpu.memory_space<smem>>
      %c0_88 = arith.constant 0 : index
      %c0_89 = arith.constant 0 : index
      %c21 = arith.constant 21 : index
      %165 = vector.load %arg7[%c0_88, %c0_89, %c21] : memref<2x1x358xf32, #tpu.memory_space<vmem>>, vector<1x1x256xf32>
      %166 = vector.shape_cast %165 : vector<1x1x256xf32> to vector<1x256xf32>
      %cst_90 = arith.constant 0.000000e+00 : f32
      %167 = vector.broadcast %cst_90 : f32 to vector<1x256xf32>
      %168 = arith.select %65, %166, %167 : vector<1x256xi1>, vector<1x256xf32>
      %169 = vector.broadcast %164 : f32 to vector<1x256xf32>
      %170 = arith.mulf %169, %168 : vector<1x256xf32>
      %171 = arith.addf %163, %170 : vector<1x256xf32>
      %c13 = arith.constant 13 : index
      %172 = memref.load %arg3[%c13] : memref<98xf32, #tpu.memory_space<smem>>
      %c0_91 = arith.constant 0 : index
      %c0_92 = arith.constant 0 : index
      %c22 = arith.constant 22 : index
      %173 = vector.load %arg7[%c0_91, %c0_92, %c22] : memref<2x1x358xf32, #tpu.memory_space<vmem>>, vector<1x1x256xf32>
      %174 = vector.shape_cast %173 : vector<1x1x256xf32> to vector<1x256xf32>
      %cst_93 = arith.constant 0.000000e+00 : f32
      %175 = vector.broadcast %cst_93 : f32 to vector<1x256xf32>
      %176 = arith.select %67, %174, %175 : vector<1x256xi1>, vector<1x256xf32>
      %177 = vector.broadcast %172 : f32 to vector<1x256xf32>
      %178 = arith.mulf %177, %176 : vector<1x256xf32>
      %179 = arith.addf %171, %178 : vector<1x256xf32>
      %c14 = arith.constant 14 : index
      %180 = memref.load %arg3[%c14] : memref<98xf32, #tpu.memory_space<smem>>
      %c0_94 = arith.constant 0 : index
      %c0_95 = arith.constant 0 : index
      %c32 = arith.constant 32 : index
      %181 = vector.load %arg7[%c0_94, %c0_95, %c32] : memref<2x1x358xf32, #tpu.memory_space<vmem>>, vector<1x1x256xf32>
      %182 = vector.shape_cast %181 : vector<1x1x256xf32> to vector<1x256xf32>
      %cst_96 = arith.constant 0.000000e+00 : f32
      %183 = vector.broadcast %cst_96 : f32 to vector<1x256xf32>
      %184 = arith.select %57, %182, %183 : vector<1x256xi1>, vector<1x256xf32>
      %185 = vector.broadcast %180 : f32 to vector<1x256xf32>
      %186 = arith.mulf %185, %184 : vector<1x256xf32>
      %187 = arith.addf %125, %186 : vector<1x256xf32>
      %c15 = arith.constant 15 : index
      %188 = memref.load %arg3[%c15] : memref<98xf32, #tpu.memory_space<smem>>
      %c0_97 = arith.constant 0 : index
      %c0_98 = arith.constant 0 : index
      %c33 = arith.constant 33 : index
      %189 = vector.load %arg7[%c0_97, %c0_98, %c33] : memref<2x1x358xf32, #tpu.memory_space<vmem>>, vector<1x1x256xf32>
      %190 = vector.shape_cast %189 : vector<1x1x256xf32> to vector<1x256xf32>
      %cst_99 = arith.constant 0.000000e+00 : f32
      %191 = vector.broadcast %cst_99 : f32 to vector<1x256xf32>
      %192 = arith.select %59, %190, %191 : vector<1x256xi1>, vector<1x256xf32>
      %193 = vector.broadcast %188 : f32 to vector<1x256xf32>
      %194 = arith.mulf %193, %192 : vector<1x256xf32>
      %195 = arith.addf %187, %194 : vector<1x256xf32>
      %c16_100 = arith.constant 16 : index
      %196 = memref.load %arg3[%c16_100] : memref<98xf32, #tpu.memory_space<smem>>
      %c0_101 = arith.constant 0 : index
      %c0_102 = arith.constant 0 : index
      %c34 = arith.constant 34 : index
      %197 = vector.load %arg7[%c0_101, %c0_102, %c34] : memref<2x1x358xf32, #tpu.memory_space<vmem>>, vector<1x1x256xf32>
      %198 = vector.shape_cast %197 : vector<1x1x256xf32> to vector<1x256xf32>
      %cst_103 = arith.constant 0.000000e+00 : f32
      %199 = vector.broadcast %cst_103 : f32 to vector<1x256xf32>
      %200 = arith.select %61, %198, %199 : vector<1x256xi1>, vector<1x256xf32>
      %201 = vector.broadcast %196 : f32 to vector<1x256xf32>
      %202 = arith.mulf %201, %200 : vector<1x256xf32>
      %203 = arith.addf %195, %202 : vector<1x256xf32>
      %c17_104 = arith.constant 17 : index
      %204 = memref.load %arg3[%c17_104] : memref<98xf32, #tpu.memory_space<smem>>
      %c0_105 = arith.constant 0 : index
      %c0_106 = arith.constant 0 : index
      %c35 = arith.constant 35 : index
      %205 = vector.load %arg7[%c0_105, %c0_106, %c35] : memref<2x1x358xf32, #tpu.memory_space<vmem>>, vector<1x1x256xf32>
      %206 = vector.shape_cast %205 : vector<1x1x256xf32> to vector<1x256xf32>
      %207 = vector.broadcast %204 : f32 to vector<1x256xf32>
      %208 = arith.mulf %207, %206 : vector<1x256xf32>
      %209 = arith.addf %203, %208 : vector<1x256xf32>
      %c18_107 = arith.constant 18 : index
      %210 = memref.load %arg3[%c18_107] : memref<98xf32, #tpu.memory_space<smem>>
      %c0_108 = arith.constant 0 : index
      %c0_109 = arith.constant 0 : index
      %c36 = arith.constant 36 : index
      %211 = vector.load %arg7[%c0_108, %c0_109, %c36] : memref<2x1x358xf32, #tpu.memory_space<vmem>>, vector<1x1x256xf32>
      %212 = vector.shape_cast %211 : vector<1x1x256xf32> to vector<1x256xf32>
      %cst_110 = arith.constant 0.000000e+00 : f32
      %213 = vector.broadcast %cst_110 : f32 to vector<1x256xf32>
      %214 = arith.select %63, %212, %213 : vector<1x256xi1>, vector<1x256xf32>
      %215 = vector.broadcast %210 : f32 to vector<1x256xf32>
      %216 = arith.mulf %215, %214 : vector<1x256xf32>
      %217 = arith.addf %209, %216 : vector<1x256xf32>
      %c19_111 = arith.constant 19 : index
      %218 = memref.load %arg3[%c19_111] : memref<98xf32, #tpu.memory_space<smem>>
      %c0_112 = arith.constant 0 : index
      %c0_113 = arith.constant 0 : index
      %c37 = arith.constant 37 : index
      %219 = vector.load %arg7[%c0_112, %c0_113, %c37] : memref<2x1x358xf32, #tpu.memory_space<vmem>>, vector<1x1x256xf32>
      %220 = vector.shape_cast %219 : vector<1x1x256xf32> to vector<1x256xf32>
      %cst_114 = arith.constant 0.000000e+00 : f32
      %221 = vector.broadcast %cst_114 : f32 to vector<1x256xf32>
      %222 = arith.select %65, %220, %221 : vector<1x256xi1>, vector<1x256xf32>
      %223 = vector.broadcast %218 : f32 to vector<1x256xf32>
      %224 = arith.mulf %223, %222 : vector<1x256xf32>
      %225 = arith.addf %217, %224 : vector<1x256xf32>
      %c20_115 = arith.constant 20 : index
      %226 = memref.load %arg3[%c20_115] : memref<98xf32, #tpu.memory_space<smem>>
      %c0_116 = arith.constant 0 : index
      %c0_117 = arith.constant 0 : index
      %c38 = arith.constant 38 : index
      %227 = vector.load %arg7[%c0_116, %c0_117, %c38] : memref<2x1x358xf32, #tpu.memory_space<vmem>>, vector<1x1x256xf32>
      %228 = vector.shape_cast %227 : vector<1x1x256xf32> to vector<1x256xf32>
      %cst_118 = arith.constant 0.000000e+00 : f32
      %229 = vector.broadcast %cst_118 : f32 to vector<1x256xf32>
      %230 = arith.select %67, %228, %229 : vector<1x256xi1>, vector<1x256xf32>
      %231 = vector.broadcast %226 : f32 to vector<1x256xf32>
      %232 = arith.mulf %231, %230 : vector<1x256xf32>
      %233 = arith.addf %225, %232 : vector<1x256xf32>
      %c21_119 = arith.constant 21 : index
      %234 = memref.load %arg3[%c21_119] : memref<98xf32, #tpu.memory_space<smem>>
      %c0_120 = arith.constant 0 : index
      %c0_121 = arith.constant 0 : index
      %c48 = arith.constant 48 : index
      %235 = vector.load %arg7[%c0_120, %c0_121, %c48] : memref<2x1x358xf32, #tpu.memory_space<vmem>>, vector<1x1x256xf32>
      %236 = vector.shape_cast %235 : vector<1x1x256xf32> to vector<1x256xf32>
      %cst_122 = arith.constant 0.000000e+00 : f32
      %237 = vector.broadcast %cst_122 : f32 to vector<1x256xf32>
      %238 = arith.select %57, %236, %237 : vector<1x256xi1>, vector<1x256xf32>
      %239 = vector.broadcast %234 : f32 to vector<1x256xf32>
      %240 = arith.mulf %239, %238 : vector<1x256xf32>
      %241 = arith.addf %179, %240 : vector<1x256xf32>
      %c22_123 = arith.constant 22 : index
      %242 = memref.load %arg3[%c22_123] : memref<98xf32, #tpu.memory_space<smem>>
      %c0_124 = arith.constant 0 : index
      %c0_125 = arith.constant 0 : index
      %c49 = arith.constant 49 : index
      %243 = vector.load %arg7[%c0_124, %c0_125, %c49] : memref<2x1x358xf32, #tpu.memory_space<vmem>>, vector<1x1x256xf32>
      %244 = vector.shape_cast %243 : vector<1x1x256xf32> to vector<1x256xf32>
      %cst_126 = arith.constant 0.000000e+00 : f32
      %245 = vector.broadcast %cst_126 : f32 to vector<1x256xf32>
      %246 = arith.select %59, %244, %245 : vector<1x256xi1>, vector<1x256xf32>
      %247 = vector.broadcast %242 : f32 to vector<1x256xf32>
      %248 = arith.mulf %247, %246 : vector<1x256xf32>
      %249 = arith.addf %241, %248 : vector<1x256xf32>
      %c23 = arith.constant 23 : index
      %250 = memref.load %arg3[%c23] : memref<98xf32, #tpu.memory_space<smem>>
      %c0_127 = arith.constant 0 : index
      %c0_128 = arith.constant 0 : index
      %c50 = arith.constant 50 : index
      %251 = vector.load %arg7[%c0_127, %c0_128, %c50] : memref<2x1x358xf32, #tpu.memory_space<vmem>>, vector<1x1x256xf32>
      %252 = vector.shape_cast %251 : vector<1x1x256xf32> to vector<1x256xf32>
      %cst_129 = arith.constant 0.000000e+00 : f32
      %253 = vector.broadcast %cst_129 : f32 to vector<1x256xf32>
      %254 = arith.select %61, %252, %253 : vector<1x256xi1>, vector<1x256xf32>
      %255 = vector.broadcast %250 : f32 to vector<1x256xf32>
      %256 = arith.mulf %255, %254 : vector<1x256xf32>
      %257 = arith.addf %249, %256 : vector<1x256xf32>
      %c24 = arith.constant 24 : index
      %258 = memref.load %arg3[%c24] : memref<98xf32, #tpu.memory_space<smem>>
      %c0_130 = arith.constant 0 : index
      %c0_131 = arith.constant 0 : index
      %c51_132 = arith.constant 51 : index
      %259 = vector.load %arg7[%c0_130, %c0_131, %c51_132] : memref<2x1x358xf32, #tpu.memory_space<vmem>>, vector<1x1x256xf32>
      %260 = vector.shape_cast %259 : vector<1x1x256xf32> to vector<1x256xf32>
      %261 = vector.broadcast %258 : f32 to vector<1x256xf32>
      %262 = arith.mulf %261, %260 : vector<1x256xf32>
      %263 = arith.addf %257, %262 : vector<1x256xf32>
      %c25 = arith.constant 25 : index
      %264 = memref.load %arg3[%c25] : memref<98xf32, #tpu.memory_space<smem>>
      %c0_133 = arith.constant 0 : index
      %c0_134 = arith.constant 0 : index
      %c52 = arith.constant 52 : index
      %265 = vector.load %arg7[%c0_133, %c0_134, %c52] : memref<2x1x358xf32, #tpu.memory_space<vmem>>, vector<1x1x256xf32>
      %266 = vector.shape_cast %265 : vector<1x1x256xf32> to vector<1x256xf32>
      %cst_135 = arith.constant 0.000000e+00 : f32
      %267 = vector.broadcast %cst_135 : f32 to vector<1x256xf32>
      %268 = arith.select %63, %266, %267 : vector<1x256xi1>, vector<1x256xf32>
      %269 = vector.broadcast %264 : f32 to vector<1x256xf32>
      %270 = arith.mulf %269, %268 : vector<1x256xf32>
      %271 = arith.addf %263, %270 : vector<1x256xf32>
      %c26 = arith.constant 26 : index
      %272 = memref.load %arg3[%c26] : memref<98xf32, #tpu.memory_space<smem>>
      %c0_136 = arith.constant 0 : index
      %c0_137 = arith.constant 0 : index
      %c53 = arith.constant 53 : index
      %273 = vector.load %arg7[%c0_136, %c0_137, %c53] : memref<2x1x358xf32, #tpu.memory_space<vmem>>, vector<1x1x256xf32>
      %274 = vector.shape_cast %273 : vector<1x1x256xf32> to vector<1x256xf32>
      %cst_138 = arith.constant 0.000000e+00 : f32
      %275 = vector.broadcast %cst_138 : f32 to vector<1x256xf32>
      %276 = arith.select %65, %274, %275 : vector<1x256xi1>, vector<1x256xf32>
      %277 = vector.broadcast %272 : f32 to vector<1x256xf32>
      %278 = arith.mulf %277, %276 : vector<1x256xf32>
      %279 = arith.addf %271, %278 : vector<1x256xf32>
      %c27 = arith.constant 27 : index
      %280 = memref.load %arg3[%c27] : memref<98xf32, #tpu.memory_space<smem>>
      %c0_139 = arith.constant 0 : index
      %c0_140 = arith.constant 0 : index
      %c54 = arith.constant 54 : index
      %281 = vector.load %arg7[%c0_139, %c0_140, %c54] : memref<2x1x358xf32, #tpu.memory_space<vmem>>, vector<1x1x256xf32>
      %282 = vector.shape_cast %281 : vector<1x1x256xf32> to vector<1x256xf32>
      %cst_141 = arith.constant 0.000000e+00 : f32
      %283 = vector.broadcast %cst_141 : f32 to vector<1x256xf32>
      %284 = arith.select %67, %282, %283 : vector<1x256xi1>, vector<1x256xf32>
      %285 = vector.broadcast %280 : f32 to vector<1x256xf32>
      %286 = arith.mulf %285, %284 : vector<1x256xf32>
      %287 = arith.addf %279, %286 : vector<1x256xf32>
      %c28 = arith.constant 28 : index
      %288 = memref.load %arg3[%c28] : memref<98xf32, #tpu.memory_space<smem>>
      %c0_142 = arith.constant 0 : index
      %c0_143 = arith.constant 0 : index
      %c64 = arith.constant 64 : index
      %289 = vector.load %arg7[%c0_142, %c0_143, %c64] : memref<2x1x358xf32, #tpu.memory_space<vmem>>, vector<1x1x256xf32>
      %290 = vector.shape_cast %289 : vector<1x1x256xf32> to vector<1x256xf32>
      %cst_144 = arith.constant 0.000000e+00 : f32
      %291 = vector.broadcast %cst_144 : f32 to vector<1x256xf32>
      %292 = arith.select %57, %290, %291 : vector<1x256xi1>, vector<1x256xf32>
      %293 = vector.broadcast %288 : f32 to vector<1x256xf32>
      %294 = arith.mulf %293, %292 : vector<1x256xf32>
      %295 = arith.addf %233, %294 : vector<1x256xf32>
      %c29 = arith.constant 29 : index
      %296 = memref.load %arg3[%c29] : memref<98xf32, #tpu.memory_space<smem>>
      %c0_145 = arith.constant 0 : index
      %c0_146 = arith.constant 0 : index
      %c65 = arith.constant 65 : index
      %297 = vector.load %arg7[%c0_145, %c0_146, %c65] : memref<2x1x358xf32, #tpu.memory_space<vmem>>, vector<1x1x256xf32>
      %298 = vector.shape_cast %297 : vector<1x1x256xf32> to vector<1x256xf32>
      %cst_147 = arith.constant 0.000000e+00 : f32
      %299 = vector.broadcast %cst_147 : f32 to vector<1x256xf32>
      %300 = arith.select %59, %298, %299 : vector<1x256xi1>, vector<1x256xf32>
      %301 = vector.broadcast %296 : f32 to vector<1x256xf32>
      %302 = arith.mulf %301, %300 : vector<1x256xf32>
      %303 = arith.addf %295, %302 : vector<1x256xf32>
      %c30 = arith.constant 30 : index
      %304 = memref.load %arg3[%c30] : memref<98xf32, #tpu.memory_space<smem>>
      %c0_148 = arith.constant 0 : index
      %c0_149 = arith.constant 0 : index
      %c66 = arith.constant 66 : index
      %305 = vector.load %arg7[%c0_148, %c0_149, %c66] : memref<2x1x358xf32, #tpu.memory_space<vmem>>, vector<1x1x256xf32>
      %306 = vector.shape_cast %305 : vector<1x1x256xf32> to vector<1x256xf32>
      %cst_150 = arith.constant 0.000000e+00 : f32
      %307 = vector.broadcast %cst_150 : f32 to vector<1x256xf32>
      %308 = arith.select %61, %306, %307 : vector<1x256xi1>, vector<1x256xf32>
      %309 = vector.broadcast %304 : f32 to vector<1x256xf32>
      %310 = arith.mulf %309, %308 : vector<1x256xf32>
      %311 = arith.addf %303, %310 : vector<1x256xf32>
      %c31 = arith.constant 31 : index
      %312 = memref.load %arg3[%c31] : memref<98xf32, #tpu.memory_space<smem>>
      %c0_151 = arith.constant 0 : index
      %c0_152 = arith.constant 0 : index
      %c67 = arith.constant 67 : index
      %313 = vector.load %arg7[%c0_151, %c0_152, %c67] : memref<2x1x358xf32, #tpu.memory_space<vmem>>, vector<1x1x256xf32>
      %314 = vector.shape_cast %313 : vector<1x1x256xf32> to vector<1x256xf32>
      %315 = vector.broadcast %312 : f32 to vector<1x256xf32>
      %316 = arith.mulf %315, %314 : vector<1x256xf32>
      %317 = arith.addf %311, %316 : vector<1x256xf32>
      %c32_153 = arith.constant 32 : index
      %318 = memref.load %arg3[%c32_153] : memref<98xf32, #tpu.memory_space<smem>>
      %c0_154 = arith.constant 0 : index
      %c0_155 = arith.constant 0 : index
      %c68 = arith.constant 68 : index
      %319 = vector.load %arg7[%c0_154, %c0_155, %c68] : memref<2x1x358xf32, #tpu.memory_space<vmem>>, vector<1x1x256xf32>
      %320 = vector.shape_cast %319 : vector<1x1x256xf32> to vector<1x256xf32>
      %cst_156 = arith.constant 0.000000e+00 : f32
      %321 = vector.broadcast %cst_156 : f32 to vector<1x256xf32>
      %322 = arith.select %63, %320, %321 : vector<1x256xi1>, vector<1x256xf32>
      %323 = vector.broadcast %318 : f32 to vector<1x256xf32>
      %324 = arith.mulf %323, %322 : vector<1x256xf32>
      %325 = arith.addf %317, %324 : vector<1x256xf32>
      %c33_157 = arith.constant 33 : index
      %326 = memref.load %arg3[%c33_157] : memref<98xf32, #tpu.memory_space<smem>>
      %c0_158 = arith.constant 0 : index
      %c0_159 = arith.constant 0 : index
      %c69 = arith.constant 69 : index
      %327 = vector.load %arg7[%c0_158, %c0_159, %c69] : memref<2x1x358xf32, #tpu.memory_space<vmem>>, vector<1x1x256xf32>
      %328 = vector.shape_cast %327 : vector<1x1x256xf32> to vector<1x256xf32>
      %cst_160 = arith.constant 0.000000e+00 : f32
      %329 = vector.broadcast %cst_160 : f32 to vector<1x256xf32>
      %330 = arith.select %65, %328, %329 : vector<1x256xi1>, vector<1x256xf32>
      %331 = vector.broadcast %326 : f32 to vector<1x256xf32>
      %332 = arith.mulf %331, %330 : vector<1x256xf32>
      %333 = arith.addf %325, %332 : vector<1x256xf32>
      %c34_161 = arith.constant 34 : index
      %334 = memref.load %arg3[%c34_161] : memref<98xf32, #tpu.memory_space<smem>>
      %c0_162 = arith.constant 0 : index
      %c0_163 = arith.constant 0 : index
      %c70 = arith.constant 70 : index
      %335 = vector.load %arg7[%c0_162, %c0_163, %c70] : memref<2x1x358xf32, #tpu.memory_space<vmem>>, vector<1x1x256xf32>
      %336 = vector.shape_cast %335 : vector<1x1x256xf32> to vector<1x256xf32>
      %cst_164 = arith.constant 0.000000e+00 : f32
      %337 = vector.broadcast %cst_164 : f32 to vector<1x256xf32>
      %338 = arith.select %67, %336, %337 : vector<1x256xi1>, vector<1x256xf32>
      %339 = vector.broadcast %334 : f32 to vector<1x256xf32>
      %340 = arith.mulf %339, %338 : vector<1x256xf32>
      %341 = arith.addf %333, %340 : vector<1x256xf32>
      %c35_165 = arith.constant 35 : index
      %342 = memref.load %arg3[%c35_165] : memref<98xf32, #tpu.memory_space<smem>>
      %c0_166 = arith.constant 0 : index
      %c0_167 = arith.constant 0 : index
      %c80 = arith.constant 80 : index
      %343 = vector.load %arg7[%c0_166, %c0_167, %c80] : memref<2x1x358xf32, #tpu.memory_space<vmem>>, vector<1x1x256xf32>
      %344 = vector.shape_cast %343 : vector<1x1x256xf32> to vector<1x256xf32>
      %cst_168 = arith.constant 0.000000e+00 : f32
      %345 = vector.broadcast %cst_168 : f32 to vector<1x256xf32>
      %346 = arith.select %57, %344, %345 : vector<1x256xi1>, vector<1x256xf32>
      %347 = vector.broadcast %342 : f32 to vector<1x256xf32>
      %348 = arith.mulf %347, %346 : vector<1x256xf32>
      %349 = arith.addf %287, %348 : vector<1x256xf32>
      %c36_169 = arith.constant 36 : index
      %350 = memref.load %arg3[%c36_169] : memref<98xf32, #tpu.memory_space<smem>>
      %c0_170 = arith.constant 0 : index
      %c0_171 = arith.constant 0 : index
      %c81 = arith.constant 81 : index
      %351 = vector.load %arg7[%c0_170, %c0_171, %c81] : memref<2x1x358xf32, #tpu.memory_space<vmem>>, vector<1x1x256xf32>
      %352 = vector.shape_cast %351 : vector<1x1x256xf32> to vector<1x256xf32>
      %cst_172 = arith.constant 0.000000e+00 : f32
      %353 = vector.broadcast %cst_172 : f32 to vector<1x256xf32>
      %354 = arith.select %59, %352, %353 : vector<1x256xi1>, vector<1x256xf32>
      %355 = vector.broadcast %350 : f32 to vector<1x256xf32>
      %356 = arith.mulf %355, %354 : vector<1x256xf32>
      %357 = arith.addf %349, %356 : vector<1x256xf32>
      %c37_173 = arith.constant 37 : index
      %358 = memref.load %arg3[%c37_173] : memref<98xf32, #tpu.memory_space<smem>>
      %c0_174 = arith.constant 0 : index
      %c0_175 = arith.constant 0 : index
      %c82 = arith.constant 82 : index
      %359 = vector.load %arg7[%c0_174, %c0_175, %c82] : memref<2x1x358xf32, #tpu.memory_space<vmem>>, vector<1x1x256xf32>
      %360 = vector.shape_cast %359 : vector<1x1x256xf32> to vector<1x256xf32>
      %cst_176 = arith.constant 0.000000e+00 : f32
      %361 = vector.broadcast %cst_176 : f32 to vector<1x256xf32>
      %362 = arith.select %61, %360, %361 : vector<1x256xi1>, vector<1x256xf32>
      %363 = vector.broadcast %358 : f32 to vector<1x256xf32>
      %364 = arith.mulf %363, %362 : vector<1x256xf32>
      %365 = arith.addf %357, %364 : vector<1x256xf32>
      %c38_177 = arith.constant 38 : index
      %366 = memref.load %arg3[%c38_177] : memref<98xf32, #tpu.memory_space<smem>>
      %c0_178 = arith.constant 0 : index
      %c0_179 = arith.constant 0 : index
      %c83 = arith.constant 83 : index
      %367 = vector.load %arg7[%c0_178, %c0_179, %c83] : memref<2x1x358xf32, #tpu.memory_space<vmem>>, vector<1x1x256xf32>
      %368 = vector.shape_cast %367 : vector<1x1x256xf32> to vector<1x256xf32>
      %369 = vector.broadcast %366 : f32 to vector<1x256xf32>
      %370 = arith.mulf %369, %368 : vector<1x256xf32>
      %371 = arith.addf %365, %370 : vector<1x256xf32>
      %c39 = arith.constant 39 : index
      %372 = memref.load %arg3[%c39] : memref<98xf32, #tpu.memory_space<smem>>
      %c0_180 = arith.constant 0 : index
      %c0_181 = arith.constant 0 : index
      %c84 = arith.constant 84 : index
      %373 = vector.load %arg7[%c0_180, %c0_181, %c84] : memref<2x1x358xf32, #tpu.memory_space<vmem>>, vector<1x1x256xf32>
      %374 = vector.shape_cast %373 : vector<1x1x256xf32> to vector<1x256xf32>
      %cst_182 = arith.constant 0.000000e+00 : f32
      %375 = vector.broadcast %cst_182 : f32 to vector<1x256xf32>
      %376 = arith.select %63, %374, %375 : vector<1x256xi1>, vector<1x256xf32>
      %377 = vector.broadcast %372 : f32 to vector<1x256xf32>
      %378 = arith.mulf %377, %376 : vector<1x256xf32>
      %379 = arith.addf %371, %378 : vector<1x256xf32>
      %c40 = arith.constant 40 : index
      %380 = memref.load %arg3[%c40] : memref<98xf32, #tpu.memory_space<smem>>
      %c0_183 = arith.constant 0 : index
      %c0_184 = arith.constant 0 : index
      %c85 = arith.constant 85 : index
      %381 = vector.load %arg7[%c0_183, %c0_184, %c85] : memref<2x1x358xf32, #tpu.memory_space<vmem>>, vector<1x1x256xf32>
      %382 = vector.shape_cast %381 : vector<1x1x256xf32> to vector<1x256xf32>
      %cst_185 = arith.constant 0.000000e+00 : f32
      %383 = vector.broadcast %cst_185 : f32 to vector<1x256xf32>
      %384 = arith.select %65, %382, %383 : vector<1x256xi1>, vector<1x256xf32>
      %385 = vector.broadcast %380 : f32 to vector<1x256xf32>
      %386 = arith.mulf %385, %384 : vector<1x256xf32>
      %387 = arith.addf %379, %386 : vector<1x256xf32>
      %c41 = arith.constant 41 : index
      %388 = memref.load %arg3[%c41] : memref<98xf32, #tpu.memory_space<smem>>
      %c0_186 = arith.constant 0 : index
      %c0_187 = arith.constant 0 : index
      %c86 = arith.constant 86 : index
      %389 = vector.load %arg7[%c0_186, %c0_187, %c86] : memref<2x1x358xf32, #tpu.memory_space<vmem>>, vector<1x1x256xf32>
      %390 = vector.shape_cast %389 : vector<1x1x256xf32> to vector<1x256xf32>
      %cst_188 = arith.constant 0.000000e+00 : f32
      %391 = vector.broadcast %cst_188 : f32 to vector<1x256xf32>
      %392 = arith.select %67, %390, %391 : vector<1x256xi1>, vector<1x256xf32>
      %393 = vector.broadcast %388 : f32 to vector<1x256xf32>
      %394 = arith.mulf %393, %392 : vector<1x256xf32>
      %395 = arith.addf %387, %394 : vector<1x256xf32>
      %c42 = arith.constant 42 : index
      %396 = memref.load %arg3[%c42] : memref<98xf32, #tpu.memory_space<smem>>
      %c0_189 = arith.constant 0 : index
      %c0_190 = arith.constant 0 : index
      %c96 = arith.constant 96 : index
      %397 = vector.load %arg7[%c0_189, %c0_190, %c96] : memref<2x1x358xf32, #tpu.memory_space<vmem>>, vector<1x1x256xf32>
      %398 = vector.shape_cast %397 : vector<1x1x256xf32> to vector<1x256xf32>
      %cst_191 = arith.constant 0.000000e+00 : f32
      %399 = vector.broadcast %cst_191 : f32 to vector<1x256xf32>
      %400 = arith.select %57, %398, %399 : vector<1x256xi1>, vector<1x256xf32>
      %401 = vector.broadcast %396 : f32 to vector<1x256xf32>
      %402 = arith.mulf %401, %400 : vector<1x256xf32>
      %403 = arith.addf %341, %402 : vector<1x256xf32>
      %c43 = arith.constant 43 : index
      %404 = memref.load %arg3[%c43] : memref<98xf32, #tpu.memory_space<smem>>
      %c0_192 = arith.constant 0 : index
      %c0_193 = arith.constant 0 : index
      %c97 = arith.constant 97 : index
      %405 = vector.load %arg7[%c0_192, %c0_193, %c97] : memref<2x1x358xf32, #tpu.memory_space<vmem>>, vector<1x1x256xf32>
      %406 = vector.shape_cast %405 : vector<1x1x256xf32> to vector<1x256xf32>
      %cst_194 = arith.constant 0.000000e+00 : f32
      %407 = vector.broadcast %cst_194 : f32 to vector<1x256xf32>
      %408 = arith.select %59, %406, %407 : vector<1x256xi1>, vector<1x256xf32>
      %409 = vector.broadcast %404 : f32 to vector<1x256xf32>
      %410 = arith.mulf %409, %408 : vector<1x256xf32>
      %411 = arith.addf %403, %410 : vector<1x256xf32>
      %c44 = arith.constant 44 : index
      %412 = memref.load %arg3[%c44] : memref<98xf32, #tpu.memory_space<smem>>
      %c0_195 = arith.constant 0 : index
      %c0_196 = arith.constant 0 : index
      %c98 = arith.constant 98 : index
      %413 = vector.load %arg7[%c0_195, %c0_196, %c98] : memref<2x1x358xf32, #tpu.memory_space<vmem>>, vector<1x1x256xf32>
      %414 = vector.shape_cast %413 : vector<1x1x256xf32> to vector<1x256xf32>
      %cst_197 = arith.constant 0.000000e+00 : f32
      %415 = vector.broadcast %cst_197 : f32 to vector<1x256xf32>
      %416 = arith.select %61, %414, %415 : vector<1x256xi1>, vector<1x256xf32>
      %417 = vector.broadcast %412 : f32 to vector<1x256xf32>
      %418 = arith.mulf %417, %416 : vector<1x256xf32>
      %419 = arith.addf %411, %418 : vector<1x256xf32>
      %c45 = arith.constant 45 : index
      %420 = memref.load %arg3[%c45] : memref<98xf32, #tpu.memory_space<smem>>
      %c0_198 = arith.constant 0 : index
      %c0_199 = arith.constant 0 : index
      %c99 = arith.constant 99 : index
      %421 = vector.load %arg7[%c0_198, %c0_199, %c99] : memref<2x1x358xf32, #tpu.memory_space<vmem>>, vector<1x1x256xf32>
      %422 = vector.shape_cast %421 : vector<1x1x256xf32> to vector<1x256xf32>
      %423 = vector.broadcast %420 : f32 to vector<1x256xf32>
      %424 = arith.mulf %423, %422 : vector<1x256xf32>
      %425 = arith.addf %419, %424 : vector<1x256xf32>
      %c46 = arith.constant 46 : index
      %426 = memref.load %arg3[%c46] : memref<98xf32, #tpu.memory_space<smem>>
      %c0_200 = arith.constant 0 : index
      %c0_201 = arith.constant 0 : index
      %c100 = arith.constant 100 : index
      %427 = vector.load %arg7[%c0_200, %c0_201, %c100] : memref<2x1x358xf32, #tpu.memory_space<vmem>>, vector<1x1x256xf32>
      %428 = vector.shape_cast %427 : vector<1x1x256xf32> to vector<1x256xf32>
      %cst_202 = arith.constant 0.000000e+00 : f32
      %429 = vector.broadcast %cst_202 : f32 to vector<1x256xf32>
      %430 = arith.select %63, %428, %429 : vector<1x256xi1>, vector<1x256xf32>
      %431 = vector.broadcast %426 : f32 to vector<1x256xf32>
      %432 = arith.mulf %431, %430 : vector<1x256xf32>
      %433 = arith.addf %425, %432 : vector<1x256xf32>
      %c47 = arith.constant 47 : index
      %434 = memref.load %arg3[%c47] : memref<98xf32, #tpu.memory_space<smem>>
      %c0_203 = arith.constant 0 : index
      %c0_204 = arith.constant 0 : index
      %c101 = arith.constant 101 : index
      %435 = vector.load %arg7[%c0_203, %c0_204, %c101] : memref<2x1x358xf32, #tpu.memory_space<vmem>>, vector<1x1x256xf32>
      %436 = vector.shape_cast %435 : vector<1x1x256xf32> to vector<1x256xf32>
      %cst_205 = arith.constant 0.000000e+00 : f32
      %437 = vector.broadcast %cst_205 : f32 to vector<1x256xf32>
      %438 = arith.select %65, %436, %437 : vector<1x256xi1>, vector<1x256xf32>
      %439 = vector.broadcast %434 : f32 to vector<1x256xf32>
      %440 = arith.mulf %439, %438 : vector<1x256xf32>
      %441 = arith.addf %433, %440 : vector<1x256xf32>
      %c48_206 = arith.constant 48 : index
      %442 = memref.load %arg3[%c48_206] : memref<98xf32, #tpu.memory_space<smem>>
      %c0_207 = arith.constant 0 : index
      %c0_208 = arith.constant 0 : index
      %c102 = arith.constant 102 : index
      %443 = vector.load %arg7[%c0_207, %c0_208, %c102] : memref<2x1x358xf32, #tpu.memory_space<vmem>>, vector<1x1x256xf32>
      %444 = vector.shape_cast %443 : vector<1x1x256xf32> to vector<1x256xf32>
      %cst_209 = arith.constant 0.000000e+00 : f32
      %445 = vector.broadcast %cst_209 : f32 to vector<1x256xf32>
      %446 = arith.select %67, %444, %445 : vector<1x256xi1>, vector<1x256xf32>
      %447 = vector.broadcast %442 : f32 to vector<1x256xf32>
      %448 = arith.mulf %447, %446 : vector<1x256xf32>
      %449 = arith.addf %441, %448 : vector<1x256xf32>
      %c49_210 = arith.constant 49 : index
      %450 = memref.load %arg3[%c49_210] : memref<98xf32, #tpu.memory_space<smem>>
      %c1_211 = arith.constant 1 : index
      %c0_212 = arith.constant 0 : index
      %c0_213 = arith.constant 0 : index
      %451 = vector.load %arg7[%c1_211, %c0_212, %c0_213] : memref<2x1x358xf32, #tpu.memory_space<vmem>>, vector<1x1x256xf32>
      %452 = vector.shape_cast %451 : vector<1x1x256xf32> to vector<1x256xf32>
      %cst_214 = arith.constant 0.000000e+00 : f32
      %453 = vector.broadcast %cst_214 : f32 to vector<1x256xf32>
      %454 = arith.select %57, %452, %453 : vector<1x256xi1>, vector<1x256xf32>
      %455 = vector.broadcast %450 : f32 to vector<1x256xf32>
      %456 = arith.mulf %455, %454 : vector<1x256xf32>
      %457 = arith.addf %70, %456 : vector<1x256xf32>
      %c50_215 = arith.constant 50 : index
      %458 = memref.load %arg3[%c50_215] : memref<98xf32, #tpu.memory_space<smem>>
      %c1_216 = arith.constant 1 : index
      %c0_217 = arith.constant 0 : index
      %c1_218 = arith.constant 1 : index
      %459 = vector.load %arg7[%c1_216, %c0_217, %c1_218] : memref<2x1x358xf32, #tpu.memory_space<vmem>>, vector<1x1x256xf32>
      %460 = vector.shape_cast %459 : vector<1x1x256xf32> to vector<1x256xf32>
      %cst_219 = arith.constant 0.000000e+00 : f32
      %461 = vector.broadcast %cst_219 : f32 to vector<1x256xf32>
      %462 = arith.select %59, %460, %461 : vector<1x256xi1>, vector<1x256xf32>
      %463 = vector.broadcast %458 : f32 to vector<1x256xf32>
      %464 = arith.mulf %463, %462 : vector<1x256xf32>
      %465 = arith.addf %457, %464 : vector<1x256xf32>
      %c51_220 = arith.constant 51 : index
      %466 = memref.load %arg3[%c51_220] : memref<98xf32, #tpu.memory_space<smem>>
      %c1_221 = arith.constant 1 : index
      %c0_222 = arith.constant 0 : index
      %c2_223 = arith.constant 2 : index
      %467 = vector.load %arg7[%c1_221, %c0_222, %c2_223] : memref<2x1x358xf32, #tpu.memory_space<vmem>>, vector<1x1x256xf32>
      %468 = vector.shape_cast %467 : vector<1x1x256xf32> to vector<1x256xf32>
      %cst_224 = arith.constant 0.000000e+00 : f32
      %469 = vector.broadcast %cst_224 : f32 to vector<1x256xf32>
      %470 = arith.select %61, %468, %469 : vector<1x256xi1>, vector<1x256xf32>
      %471 = vector.broadcast %466 : f32 to vector<1x256xf32>
      %472 = arith.mulf %471, %470 : vector<1x256xf32>
      %473 = arith.addf %465, %472 : vector<1x256xf32>
      %c52_225 = arith.constant 52 : index
      %474 = memref.load %arg3[%c52_225] : memref<98xf32, #tpu.memory_space<smem>>
      %c1_226 = arith.constant 1 : index
      %c0_227 = arith.constant 0 : index
      %c3_228 = arith.constant 3 : index
      %475 = vector.load %arg7[%c1_226, %c0_227, %c3_228] : memref<2x1x358xf32, #tpu.memory_space<vmem>>, vector<1x1x256xf32>
      %476 = vector.shape_cast %475 : vector<1x1x256xf32> to vector<1x256xf32>
      %477 = vector.broadcast %474 : f32 to vector<1x256xf32>
      %478 = arith.mulf %477, %476 : vector<1x256xf32>
      %479 = arith.addf %473, %478 : vector<1x256xf32>
      %c53_229 = arith.constant 53 : index
      %480 = memref.load %arg3[%c53_229] : memref<98xf32, #tpu.memory_space<smem>>
      %c1_230 = arith.constant 1 : index
      %c0_231 = arith.constant 0 : index
      %c4_232 = arith.constant 4 : index
      %481 = vector.load %arg7[%c1_230, %c0_231, %c4_232] : memref<2x1x358xf32, #tpu.memory_space<vmem>>, vector<1x1x256xf32>
      %482 = vector.shape_cast %481 : vector<1x1x256xf32> to vector<1x256xf32>
      %cst_233 = arith.constant 0.000000e+00 : f32
      %483 = vector.broadcast %cst_233 : f32 to vector<1x256xf32>
      %484 = arith.select %63, %482, %483 : vector<1x256xi1>, vector<1x256xf32>
      %485 = vector.broadcast %480 : f32 to vector<1x256xf32>
      %486 = arith.mulf %485, %484 : vector<1x256xf32>
      %487 = arith.addf %479, %486 : vector<1x256xf32>
      %c54_234 = arith.constant 54 : index
      %488 = memref.load %arg3[%c54_234] : memref<98xf32, #tpu.memory_space<smem>>
      %c1_235 = arith.constant 1 : index
      %c0_236 = arith.constant 0 : index
      %c5_237 = arith.constant 5 : index
      %489 = vector.load %arg7[%c1_235, %c0_236, %c5_237] : memref<2x1x358xf32, #tpu.memory_space<vmem>>, vector<1x1x256xf32>
      %490 = vector.shape_cast %489 : vector<1x1x256xf32> to vector<1x256xf32>
      %cst_238 = arith.constant 0.000000e+00 : f32
      %491 = vector.broadcast %cst_238 : f32 to vector<1x256xf32>
      %492 = arith.select %65, %490, %491 : vector<1x256xi1>, vector<1x256xf32>
      %493 = vector.broadcast %488 : f32 to vector<1x256xf32>
      %494 = arith.mulf %493, %492 : vector<1x256xf32>
      %495 = arith.addf %487, %494 : vector<1x256xf32>
      %c55 = arith.constant 55 : index
      %496 = memref.load %arg3[%c55] : memref<98xf32, #tpu.memory_space<smem>>
      %c1_239 = arith.constant 1 : index
      %c0_240 = arith.constant 0 : index
      %c6_241 = arith.constant 6 : index
      %497 = vector.load %arg7[%c1_239, %c0_240, %c6_241] : memref<2x1x358xf32, #tpu.memory_space<vmem>>, vector<1x1x256xf32>
      %498 = vector.shape_cast %497 : vector<1x1x256xf32> to vector<1x256xf32>
      %cst_242 = arith.constant 0.000000e+00 : f32
      %499 = vector.broadcast %cst_242 : f32 to vector<1x256xf32>
      %500 = arith.select %67, %498, %499 : vector<1x256xi1>, vector<1x256xf32>
      %501 = vector.broadcast %496 : f32 to vector<1x256xf32>
      %502 = arith.mulf %501, %500 : vector<1x256xf32>
      %503 = arith.addf %495, %502 : vector<1x256xf32>
      %c56 = arith.constant 56 : index
      %504 = memref.load %arg3[%c56] : memref<98xf32, #tpu.memory_space<smem>>
      %c1_243 = arith.constant 1 : index
      %c0_244 = arith.constant 0 : index
      %c16_245 = arith.constant 16 : index
      %505 = vector.load %arg7[%c1_243, %c0_244, %c16_245] : memref<2x1x358xf32, #tpu.memory_space<vmem>>, vector<1x1x256xf32>
      %506 = vector.shape_cast %505 : vector<1x1x256xf32> to vector<1x256xf32>
      %cst_246 = arith.constant 0.000000e+00 : f32
      %507 = vector.broadcast %cst_246 : f32 to vector<1x256xf32>
      %508 = arith.select %57, %506, %507 : vector<1x256xi1>, vector<1x256xf32>
      %509 = vector.broadcast %504 : f32 to vector<1x256xf32>
      %510 = arith.mulf %509, %508 : vector<1x256xf32>
      %511 = arith.addf %71, %510 : vector<1x256xf32>
      %c57 = arith.constant 57 : index
      %512 = memref.load %arg3[%c57] : memref<98xf32, #tpu.memory_space<smem>>
      %c1_247 = arith.constant 1 : index
      %c0_248 = arith.constant 0 : index
      %c17_249 = arith.constant 17 : index
      %513 = vector.load %arg7[%c1_247, %c0_248, %c17_249] : memref<2x1x358xf32, #tpu.memory_space<vmem>>, vector<1x1x256xf32>
      %514 = vector.shape_cast %513 : vector<1x1x256xf32> to vector<1x256xf32>
      %cst_250 = arith.constant 0.000000e+00 : f32
      %515 = vector.broadcast %cst_250 : f32 to vector<1x256xf32>
      %516 = arith.select %59, %514, %515 : vector<1x256xi1>, vector<1x256xf32>
      %517 = vector.broadcast %512 : f32 to vector<1x256xf32>
      %518 = arith.mulf %517, %516 : vector<1x256xf32>
      %519 = arith.addf %511, %518 : vector<1x256xf32>
      %c58 = arith.constant 58 : index
      %520 = memref.load %arg3[%c58] : memref<98xf32, #tpu.memory_space<smem>>
      %c1_251 = arith.constant 1 : index
      %c0_252 = arith.constant 0 : index
      %c18_253 = arith.constant 18 : index
      %521 = vector.load %arg7[%c1_251, %c0_252, %c18_253] : memref<2x1x358xf32, #tpu.memory_space<vmem>>, vector<1x1x256xf32>
      %522 = vector.shape_cast %521 : vector<1x1x256xf32> to vector<1x256xf32>
      %cst_254 = arith.constant 0.000000e+00 : f32
      %523 = vector.broadcast %cst_254 : f32 to vector<1x256xf32>
      %524 = arith.select %61, %522, %523 : vector<1x256xi1>, vector<1x256xf32>
      %525 = vector.broadcast %520 : f32 to vector<1x256xf32>
      %526 = arith.mulf %525, %524 : vector<1x256xf32>
      %527 = arith.addf %519, %526 : vector<1x256xf32>
      %c59 = arith.constant 59 : index
      %528 = memref.load %arg3[%c59] : memref<98xf32, #tpu.memory_space<smem>>
      %c1_255 = arith.constant 1 : index
      %c0_256 = arith.constant 0 : index
      %c19_257 = arith.constant 19 : index
      %529 = vector.load %arg7[%c1_255, %c0_256, %c19_257] : memref<2x1x358xf32, #tpu.memory_space<vmem>>, vector<1x1x256xf32>
      %530 = vector.shape_cast %529 : vector<1x1x256xf32> to vector<1x256xf32>
      %531 = vector.broadcast %528 : f32 to vector<1x256xf32>
      %532 = arith.mulf %531, %530 : vector<1x256xf32>
      %533 = arith.addf %527, %532 : vector<1x256xf32>
      %c60 = arith.constant 60 : index
      %534 = memref.load %arg3[%c60] : memref<98xf32, #tpu.memory_space<smem>>
      %c1_258 = arith.constant 1 : index
      %c0_259 = arith.constant 0 : index
      %c20_260 = arith.constant 20 : index
      %535 = vector.load %arg7[%c1_258, %c0_259, %c20_260] : memref<2x1x358xf32, #tpu.memory_space<vmem>>, vector<1x1x256xf32>
      %536 = vector.shape_cast %535 : vector<1x1x256xf32> to vector<1x256xf32>
      %cst_261 = arith.constant 0.000000e+00 : f32
      %537 = vector.broadcast %cst_261 : f32 to vector<1x256xf32>
      %538 = arith.select %63, %536, %537 : vector<1x256xi1>, vector<1x256xf32>
      %539 = vector.broadcast %534 : f32 to vector<1x256xf32>
      %540 = arith.mulf %539, %538 : vector<1x256xf32>
      %541 = arith.addf %533, %540 : vector<1x256xf32>
      %c61 = arith.constant 61 : index
      %542 = memref.load %arg3[%c61] : memref<98xf32, #tpu.memory_space<smem>>
      %c1_262 = arith.constant 1 : index
      %c0_263 = arith.constant 0 : index
      %c21_264 = arith.constant 21 : index
      %543 = vector.load %arg7[%c1_262, %c0_263, %c21_264] : memref<2x1x358xf32, #tpu.memory_space<vmem>>, vector<1x1x256xf32>
      %544 = vector.shape_cast %543 : vector<1x1x256xf32> to vector<1x256xf32>
      %cst_265 = arith.constant 0.000000e+00 : f32
      %545 = vector.broadcast %cst_265 : f32 to vector<1x256xf32>
      %546 = arith.select %65, %544, %545 : vector<1x256xi1>, vector<1x256xf32>
      %547 = vector.broadcast %542 : f32 to vector<1x256xf32>
      %548 = arith.mulf %547, %546 : vector<1x256xf32>
      %549 = arith.addf %541, %548 : vector<1x256xf32>
      %c62 = arith.constant 62 : index
      %550 = memref.load %arg3[%c62] : memref<98xf32, #tpu.memory_space<smem>>
      %c1_266 = arith.constant 1 : index
      %c0_267 = arith.constant 0 : index
      %c22_268 = arith.constant 22 : index
      %551 = vector.load %arg7[%c1_266, %c0_267, %c22_268] : memref<2x1x358xf32, #tpu.memory_space<vmem>>, vector<1x1x256xf32>
      %552 = vector.shape_cast %551 : vector<1x1x256xf32> to vector<1x256xf32>
      %cst_269 = arith.constant 0.000000e+00 : f32
      %553 = vector.broadcast %cst_269 : f32 to vector<1x256xf32>
      %554 = arith.select %67, %552, %553 : vector<1x256xi1>, vector<1x256xf32>
      %555 = vector.broadcast %550 : f32 to vector<1x256xf32>
      %556 = arith.mulf %555, %554 : vector<1x256xf32>
      %557 = arith.addf %549, %556 : vector<1x256xf32>
      %c63 = arith.constant 63 : index
      %558 = memref.load %arg3[%c63] : memref<98xf32, #tpu.memory_space<smem>>
      %c1_270 = arith.constant 1 : index
      %c0_271 = arith.constant 0 : index
      %c32_272 = arith.constant 32 : index
      %559 = vector.load %arg7[%c1_270, %c0_271, %c32_272] : memref<2x1x358xf32, #tpu.memory_space<vmem>>, vector<1x1x256xf32>
      %560 = vector.shape_cast %559 : vector<1x1x256xf32> to vector<1x256xf32>
      %cst_273 = arith.constant 0.000000e+00 : f32
      %561 = vector.broadcast %cst_273 : f32 to vector<1x256xf32>
      %562 = arith.select %57, %560, %561 : vector<1x256xi1>, vector<1x256xf32>
      %563 = vector.broadcast %558 : f32 to vector<1x256xf32>
      %564 = arith.mulf %563, %562 : vector<1x256xf32>
      %565 = arith.addf %503, %564 : vector<1x256xf32>
      %c64_274 = arith.constant 64 : index
      %566 = memref.load %arg3[%c64_274] : memref<98xf32, #tpu.memory_space<smem>>
      %c1_275 = arith.constant 1 : index
      %c0_276 = arith.constant 0 : index
      %c33_277 = arith.constant 33 : index
      %567 = vector.load %arg7[%c1_275, %c0_276, %c33_277] : memref<2x1x358xf32, #tpu.memory_space<vmem>>, vector<1x1x256xf32>
      %568 = vector.shape_cast %567 : vector<1x1x256xf32> to vector<1x256xf32>
      %cst_278 = arith.constant 0.000000e+00 : f32
      %569 = vector.broadcast %cst_278 : f32 to vector<1x256xf32>
      %570 = arith.select %59, %568, %569 : vector<1x256xi1>, vector<1x256xf32>
      %571 = vector.broadcast %566 : f32 to vector<1x256xf32>
      %572 = arith.mulf %571, %570 : vector<1x256xf32>
      %573 = arith.addf %565, %572 : vector<1x256xf32>
      %c65_279 = arith.constant 65 : index
      %574 = memref.load %arg3[%c65_279] : memref<98xf32, #tpu.memory_space<smem>>
      %c1_280 = arith.constant 1 : index
      %c0_281 = arith.constant 0 : index
      %c34_282 = arith.constant 34 : index
      %575 = vector.load %arg7[%c1_280, %c0_281, %c34_282] : memref<2x1x358xf32, #tpu.memory_space<vmem>>, vector<1x1x256xf32>
      %576 = vector.shape_cast %575 : vector<1x1x256xf32> to vector<1x256xf32>
      %cst_283 = arith.constant 0.000000e+00 : f32
      %577 = vector.broadcast %cst_283 : f32 to vector<1x256xf32>
      %578 = arith.select %61, %576, %577 : vector<1x256xi1>, vector<1x256xf32>
      %579 = vector.broadcast %574 : f32 to vector<1x256xf32>
      %580 = arith.mulf %579, %578 : vector<1x256xf32>
      %581 = arith.addf %573, %580 : vector<1x256xf32>
      %c66_284 = arith.constant 66 : index
      %582 = memref.load %arg3[%c66_284] : memref<98xf32, #tpu.memory_space<smem>>
      %c1_285 = arith.constant 1 : index
      %c0_286 = arith.constant 0 : index
      %c35_287 = arith.constant 35 : index
      %583 = vector.load %arg7[%c1_285, %c0_286, %c35_287] : memref<2x1x358xf32, #tpu.memory_space<vmem>>, vector<1x1x256xf32>
      %584 = vector.shape_cast %583 : vector<1x1x256xf32> to vector<1x256xf32>
      %585 = vector.broadcast %582 : f32 to vector<1x256xf32>
      %586 = arith.mulf %585, %584 : vector<1x256xf32>
      %587 = arith.addf %581, %586 : vector<1x256xf32>
      %c67_288 = arith.constant 67 : index
      %588 = memref.load %arg3[%c67_288] : memref<98xf32, #tpu.memory_space<smem>>
      %c1_289 = arith.constant 1 : index
      %c0_290 = arith.constant 0 : index
      %c36_291 = arith.constant 36 : index
      %589 = vector.load %arg7[%c1_289, %c0_290, %c36_291] : memref<2x1x358xf32, #tpu.memory_space<vmem>>, vector<1x1x256xf32>
      %590 = vector.shape_cast %589 : vector<1x1x256xf32> to vector<1x256xf32>
      %cst_292 = arith.constant 0.000000e+00 : f32
      %591 = vector.broadcast %cst_292 : f32 to vector<1x256xf32>
      %592 = arith.select %63, %590, %591 : vector<1x256xi1>, vector<1x256xf32>
      %593 = vector.broadcast %588 : f32 to vector<1x256xf32>
      %594 = arith.mulf %593, %592 : vector<1x256xf32>
      %595 = arith.addf %587, %594 : vector<1x256xf32>
      %c68_293 = arith.constant 68 : index
      %596 = memref.load %arg3[%c68_293] : memref<98xf32, #tpu.memory_space<smem>>
      %c1_294 = arith.constant 1 : index
      %c0_295 = arith.constant 0 : index
      %c37_296 = arith.constant 37 : index
      %597 = vector.load %arg7[%c1_294, %c0_295, %c37_296] : memref<2x1x358xf32, #tpu.memory_space<vmem>>, vector<1x1x256xf32>
      %598 = vector.shape_cast %597 : vector<1x1x256xf32> to vector<1x256xf32>
      %cst_297 = arith.constant 0.000000e+00 : f32
      %599 = vector.broadcast %cst_297 : f32 to vector<1x256xf32>
      %600 = arith.select %65, %598, %599 : vector<1x256xi1>, vector<1x256xf32>
      %601 = vector.broadcast %596 : f32 to vector<1x256xf32>
      %602 = arith.mulf %601, %600 : vector<1x256xf32>
      %603 = arith.addf %595, %602 : vector<1x256xf32>
      %c69_298 = arith.constant 69 : index
      %604 = memref.load %arg3[%c69_298] : memref<98xf32, #tpu.memory_space<smem>>
      %c1_299 = arith.constant 1 : index
      %c0_300 = arith.constant 0 : index
      %c38_301 = arith.constant 38 : index
      %605 = vector.load %arg7[%c1_299, %c0_300, %c38_301] : memref<2x1x358xf32, #tpu.memory_space<vmem>>, vector<1x1x256xf32>
      %606 = vector.shape_cast %605 : vector<1x1x256xf32> to vector<1x256xf32>
      %cst_302 = arith.constant 0.000000e+00 : f32
      %607 = vector.broadcast %cst_302 : f32 to vector<1x256xf32>
      %608 = arith.select %67, %606, %607 : vector<1x256xi1>, vector<1x256xf32>
      %609 = vector.broadcast %604 : f32 to vector<1x256xf32>
      %610 = arith.mulf %609, %608 : vector<1x256xf32>
      %611 = arith.addf %603, %610 : vector<1x256xf32>
      %c70_303 = arith.constant 70 : index
      %612 = memref.load %arg3[%c70_303] : memref<98xf32, #tpu.memory_space<smem>>
      %c1_304 = arith.constant 1 : index
      %c0_305 = arith.constant 0 : index
      %c48_306 = arith.constant 48 : index
      %613 = vector.load %arg7[%c1_304, %c0_305, %c48_306] : memref<2x1x358xf32, #tpu.memory_space<vmem>>, vector<1x1x256xf32>
      %614 = vector.shape_cast %613 : vector<1x1x256xf32> to vector<1x256xf32>
      %cst_307 = arith.constant 0.000000e+00 : f32
      %615 = vector.broadcast %cst_307 : f32 to vector<1x256xf32>
      %616 = arith.select %57, %614, %615 : vector<1x256xi1>, vector<1x256xf32>
      %617 = vector.broadcast %612 : f32 to vector<1x256xf32>
      %618 = arith.mulf %617, %616 : vector<1x256xf32>
      %619 = arith.addf %557, %618 : vector<1x256xf32>
      %c71 = arith.constant 71 : index
      %620 = memref.load %arg3[%c71] : memref<98xf32, #tpu.memory_space<smem>>
      %c1_308 = arith.constant 1 : index
      %c0_309 = arith.constant 0 : index
      %c49_310 = arith.constant 49 : index
      %621 = vector.load %arg7[%c1_308, %c0_309, %c49_310] : memref<2x1x358xf32, #tpu.memory_space<vmem>>, vector<1x1x256xf32>
      %622 = vector.shape_cast %621 : vector<1x1x256xf32> to vector<1x256xf32>
      %cst_311 = arith.constant 0.000000e+00 : f32
      %623 = vector.broadcast %cst_311 : f32 to vector<1x256xf32>
      %624 = arith.select %59, %622, %623 : vector<1x256xi1>, vector<1x256xf32>
      %625 = vector.broadcast %620 : f32 to vector<1x256xf32>
      %626 = arith.mulf %625, %624 : vector<1x256xf32>
      %627 = arith.addf %619, %626 : vector<1x256xf32>
      %c72 = arith.constant 72 : index
      %628 = memref.load %arg3[%c72] : memref<98xf32, #tpu.memory_space<smem>>
      %c1_312 = arith.constant 1 : index
      %c0_313 = arith.constant 0 : index
      %c50_314 = arith.constant 50 : index
      %629 = vector.load %arg7[%c1_312, %c0_313, %c50_314] : memref<2x1x358xf32, #tpu.memory_space<vmem>>, vector<1x1x256xf32>
      %630 = vector.shape_cast %629 : vector<1x1x256xf32> to vector<1x256xf32>
      %cst_315 = arith.constant 0.000000e+00 : f32
      %631 = vector.broadcast %cst_315 : f32 to vector<1x256xf32>
      %632 = arith.select %61, %630, %631 : vector<1x256xi1>, vector<1x256xf32>
      %633 = vector.broadcast %628 : f32 to vector<1x256xf32>
      %634 = arith.mulf %633, %632 : vector<1x256xf32>
      %635 = arith.addf %627, %634 : vector<1x256xf32>
      %c73 = arith.constant 73 : index
      %636 = memref.load %arg3[%c73] : memref<98xf32, #tpu.memory_space<smem>>
      %c1_316 = arith.constant 1 : index
      %c0_317 = arith.constant 0 : index
      %c51_318 = arith.constant 51 : index
      %637 = vector.load %arg7[%c1_316, %c0_317, %c51_318] : memref<2x1x358xf32, #tpu.memory_space<vmem>>, vector<1x1x256xf32>
      %638 = vector.shape_cast %637 : vector<1x1x256xf32> to vector<1x256xf32>
      %639 = vector.broadcast %636 : f32 to vector<1x256xf32>
      %640 = arith.mulf %639, %638 : vector<1x256xf32>
      %641 = arith.addf %635, %640 : vector<1x256xf32>
      %c74 = arith.constant 74 : index
      %642 = memref.load %arg3[%c74] : memref<98xf32, #tpu.memory_space<smem>>
      %c1_319 = arith.constant 1 : index
      %c0_320 = arith.constant 0 : index
      %c52_321 = arith.constant 52 : index
      %643 = vector.load %arg7[%c1_319, %c0_320, %c52_321] : memref<2x1x358xf32, #tpu.memory_space<vmem>>, vector<1x1x256xf32>
      %644 = vector.shape_cast %643 : vector<1x1x256xf32> to vector<1x256xf32>
      %cst_322 = arith.constant 0.000000e+00 : f32
      %645 = vector.broadcast %cst_322 : f32 to vector<1x256xf32>
      %646 = arith.select %63, %644, %645 : vector<1x256xi1>, vector<1x256xf32>
      %647 = vector.broadcast %642 : f32 to vector<1x256xf32>
      %648 = arith.mulf %647, %646 : vector<1x256xf32>
      %649 = arith.addf %641, %648 : vector<1x256xf32>
      %c75 = arith.constant 75 : index
      %650 = memref.load %arg3[%c75] : memref<98xf32, #tpu.memory_space<smem>>
      %c1_323 = arith.constant 1 : index
      %c0_324 = arith.constant 0 : index
      %c53_325 = arith.constant 53 : index
      %651 = vector.load %arg7[%c1_323, %c0_324, %c53_325] : memref<2x1x358xf32, #tpu.memory_space<vmem>>, vector<1x1x256xf32>
      %652 = vector.shape_cast %651 : vector<1x1x256xf32> to vector<1x256xf32>
      %cst_326 = arith.constant 0.000000e+00 : f32
      %653 = vector.broadcast %cst_326 : f32 to vector<1x256xf32>
      %654 = arith.select %65, %652, %653 : vector<1x256xi1>, vector<1x256xf32>
      %655 = vector.broadcast %650 : f32 to vector<1x256xf32>
      %656 = arith.mulf %655, %654 : vector<1x256xf32>
      %657 = arith.addf %649, %656 : vector<1x256xf32>
      %c76 = arith.constant 76 : index
      %658 = memref.load %arg3[%c76] : memref<98xf32, #tpu.memory_space<smem>>
      %c1_327 = arith.constant 1 : index
      %c0_328 = arith.constant 0 : index
      %c54_329 = arith.constant 54 : index
      %659 = vector.load %arg7[%c1_327, %c0_328, %c54_329] : memref<2x1x358xf32, #tpu.memory_space<vmem>>, vector<1x1x256xf32>
      %660 = vector.shape_cast %659 : vector<1x1x256xf32> to vector<1x256xf32>
      %cst_330 = arith.constant 0.000000e+00 : f32
      %661 = vector.broadcast %cst_330 : f32 to vector<1x256xf32>
      %662 = arith.select %67, %660, %661 : vector<1x256xi1>, vector<1x256xf32>
      %663 = vector.broadcast %658 : f32 to vector<1x256xf32>
      %664 = arith.mulf %663, %662 : vector<1x256xf32>
      %665 = arith.addf %657, %664 : vector<1x256xf32>
      %c77 = arith.constant 77 : index
      %666 = memref.load %arg3[%c77] : memref<98xf32, #tpu.memory_space<smem>>
      %c1_331 = arith.constant 1 : index
      %c0_332 = arith.constant 0 : index
      %c64_333 = arith.constant 64 : index
      %667 = vector.load %arg7[%c1_331, %c0_332, %c64_333] : memref<2x1x358xf32, #tpu.memory_space<vmem>>, vector<1x1x256xf32>
      %668 = vector.shape_cast %667 : vector<1x1x256xf32> to vector<1x256xf32>
      %cst_334 = arith.constant 0.000000e+00 : f32
      %669 = vector.broadcast %cst_334 : f32 to vector<1x256xf32>
      %670 = arith.select %57, %668, %669 : vector<1x256xi1>, vector<1x256xf32>
      %671 = vector.broadcast %666 : f32 to vector<1x256xf32>
      %672 = arith.mulf %671, %670 : vector<1x256xf32>
      %673 = arith.addf %611, %672 : vector<1x256xf32>
      %c78 = arith.constant 78 : index
      %674 = memref.load %arg3[%c78] : memref<98xf32, #tpu.memory_space<smem>>
      %c1_335 = arith.constant 1 : index
      %c0_336 = arith.constant 0 : index
      %c65_337 = arith.constant 65 : index
      %675 = vector.load %arg7[%c1_335, %c0_336, %c65_337] : memref<2x1x358xf32, #tpu.memory_space<vmem>>, vector<1x1x256xf32>
      %676 = vector.shape_cast %675 : vector<1x1x256xf32> to vector<1x256xf32>
      %cst_338 = arith.constant 0.000000e+00 : f32
      %677 = vector.broadcast %cst_338 : f32 to vector<1x256xf32>
      %678 = arith.select %59, %676, %677 : vector<1x256xi1>, vector<1x256xf32>
      %679 = vector.broadcast %674 : f32 to vector<1x256xf32>
      %680 = arith.mulf %679, %678 : vector<1x256xf32>
      %681 = arith.addf %673, %680 : vector<1x256xf32>
      %c79 = arith.constant 79 : index
      %682 = memref.load %arg3[%c79] : memref<98xf32, #tpu.memory_space<smem>>
      %c1_339 = arith.constant 1 : index
      %c0_340 = arith.constant 0 : index
      %c66_341 = arith.constant 66 : index
      %683 = vector.load %arg7[%c1_339, %c0_340, %c66_341] : memref<2x1x358xf32, #tpu.memory_space<vmem>>, vector<1x1x256xf32>
      %684 = vector.shape_cast %683 : vector<1x1x256xf32> to vector<1x256xf32>
      %cst_342 = arith.constant 0.000000e+00 : f32
      %685 = vector.broadcast %cst_342 : f32 to vector<1x256xf32>
      %686 = arith.select %61, %684, %685 : vector<1x256xi1>, vector<1x256xf32>
      %687 = vector.broadcast %682 : f32 to vector<1x256xf32>
      %688 = arith.mulf %687, %686 : vector<1x256xf32>
      %689 = arith.addf %681, %688 : vector<1x256xf32>
      %c80_343 = arith.constant 80 : index
      %690 = memref.load %arg3[%c80_343] : memref<98xf32, #tpu.memory_space<smem>>
      %c1_344 = arith.constant 1 : index
      %c0_345 = arith.constant 0 : index
      %c67_346 = arith.constant 67 : index
      %691 = vector.load %arg7[%c1_344, %c0_345, %c67_346] : memref<2x1x358xf32, #tpu.memory_space<vmem>>, vector<1x1x256xf32>
      %692 = vector.shape_cast %691 : vector<1x1x256xf32> to vector<1x256xf32>
      %693 = vector.broadcast %690 : f32 to vector<1x256xf32>
      %694 = arith.mulf %693, %692 : vector<1x256xf32>
      %695 = arith.addf %689, %694 : vector<1x256xf32>
      %c81_347 = arith.constant 81 : index
      %696 = memref.load %arg3[%c81_347] : memref<98xf32, #tpu.memory_space<smem>>
      %c1_348 = arith.constant 1 : index
      %c0_349 = arith.constant 0 : index
      %c68_350 = arith.constant 68 : index
      %697 = vector.load %arg7[%c1_348, %c0_349, %c68_350] : memref<2x1x358xf32, #tpu.memory_space<vmem>>, vector<1x1x256xf32>
      %698 = vector.shape_cast %697 : vector<1x1x256xf32> to vector<1x256xf32>
      %cst_351 = arith.constant 0.000000e+00 : f32
      %699 = vector.broadcast %cst_351 : f32 to vector<1x256xf32>
      %700 = arith.select %63, %698, %699 : vector<1x256xi1>, vector<1x256xf32>
      %701 = vector.broadcast %696 : f32 to vector<1x256xf32>
      %702 = arith.mulf %701, %700 : vector<1x256xf32>
      %703 = arith.addf %695, %702 : vector<1x256xf32>
      %c82_352 = arith.constant 82 : index
      %704 = memref.load %arg3[%c82_352] : memref<98xf32, #tpu.memory_space<smem>>
      %c1_353 = arith.constant 1 : index
      %c0_354 = arith.constant 0 : index
      %c69_355 = arith.constant 69 : index
      %705 = vector.load %arg7[%c1_353, %c0_354, %c69_355] : memref<2x1x358xf32, #tpu.memory_space<vmem>>, vector<1x1x256xf32>
      %706 = vector.shape_cast %705 : vector<1x1x256xf32> to vector<1x256xf32>
      %cst_356 = arith.constant 0.000000e+00 : f32
      %707 = vector.broadcast %cst_356 : f32 to vector<1x256xf32>
      %708 = arith.select %65, %706, %707 : vector<1x256xi1>, vector<1x256xf32>
      %709 = vector.broadcast %704 : f32 to vector<1x256xf32>
      %710 = arith.mulf %709, %708 : vector<1x256xf32>
      %711 = arith.addf %703, %710 : vector<1x256xf32>
      %c83_357 = arith.constant 83 : index
      %712 = memref.load %arg3[%c83_357] : memref<98xf32, #tpu.memory_space<smem>>
      %c1_358 = arith.constant 1 : index
      %c0_359 = arith.constant 0 : index
      %c70_360 = arith.constant 70 : index
      %713 = vector.load %arg7[%c1_358, %c0_359, %c70_360] : memref<2x1x358xf32, #tpu.memory_space<vmem>>, vector<1x1x256xf32>
      %714 = vector.shape_cast %713 : vector<1x1x256xf32> to vector<1x256xf32>
      %cst_361 = arith.constant 0.000000e+00 : f32
      %715 = vector.broadcast %cst_361 : f32 to vector<1x256xf32>
      %716 = arith.select %67, %714, %715 : vector<1x256xi1>, vector<1x256xf32>
      %717 = vector.broadcast %712 : f32 to vector<1x256xf32>
      %718 = arith.mulf %717, %716 : vector<1x256xf32>
      %719 = arith.addf %711, %718 : vector<1x256xf32>
      %c84_362 = arith.constant 84 : index
      %720 = memref.load %arg3[%c84_362] : memref<98xf32, #tpu.memory_space<smem>>
      %c1_363 = arith.constant 1 : index
      %c0_364 = arith.constant 0 : index
      %c80_365 = arith.constant 80 : index
      %721 = vector.load %arg7[%c1_363, %c0_364, %c80_365] : memref<2x1x358xf32, #tpu.memory_space<vmem>>, vector<1x1x256xf32>
      %722 = vector.shape_cast %721 : vector<1x1x256xf32> to vector<1x256xf32>
      %cst_366 = arith.constant 0.000000e+00 : f32
      %723 = vector.broadcast %cst_366 : f32 to vector<1x256xf32>
      %724 = arith.select %57, %722, %723 : vector<1x256xi1>, vector<1x256xf32>
      %725 = vector.broadcast %720 : f32 to vector<1x256xf32>
      %726 = arith.mulf %725, %724 : vector<1x256xf32>
      %727 = arith.addf %665, %726 : vector<1x256xf32>
      %c85_367 = arith.constant 85 : index
      %728 = memref.load %arg3[%c85_367] : memref<98xf32, #tpu.memory_space<smem>>
      %c1_368 = arith.constant 1 : index
      %c0_369 = arith.constant 0 : index
      %c81_370 = arith.constant 81 : index
      %729 = vector.load %arg7[%c1_368, %c0_369, %c81_370] : memref<2x1x358xf32, #tpu.memory_space<vmem>>, vector<1x1x256xf32>
      %730 = vector.shape_cast %729 : vector<1x1x256xf32> to vector<1x256xf32>
      %cst_371 = arith.constant 0.000000e+00 : f32
      %731 = vector.broadcast %cst_371 : f32 to vector<1x256xf32>
      %732 = arith.select %59, %730, %731 : vector<1x256xi1>, vector<1x256xf32>
      %733 = vector.broadcast %728 : f32 to vector<1x256xf32>
      %734 = arith.mulf %733, %732 : vector<1x256xf32>
      %735 = arith.addf %727, %734 : vector<1x256xf32>
      %c86_372 = arith.constant 86 : index
      %736 = memref.load %arg3[%c86_372] : memref<98xf32, #tpu.memory_space<smem>>
      %c1_373 = arith.constant 1 : index
      %c0_374 = arith.constant 0 : index
      %c82_375 = arith.constant 82 : index
      %737 = vector.load %arg7[%c1_373, %c0_374, %c82_375] : memref<2x1x358xf32, #tpu.memory_space<vmem>>, vector<1x1x256xf32>
      %738 = vector.shape_cast %737 : vector<1x1x256xf32> to vector<1x256xf32>
      %cst_376 = arith.constant 0.000000e+00 : f32
      %739 = vector.broadcast %cst_376 : f32 to vector<1x256xf32>
      %740 = arith.select %61, %738, %739 : vector<1x256xi1>, vector<1x256xf32>
      %741 = vector.broadcast %736 : f32 to vector<1x256xf32>
      %742 = arith.mulf %741, %740 : vector<1x256xf32>
      %743 = arith.addf %735, %742 : vector<1x256xf32>
      %c87 = arith.constant 87 : index
      %744 = memref.load %arg3[%c87] : memref<98xf32, #tpu.memory_space<smem>>
      %c1_377 = arith.constant 1 : index
      %c0_378 = arith.constant 0 : index
      %c83_379 = arith.constant 83 : index
      %745 = vector.load %arg7[%c1_377, %c0_378, %c83_379] : memref<2x1x358xf32, #tpu.memory_space<vmem>>, vector<1x1x256xf32>
      %746 = vector.shape_cast %745 : vector<1x1x256xf32> to vector<1x256xf32>
      %747 = vector.broadcast %744 : f32 to vector<1x256xf32>
      %748 = arith.mulf %747, %746 : vector<1x256xf32>
      %749 = arith.addf %743, %748 : vector<1x256xf32>
      %c88 = arith.constant 88 : index
      %750 = memref.load %arg3[%c88] : memref<98xf32, #tpu.memory_space<smem>>
      %c1_380 = arith.constant 1 : index
      %c0_381 = arith.constant 0 : index
      %c84_382 = arith.constant 84 : index
      %751 = vector.load %arg7[%c1_380, %c0_381, %c84_382] : memref<2x1x358xf32, #tpu.memory_space<vmem>>, vector<1x1x256xf32>
      %752 = vector.shape_cast %751 : vector<1x1x256xf32> to vector<1x256xf32>
      %cst_383 = arith.constant 0.000000e+00 : f32
      %753 = vector.broadcast %cst_383 : f32 to vector<1x256xf32>
      %754 = arith.select %63, %752, %753 : vector<1x256xi1>, vector<1x256xf32>
      %755 = vector.broadcast %750 : f32 to vector<1x256xf32>
      %756 = arith.mulf %755, %754 : vector<1x256xf32>
      %757 = arith.addf %749, %756 : vector<1x256xf32>
      %c89 = arith.constant 89 : index
      %758 = memref.load %arg3[%c89] : memref<98xf32, #tpu.memory_space<smem>>
      %c1_384 = arith.constant 1 : index
      %c0_385 = arith.constant 0 : index
      %c85_386 = arith.constant 85 : index
      %759 = vector.load %arg7[%c1_384, %c0_385, %c85_386] : memref<2x1x358xf32, #tpu.memory_space<vmem>>, vector<1x1x256xf32>
      %760 = vector.shape_cast %759 : vector<1x1x256xf32> to vector<1x256xf32>
      %cst_387 = arith.constant 0.000000e+00 : f32
      %761 = vector.broadcast %cst_387 : f32 to vector<1x256xf32>
      %762 = arith.select %65, %760, %761 : vector<1x256xi1>, vector<1x256xf32>
      %763 = vector.broadcast %758 : f32 to vector<1x256xf32>
      %764 = arith.mulf %763, %762 : vector<1x256xf32>
      %765 = arith.addf %757, %764 : vector<1x256xf32>
      %c90 = arith.constant 90 : index
      %766 = memref.load %arg3[%c90] : memref<98xf32, #tpu.memory_space<smem>>
      %c1_388 = arith.constant 1 : index
      %c0_389 = arith.constant 0 : index
      %c86_390 = arith.constant 86 : index
      %767 = vector.load %arg7[%c1_388, %c0_389, %c86_390] : memref<2x1x358xf32, #tpu.memory_space<vmem>>, vector<1x1x256xf32>
      %768 = vector.shape_cast %767 : vector<1x1x256xf32> to vector<1x256xf32>
      %cst_391 = arith.constant 0.000000e+00 : f32
      %769 = vector.broadcast %cst_391 : f32 to vector<1x256xf32>
      %770 = arith.select %67, %768, %769 : vector<1x256xi1>, vector<1x256xf32>
      %771 = vector.broadcast %766 : f32 to vector<1x256xf32>
      %772 = arith.mulf %771, %770 : vector<1x256xf32>
      %773 = arith.addf %765, %772 : vector<1x256xf32>
      %c91 = arith.constant 91 : index
      %774 = memref.load %arg3[%c91] : memref<98xf32, #tpu.memory_space<smem>>
      %c1_392 = arith.constant 1 : index
      %c0_393 = arith.constant 0 : index
      %c96_394 = arith.constant 96 : index
      %775 = vector.load %arg7[%c1_392, %c0_393, %c96_394] : memref<2x1x358xf32, #tpu.memory_space<vmem>>, vector<1x1x256xf32>
      %776 = vector.shape_cast %775 : vector<1x1x256xf32> to vector<1x256xf32>
      %cst_395 = arith.constant 0.000000e+00 : f32
      %777 = vector.broadcast %cst_395 : f32 to vector<1x256xf32>
      %778 = arith.select %57, %776, %777 : vector<1x256xi1>, vector<1x256xf32>
      %779 = vector.broadcast %774 : f32 to vector<1x256xf32>
      %780 = arith.mulf %779, %778 : vector<1x256xf32>
      %781 = arith.addf %719, %780 : vector<1x256xf32>
      %c92 = arith.constant 92 : index
      %782 = memref.load %arg3[%c92] : memref<98xf32, #tpu.memory_space<smem>>
      %c1_396 = arith.constant 1 : index
      %c0_397 = arith.constant 0 : index
      %c97_398 = arith.constant 97 : index
      %783 = vector.load %arg7[%c1_396, %c0_397, %c97_398] : memref<2x1x358xf32, #tpu.memory_space<vmem>>, vector<1x1x256xf32>
      %784 = vector.shape_cast %783 : vector<1x1x256xf32> to vector<1x256xf32>
      %cst_399 = arith.constant 0.000000e+00 : f32
      %785 = vector.broadcast %cst_399 : f32 to vector<1x256xf32>
      %786 = arith.select %59, %784, %785 : vector<1x256xi1>, vector<1x256xf32>
      %787 = vector.broadcast %782 : f32 to vector<1x256xf32>
      %788 = arith.mulf %787, %786 : vector<1x256xf32>
      %789 = arith.addf %781, %788 : vector<1x256xf32>
      %c93 = arith.constant 93 : index
      %790 = memref.load %arg3[%c93] : memref<98xf32, #tpu.memory_space<smem>>
      %c1_400 = arith.constant 1 : index
      %c0_401 = arith.constant 0 : index
      %c98_402 = arith.constant 98 : index
      %791 = vector.load %arg7[%c1_400, %c0_401, %c98_402] : memref<2x1x358xf32, #tpu.memory_space<vmem>>, vector<1x1x256xf32>
      %792 = vector.shape_cast %791 : vector<1x1x256xf32> to vector<1x256xf32>
      %cst_403 = arith.constant 0.000000e+00 : f32
      %793 = vector.broadcast %cst_403 : f32 to vector<1x256xf32>
      %794 = arith.select %61, %792, %793 : vector<1x256xi1>, vector<1x256xf32>
      %795 = vector.broadcast %790 : f32 to vector<1x256xf32>
      %796 = arith.mulf %795, %794 : vector<1x256xf32>
      %797 = arith.addf %789, %796 : vector<1x256xf32>
      %c94 = arith.constant 94 : index
      %798 = memref.load %arg3[%c94] : memref<98xf32, #tpu.memory_space<smem>>
      %c1_404 = arith.constant 1 : index
      %c0_405 = arith.constant 0 : index
      %c99_406 = arith.constant 99 : index
      %799 = vector.load %arg7[%c1_404, %c0_405, %c99_406] : memref<2x1x358xf32, #tpu.memory_space<vmem>>, vector<1x1x256xf32>
      %800 = vector.shape_cast %799 : vector<1x1x256xf32> to vector<1x256xf32>
      %801 = vector.broadcast %798 : f32 to vector<1x256xf32>
      %802 = arith.mulf %801, %800 : vector<1x256xf32>
      %803 = arith.addf %797, %802 : vector<1x256xf32>
      %c95 = arith.constant 95 : index
      %804 = memref.load %arg3[%c95] : memref<98xf32, #tpu.memory_space<smem>>
      %c1_407 = arith.constant 1 : index
      %c0_408 = arith.constant 0 : index
      %c100_409 = arith.constant 100 : index
      %805 = vector.load %arg7[%c1_407, %c0_408, %c100_409] : memref<2x1x358xf32, #tpu.memory_space<vmem>>, vector<1x1x256xf32>
      %806 = vector.shape_cast %805 : vector<1x1x256xf32> to vector<1x256xf32>
      %cst_410 = arith.constant 0.000000e+00 : f32
      %807 = vector.broadcast %cst_410 : f32 to vector<1x256xf32>
      %808 = arith.select %63, %806, %807 : vector<1x256xi1>, vector<1x256xf32>
      %809 = vector.broadcast %804 : f32 to vector<1x256xf32>
      %810 = arith.mulf %809, %808 : vector<1x256xf32>
      %811 = arith.addf %803, %810 : vector<1x256xf32>
      %c96_411 = arith.constant 96 : index
      %812 = memref.load %arg3[%c96_411] : memref<98xf32, #tpu.memory_space<smem>>
      %c1_412 = arith.constant 1 : index
      %c0_413 = arith.constant 0 : index
      %c101_414 = arith.constant 101 : index
      %813 = vector.load %arg7[%c1_412, %c0_413, %c101_414] : memref<2x1x358xf32, #tpu.memory_space<vmem>>, vector<1x1x256xf32>
      %814 = vector.shape_cast %813 : vector<1x1x256xf32> to vector<1x256xf32>
      %cst_415 = arith.constant 0.000000e+00 : f32
      %815 = vector.broadcast %cst_415 : f32 to vector<1x256xf32>
      %816 = arith.select %65, %814, %815 : vector<1x256xi1>, vector<1x256xf32>
      %817 = vector.broadcast %812 : f32 to vector<1x256xf32>
      %818 = arith.mulf %817, %816 : vector<1x256xf32>
      %819 = arith.addf %811, %818 : vector<1x256xf32>
      %c97_416 = arith.constant 97 : index
      %820 = memref.load %arg3[%c97_416] : memref<98xf32, #tpu.memory_space<smem>>
      %c1_417 = arith.constant 1 : index
      %c0_418 = arith.constant 0 : index
      %c102_419 = arith.constant 102 : index
      %821 = vector.load %arg7[%c1_417, %c0_418, %c102_419] : memref<2x1x358xf32, #tpu.memory_space<vmem>>, vector<1x1x256xf32>
      %822 = vector.shape_cast %821 : vector<1x1x256xf32> to vector<1x256xf32>
      %cst_420 = arith.constant 0.000000e+00 : f32
      %823 = vector.broadcast %cst_420 : f32 to vector<1x256xf32>
      %824 = arith.select %67, %822, %823 : vector<1x256xi1>, vector<1x256xf32>
      %825 = vector.broadcast %820 : f32 to vector<1x256xf32>
      %826 = arith.mulf %825, %824 : vector<1x256xf32>
      %827 = arith.addf %819, %826 : vector<1x256xf32>
      %828 = arith.addf %449, %395 : vector<1x256xf32>
      %829 = arith.addf %827, %773 : vector<1x256xf32>
      %830 = arith.addf %828, %829 : vector<1x256xf32>
      %831 = arith.negf %830 : vector<1x256xf32>
      %832 = math.exp %831 : vector<1x256xf32>
      %cst_421 = arith.constant 1.000000e+00 : f32
      %833 = vector.broadcast %cst_421 : f32 to vector<1x256xf32>
      %834 = arith.addf %833, %832 : vector<1x256xf32>
      %835 = arith.divf %833, %834 : vector<1x256xf32>
      %c0_422 = arith.constant 0 : index
      %c0_423 = arith.constant 0 : index
      %c0_424 = arith.constant 0 : index
      %836 = vector.load %arg4[%c0_422, %c0_423, %c0_424] : memref<1x1x256xf32, #tpu.memory_space<vmem>>, vector<1x1x256xf32>
      %837 = vector.shape_cast %836 : vector<1x1x256xf32> to vector<1x256xf32>
      %838 = vector.shape_cast %835 : vector<1x256xf32> to vector<1x1x256xf32>
      tpu.vector_store %arg4[%c0_422, %c0_423, %c0_424], %838 {strides = array<i32>} : memref<1x1x256xf32, #tpu.memory_space<vmem>>, vector<1x1x256xf32>,
    } else {
    }
    return
  }
  func.func @transform_0(%arg0: i32, %arg1: i32) -> (i32, i32, i32) {
    %c0_i32 = arith.constant 0 : i32
    %c0_i32_0 = arith.constant 0 : i32
    return %arg0, %arg1, %c0_i32 : i32, i32, i32
  }
  func.func @transform_1(%arg0: i32, %arg1: i32) -> i32 {
    %c0_i32 = arith.constant 0 : i32
    %c0_i32_0 = arith.constant 0 : i32
    return %c0_i32 : i32
  }
  func.func @transform_2(%arg0: i32, %arg1: i32) -> (i32, i32, i32) {
    %c0_i32 = arith.constant 0 : i32
    %c0_i32_0 = arith.constant 0 : i32
    %c0_i32_1 = arith.constant 0 : i32
    return %arg0, %c0_i32, %c0_i32_0 : i32, i32, i32
  }
}

</mosaic_0001>

<llo_original>
// kernel: tpu_custom_call.1
$region0: #{tpu_custom_call.1}
  #allocation0 [shape = 'u32[]', space=smem, size = 0x4, offset = 0x4, fixed_abs, tag = 'smem constant byte address 0x4 - core index']
  #allocation1 [shape = 'u32[144,128]{1,0:T(1,128)}', space=vmem, size = 0x12000, scoped, tag = 'internal scratch']
  #allocation2 [shape = 'f32[1,256]{1,0:T(1,128)}', space=vmem, size = 0x400, scoped, tag = 'scratch operand']
  #allocation3 [shape = 'f32[1,256]{1,0:T(1,128)}', space=vmem, size = 0x400, scoped, tag = 'scratch operand']
  #allocation4 [shape = 'f32[2,1,358]{2,1,0:T(1,128)}', space=vmem, size = 0xc00, scoped, tag = 'scratch operand']
  %s0 = inlined_call_operand.hbm [shape: f32[2,4,256], index: 0, kind: input, shape index: {}]
  %s1 = inlined_call_operand.vmem [shape: f32[98], index: 1, kind: input, shape index: {}]
  %s2 = inlined_call_operand.hbm [shape: f32[2,1,256], index: 2, kind: output, shape index: {}]
  %s3 = sld [smem:[#allocation0]]
  $region57: #{tpu_custom_call.1} parent=0
    _
  %s5 = ssub.s32 1, %s3
  %s6 = scalar_select 0, %s5, %s3
  $region1: #{tpu_custom_call.1} parent=0
    #allocation5 [shape = 'u8[8192]{0}', space=vmem, size = 0x2000, scoped, tag = 'input window, operand 0']
    #allocation6 [shape = 's32[2]{0}', space=sflag, size = 0x8, scoped, tag = 'scoped memory for tpu_custom_call.1']
    #allocation7 [shape = 's32[2]{0}', space=sflag, size = 0x8, scoped, tag = 'scoped memory for tpu_custom_call.1']
    #allocation8 [shape = 's32[2]{0}', space=sflag, size = 0x8, scoped, tag = 'scoped memory for tpu_custom_call.1']
    #allocation9 [shape = 'u8[512]{0}', space=smem, size = 0x200, scoped, tag = 'input window, operand 1, single buffered']
    #allocation10 [shape = 'u8[2048]{0}', space=vmem, size = 0x800, scoped, tag = 'output window, operand 0']
    %7 = vsyncpa [#allocation6], 0
    %s8 = scalar_lea.sflag [#allocation6], 1
    %9 = vsyncpa %s8, 0
    %10 = vsyncpa [#allocation8], 0
    %11 = vsyncpa [#allocation7], 0
    %s12 = scalar_lea.sflag [#allocation7], 1
    %13 = vsyncpa %s12, 0
    loop: start=0, step=1, limit=4
    $region2: #{tpu_custom_call.1} parent=1 // loop_pre_header
      _
    $region3: #{tpu_custom_call.1} parent=1 // loop_header
      %s15 = sphi 0, %s19
      %p16 = scmp.ge.s32.totalorder %s15, 4
      %s22 = sphi 0, %s34
      %s23 = sphi 0, %s30
      %s24 = sphi 0, %s22
      %s25 = sphi 0, %s23
      %s26 = sphi 0, %s24
      %s27 = sphi 0, %s25
      %s39 = sphi 0, %s41
      %s42 = sphi 0, %s39
      %s43 = sphi 0, %s42
      %s59 = sphi 0, %s43
      %s63 = sphi 0, %s63
      %s65 = sphi 0, %s63
      %s66 = sphi 0, %s65
      %s80 = sphi 0, %s66
      %s86 = sphi 0, %s88
      %s89 = sphi 0, %s86
      %s90 = sphi 0, %s89
      %s106 = sphi 0, %s90
    $region4: #{tpu_custom_call.1} parent=1 // loop_header_branch
      %18 = sbr.rel (%p16) target = $region8
    $region5: #{tpu_custom_call.1} parent=1 // loop_body
      %s20 = ssub.s32 %s15, 1
      %s21 = ssub.s32 %s15, 2
      %s28 = sadd.s32 1, %s23
      %p29 = scmp.ge.s32.totalorder %s28, 1
      %s30 = scalar_select %p29, 0, %s28
      %s31 = sadd.s32 1, %s22
      %s32 = scalar_select %p29, %s31, %s22
      %p33 = scmp.ge.s32.totalorder %s32, 2
      %s34 = scalar_select %p33, 0, %s32
      %s35 = ssub.s32 %s22, %s34
      %s36 = ssub.s32 %s23, %s30
      %s37 = sor.u32 %s35, %s36
      %p38 = scmp.eq.s32.totalorder %s37, 0
      %s40 = sadd.s32 %s39, 1
      %s41 = scalar_select %p38, %s39, %s40
      %p44 = pneg %p38
      %p45 = scmp.eq.s32.totalorder %s15, 1
      %p46 = por %p44, %p45
      %p47 = scmp.ne.s32.totalorder %s39, %s42
      %p48 = scmp.eq.s32.totalorder %s15, 0
      %p49 = por %p47, %p48
      %p50 = scmp.ne.s32.totalorder %s39, %s42
      %p51 = scmp.eq.s32.totalorder %s20, 1
      %p52 = por %p50, %p51
      %p53 = scmp.ne.s32.totalorder %s42, %s43
      %p54 = scmp.eq.s32.totalorder %s20, 0
      %p55 = por %p53, %p54
      %p56 = scmp.ne.s32.totalorder %s42, %s43
      %p57 = scmp.eq.s32.totalorder %s21, 1
      %p58 = por %p56, %p57
      %p60 = scmp.ne.s32.totalorder %s43, %s59
      %p61 = scmp.eq.s32.totalorder %s21, 0
      %p62 = por %p60, %p61
      %s64 = sadd.s32 %s63, 1
      %p67 = scmp.eq.s32.totalorder %s15, 1
      %p68 = scmp.ne.s32.totalorder %s63, %s65
      %p69 = scmp.eq.s32.totalorder %s15, 0
      %p70 = por %p68, %p69
      %p71 = scmp.ne.s32.totalorder %s63, %s65
      %p72 = scmp.eq.s32.totalorder %s20, 1
      %p73 = por %p71, %p72
      %p74 = scmp.ne.s32.totalorder %s65, %s66
      %p75 = scmp.eq.s32.totalorder %s20, 0
      %p76 = por %p74, %p75
      %p77 = scmp.ne.s32.totalorder %s65, %s66
      %p78 = scmp.eq.s32.totalorder %s21, 1
      %p79 = por %p77, %p78
      %p81 = scmp.ne.s32.totalorder %s66, %s80
      %p82 = scmp.eq.s32.totalorder %s21, 0
      %p83 = por %p81, %p82
      %s84 = ssub.s32 %s22, %s34
      %p85 = scmp.eq.s32.totalorder %s84, 0
      %s87 = sadd.s32 %s86, 1
      %s88 = scalar_select %p85, %s86, %s87
      %p91 = pneg %p85
      %p92 = scmp.eq.s32.totalorder %s15, 1
      %p93 = por %p91, %p92
      %p94 = scmp.ne.s32.totalorder %s86, %s89
      %p95 = scmp.eq.s32.totalorder %s15, 0
      %p96 = por %p94, %p95
      %p97 = scmp.ne.s32.totalorder %s86, %s89
      %p98 = scmp.eq.s32.totalorder %s20, 1
      %p99 = por %p97, %p98
      %p100 = scmp.ne.s32.totalorder %s89, %s90
      %p101 = scmp.eq.s32.totalorder %s20, 0
      %p102 = por %p100, %p101
      %p103 = scmp.ne.s32.totalorder %s89, %s90
      %p104 = scmp.eq.s32.totalorder %s21, 1
      %p105 = por %p103, %p104
      %p107 = scmp.ne.s32.totalorder %s90, %s106
      %p108 = scmp.eq.s32.totalorder %s21, 0
      %p109 = por %p107, %p108
      %p110 = scmp.le.s32.totalorder 1, %s15
      %p111 = scmp.lt.s32.totalorder %s15, 3
      %p112 = pnand %p110, %p111
      %p113 = pneg %p112
      // Predicated region
      $region9: #{tpu_custom_call.1} parent=5 // pred_check
        _
      $region10: #{tpu_custom_call.1} parent=5 // pred_check_branch
        %115 = sbr.rel (%p112) target = $region12
      $region11: #{tpu_custom_call.1} parent=5 // pred_region
        %s116 = ssub.s32 %s15, 1
        // Predicated region
        $region13: #{tpu_custom_call.1} parent=11 // pred_check
          %p117 = pneg %p76
        $region14: #{tpu_custom_call.1} parent=11 // pred_check_branch
          %119 = sbr.rel (%p117) target = $region16
        $region15: #{tpu_custom_call.1} parent=11 // pred_region
          %s121 = ssub.s32 16, 16
          %122 = vsyncadd [#allocation8], %s121
          %s124 = sshll.u32 %s1, 4
          %s125 = int_to_ptr.vmem [resolvable:$true] %s124
          %127 = dma.vmem_to_smem %s125, 16, [#allocation9], [#allocation8]
        $region16: #{tpu_custom_call.1} parent=11 // pred_fallthru
          _
      $region12: #{tpu_custom_call.1} parent=5 // pred_fallthru
        _
      %p128 = scmp.lt.s32.totalorder %s15, 2
      // Predicated region
      $region17: #{tpu_custom_call.1} parent=5 // pred_check
        %p129 = pneg %p128
      $region18: #{tpu_custom_call.1} parent=5 // pred_check_branch
        %131 = sbr.rel (%p129) target = $region20
      $region19: #{tpu_custom_call.1} parent=5 // pred_region
        // Predicated region
        $region21: #{tpu_custom_call.1} parent=19 // pred_check
          %p132 = pneg %p49
        $region22: #{tpu_custom_call.1} parent=19 // pred_check_branch
          %134 = sbr.rel (%p132) target = $region24
        $region23: #{tpu_custom_call.1} parent=19 // pred_region
          %s135 = sand.u32 %s39, 1
          %s136 = scalar_lea.sflag [#allocation6], %s135
          %s137 = sand.u32 %s39, 1
          %s138 = smul.addr %s137, 8
          %s139 = scalar_lea.vmem [#allocation5], %s138
          %s141 = ssub.s32 128, 128
          %142 = vsyncadd %s136, %s141
          %s143 = smul.addr %s23, 2
          %s144 = smul.addr %s22, 2
          %s145 = sadd.s32 %s143, %s144
          %s146 = smul.addr %s145, 64
          %s147 = scalar_lea.hbm %s0, %s146
          %s149 = sshll.u32 %s139, 4
          %s150 = int_to_ptr.vmem [resolvable:$true] %s149
          %152 = dma.hbm_to_vmem [thread:$0]  %s147, 128, %s150, %s136
        $region24: #{tpu_custom_call.1} parent=19 // pred_fallthru
          _
      $region20: #{tpu_custom_call.1} parent=5 // pred_fallthru
        _
      %p153 = scmp.le.s32.totalorder 1, %s15
      %p154 = scmp.lt.s32.totalorder %s15, 3
      %p155 = pnand %p153, %p154
      %p156 = pneg %p155
      // Predicated region
      $region25: #{tpu_custom_call.1} parent=5 // pred_check
        _
      $region26: #{tpu_custom_call.1} parent=5 // pred_check_branch
        %158 = sbr.rel (%p155) target = $region28
      $region27: #{tpu_custom_call.1} parent=5 // pred_region
        %s159 = ssub.s32 %s15, 1
        %s160 = sand.u32 %s42, 1
        %s161 = scalar_lea.sflag [#allocation6], %s160
        %s162 = sand.u32 %s42, 1
        %s163 = smul.addr %s162, 8
        %s164 = scalar_lea.vmem [#allocation5], %s163
        // Predicated region
        $region29: #{tpu_custom_call.1} parent=27 // pred_check
          %p165 = pneg %p55
        $region30: #{tpu_custom_call.1} parent=27 // pred_check_branch
          %167 = sbr.rel (%p165) target = $region32
        $region31: #{tpu_custom_call.1} parent=27 // pred_region
          %168 = dma.done %s161, 128
        $region32: #{tpu_custom_call.1} parent=27 // pred_fallthru
          _
        // Predicated region
        $region33: #{tpu_custom_call.1} parent=27 // pred_check
          %p169 = pneg %p76
        $region34: #{tpu_custom_call.1} parent=27 // pred_check_branch
          %171 = sbr.rel (%p169) target = $region36
        $region35: #{tpu_custom_call.1} parent=27 // pred_region
          %172 = dma.done [#allocation8], 16
        $region36: #{tpu_custom_call.1} parent=27 // pred_fallthru
          _
        %173 = sfence
        %s174 = sand.u32 %s42, 1
        %s175 = scalar_lea.sflag [#allocation6], %s174
        %s176 = sand.u32 %s42, 1
        %s177 = smul.addr %s176, 8
        %s178 = scalar_lea.vmem [#allocation5], %s177
        %p179 = pneg %p55
        %p180 = pneg %p52
        %p181 = pneg %p76
        %p182 = pneg %p73
        %p183 = pneg %p102
        %p184 = pneg %p99
        %s185 = sand.u32 %s89, 1
        %s186 = scalar_lea.sflag [#allocation7], %s185
        %s187 = sand.u32 %s89, 1
        %s188 = smul.addr %s187, 2
        %s189 = scalar_lea.vmem [#allocation10], %s188
        %p190 = scmp.eq.s32.totalorder %s25, 0
        // Predicated region
        $region37: #{tpu_custom_call.1} parent=27 // pred_check
          %p191 = pneg %p190
        $region38: #{tpu_custom_call.1} parent=27 // pred_check_branch
          %193 = sbr.rel (%p191) target = $region40
        $region39: #{tpu_custom_call.1} parent=27 // pred_region
          %v194 = vlaneseq
          %vm195 = vcmp.ge.s32.totalorder %v194, 0
          %vm196 = vcmp.lt.s32.totalorder %v194, 256
          %vm197 = vmand %vm195, %vm196
          %198 = vst.msk [vmem:[#allocation2] sm:$0x3] %vm197, 0.0
          %199 = vst.msk [vmem:[#allocation3] sm:$0x3] %vm197, -inf
        $region40: #{tpu_custom_call.1} parent=27 // pred_fallthru
          _
        %v200 = vld [vmem:[#allocation2] sm:$0x3]
        %v201 = vld [vmem:[#allocation3] sm:$0x3]
        %v202 = vld [vmem:[%s164] ss:$4 sm:$0x3]
        %v203 = vadd.f32 %v200, %v202
        %v204 = vmax.f32 %v201, %v202
        %s205 = scalar_lea.vmem %s164, 1 [#allocation5]
        %v206 = vld [vmem:[%s205] ss:$4 sm:$0x3]
        %v207 = vadd.f32 %v203, %v206
        %v208 = vmax.f32 %v204, %v206
        %s209 = scalar_lea.vmem %s164, 2 [#allocation5]
        %v210 = vld [vmem:[%s209] ss:$4 sm:$0x3]
        %v211 = vadd.f32 %v207, %v210
        %v212 = vmax.f32 %v208, %v210
        %s213 = scalar_lea.vmem %s164, 3 [#allocation5]
        %v214 = vld [vmem:[%s213] ss:$4 sm:$0x3]
        %v215 = vadd.f32 %v211, %v214
        %v216 = vmax.f32 %v212, %v214
        %v217 = vlaneseq
        %vm218 = vcmp.ge.s32.totalorder %v217, 0
        %vm219 = vcmp.lt.s32.totalorder %v217, 256
        %vm220 = vmand %vm218, %vm219
        %221 = vst.msk [vmem:[#allocation2] sm:$0x3] %vm220, %v215
        %222 = vst.msk [vmem:[#allocation3] sm:$0x3] %vm220, %v216
        // Predicated region
        $region41: #{tpu_custom_call.1} parent=27 // pred_check
          %p223 = pneg %p190
        $region42: #{tpu_custom_call.1} parent=27 // pred_check_branch
          %225 = sbr.rel (%p223) target = $region44
        $region43: #{tpu_custom_call.1} parent=27 // pred_region
          %v226 = vld [vmem:[#allocation2] sm:$0x3]
          %v227 = vmul.f32 %v226, 0.25
          %v228 = vld [vmem:[#allocation3] sm:$0x3]
          %vm229 = vcmp.lt.s32.totalorder %v217, 51
          %vm230 = vmand %vm218, %vm229
          %231 = vst.msk [vmem:[#allocation4] sm:$0x1] %vm230, 0.0
          %232 = vst.msk [vmem:[#allocation4 + $0x3] sm:$0x1] %vm230, 0.0
          %vm233 = vcmp.ge.s32.totalorder %v217, 51
          %vm234 = vcmp.lt.s32.totalorder %v217, 102
          %vm235 = vmand %vm233, %vm234
          %236 = vst.msk [vmem:[#allocation4 + $0x2] sm:$0x1] %vm235, 0.0
          %237 = vst.msk [vmem:[#allocation4 + $0x5] sm:$0x1] %vm235, 0.0
          %239 = vrot.lane.b32.xlu0 %v227, 51
          %v240 = vpop.permute.xlu0 %239
          %v241 = vrot.slane %v240, 7
          %vm242 = vcmask 416768
          %v243 = vsel %vm242, %v241, %v240
          %vm245 = vcmp.lt.s32.totalorder %v217, 307
          %vm246 = vmand %vm233, %vm245
          %247 = vst.msk [vmem:[#allocation4] sm:$0x7] %vm246, %v243
          %249 = vrot.lane.b32.xlu0 %v228, 51
          %v250 = vpop.permute.xlu0 %249
          %v251 = vrot.slane %v250, 7
          %v252 = vsel %vm242, %v251, %v250
          %s254 = scalar_lea.vmem [#allocation4], 3
          %255 = vst.msk [vmem:[%s254] sm:$0x7] %vm246, %v252
          %v256 = vlaneseq
          %v257 = vand.u32 %v256, 127
          %v258 = vadd.s32 %v257, 128
          %vm259 = vcmp.lt.s32.totalorder %v257, 0
          %v260 = vsub.s32 0, %v257
          %v261 = vsel %vm259, %v260, %v257
          %v262 = vshrl.u32 %v261, 4
          %v263 = vand.u32 %v261, 15
          %v264 = vsub.s32 0, %v263
          %v265 = vsel %vm259, %v264, %v263
          %vm266 = vcmp.lt.s32.totalorder %v258, 0
          %v267 = vsub.s32 0, %v258
          %v268 = vsel %vm266, %v267, %v258
          %v269 = vshrl.u32 %v268, 4
          %v270 = vand.u32 %v268, 15
          %v271 = vsub.s32 0, %v270
          %v272 = vsel %vm266, %v271, %v270
          %vm273 = vcmp.ne.s32.totalorder %v265, 0
          %vm274 = vcmp.ne.s32.totalorder %v272, 0
          %vm275 = vcmp.lt.s32.totalorder %v265, 0
          %vm276 = vcmp.lt.s32.totalorder %v272, 0
          %vm277 = vmand %vm275, %vm273
          %vm278 = vmand %vm276, %vm274
          %v279 = vadd.s32 %v265, 16
          %v280 = vadd.s32 %v272, 16
          %v281 = vsel %vm277, %v279, %v265
          %v282 = vsel %vm278, %v280, %v272
          %vm283 = vcmp.ge.s32.totalorder %v281, 3
          %vm284 = vcmp.ge.s32.totalorder %v282, 3
          %vm285 = vcmp.ge.s32.totalorder %v281, 2
          %vm286 = vcmp.ge.s32.totalorder %v282, 2
          %vm287 = vcmp.ge.s32.totalorder %v281, 1
          %vm288 = vcmp.ge.s32.totalorder %v282, 1
          %vm289 = vcmp.lt.s32.totalorder %v281, 15
          %vm290 = vcmp.lt.s32.totalorder %v282, 15
          %vm291 = vcmp.lt.s32.totalorder %v281, 14
          %vm292 = vcmp.lt.s32.totalorder %v282, 14
          %vm293 = vcmp.lt.s32.totalorder %v281, 13
          %vm294 = vcmp.lt.s32.totalorder %v282, 13
          %s295 = sld [smem:[#allocation9]]
          %v296 = vld [vmem:[#allocation4] sm:$0x3]
          %v298 = vlaneseq
          %v299 = vshrl.u32 %v298, 7
          %v300 = vsub.s32 0, %v299
          %v301 = vrot.slane %v296, %v300
          %v302 = vlaneseq
          %v303 = vshrl.u32 %v302, 7
          %v304 = vsub.s32 1, %v303
          %v305 = vrot.slane %v296, %v304
          %v308 = vsel %vm283, %v301, 0.0
          %v309 = vsel %vm284, %v305, 0.0
          %v310 = vstv %s295
          %v311 = vmul.f32 %v310, %v308
          %v312 = vmul.f32 %v310, %v309
          %v313 = vadd.f32 %v311, 0.0
          %v314 = vadd.f32 %v312, 0.0
          %s315 = sld [smem:[#allocation9 + $0x1]]
          %v316 = vld [vmem:[#allocation4] sm:$0x7]
          %v318 = vlaneseq
          %v319 = vshrl.u32 %v318, 7
          %v320 = vsub.s32 0, %v319
          %v321 = vrot.slane %v316, %v320
          %v322 = vlaneseq
          %v323 = vshrl.u32 %v322, 7
          %v324 = vsub.s32 1, %v323
          %v325 = vrot.slane %v316, %v324
          %v326 = vlaneseq
          %v327 = vshrl.u32 %v326, 7
          %v328 = vsub.s32 2, %v327
          %v329 = vrot.slane %v316, %v328
          %330 = vrot.lane.b32.xlu0 %v321, 127
          %v331 = vpop.permute.xlu0 %330
          %332 = vrot.lane.b32.xlu0 %v325, 127
          %v333 = vpop.permute.xlu0 %332
          %334 = vrot.lane.b32.xlu0 %v329, 127
          %v335 = vpop.permute.xlu0 %334
          %vm336 = vcmask 1039360
          %v337 = vsel %vm336, %v331, %v333
          %v338 = vsel %vm336, %v333, %v335
          %v341 = vsel %vm285, %v337, 0.0
          %v342 = vsel %vm286, %v338, 0.0
          %v343 = vstv %s315
          %v344 = vmul.f32 %v343, %v341
          %v345 = vmul.f32 %v343, %v342
          %v346 = vadd.f32 %v313, %v344
          %v347 = vadd.f32 %v314, %v345
          %s348 = sld [smem:[#allocation9 + $0x2]]
          %349 = vrot.lane.b32.xlu0 %v321, 126
          %v350 = vpop.permute.xlu0 %349
          %351 = vrot.lane.b32.xlu0 %v325, 126
          %v352 = vpop.permute.xlu0 %351
          %353 = vrot.lane.b32.xlu0 %v329, 126
          %v354 = vpop.permute.xlu0 %353
          %vm355 = vcmask 1031168
          %v356 = vsel %vm355, %v350, %v352
          %v357 = vsel %vm355, %v352, %v354
          %v360 = vsel %vm287, %v356, 0.0
          %v361 = vsel %vm288, %v357, 0.0
          %v362 = vstv %s348
          %v363 = vmul.f32 %v362, %v360
          %v364 = vmul.f32 %v362, %v361
          %v365 = vadd.f32 %v346, %v363
          %v366 = vadd.f32 %v347, %v364
          %s367 = sld [smem:[#allocation9 + $0x3]]
          %v368 = vstv %s367
          %v369 = vmul.f32 %v368, %v316
          %v371 = vlaneseq
          %v372 = vshrl.u32 %v371, 7
          %v373 = vsub.s32 0, %v372
          %v374 = vrot.slane %v369, %v373
          %v375 = vlaneseq
          %v376 = vshrl.u32 %v375, 7
          %v377 = vsub.s32 1, %v376
          %v378 = vrot.slane %v369, %v377
          %v379 = vlaneseq
          %v380 = vshrl.u32 %v379, 7
          %v381 = vsub.s32 2, %v380
          %v382 = vrot.slane %v369, %v381
          %383 = vrot.lane.b32.xlu0 %v374, 125
          %v384 = vpop.permute.xlu0 %383
          %385 = vrot.lane.b32.xlu0 %v378, 125
          %v386 = vpop.permute.xlu0 %385
          %387 = vrot.lane.b32.xlu0 %v382, 125
          %v388 = vpop.permute.xlu0 %387
          %vm389 = vcmask 1022976
          %v390 = vsel %vm389, %v384, %v386
          %v391 = vsel %vm389, %v386, %v388
          %v394 = vadd.f32 %v365, %v390
          %v395 = vadd.f32 %v366, %v391
          %s396 = sld [smem:[#allocation9 + $0x4]]
          %397 = vrot.lane.b32.xlu0 %v321, 124
          %v398 = vpop.permute.xlu0 %397
          %399 = vrot.lane.b32.xlu0 %v325, 124
          %v400 = vpop.permute.xlu0 %399
          %401 = vrot.lane.b32.xlu0 %v329, 124
          %v402 = vpop.permute.xlu0 %401
          %vm403 = vcmask 1014784
          %v404 = vsel %vm403, %v398, %v400
          %v405 = vsel %vm403, %v400, %v402
          %v408 = vsel %vm289, %v404, 0.0
          %v409 = vsel %vm290, %v405, 0.0
          %v410 = vstv %s396
          %v411 = vmul.f32 %v410, %v408
          %v412 = vmul.f32 %v410, %v409
          %v413 = vadd.f32 %v394, %v411
          %v414 = vadd.f32 %v395, %v412
          %s415 = sld [smem:[#allocation9 + $0x5]]
          %416 = vrot.lane.b32.xlu0 %v321, 123
          %v417 = vpop.permute.xlu0 %416
          %418 = vrot.lane.b32.xlu0 %v325, 123
          %v419 = vpop.permute.xlu0 %418
          %420 = vrot.lane.b32.xlu0 %v329, 123
          %v421 = vpop.permute.xlu0 %420
          %vm422 = vcmask 1006592
          %v423 = vsel %vm422, %v417, %v419
          %v424 = vsel %vm422, %v419, %v421
          %v427 = vsel %vm291, %v423, 0.0
          %v428 = vsel %vm292, %v424, 0.0
          %v429 = vstv %s415
          %v430 = vmul.f32 %v429, %v427
          %v431 = vmul.f32 %v429, %v428
          %v432 = vadd.f32 %v413, %v430
          %v433 = vadd.f32 %v414, %v431
          %s434 = sld [smem:[#allocation9 + $0x6]]
          %435 = vrot.lane.b32.xlu0 %v321, 122
          %v436 = vpop.permute.xlu0 %435
          %437 = vrot.lane.b32.xlu0 %v325, 122
          %v438 = vpop.permute.xlu0 %437
          %439 = vrot.lane.b32.xlu0 %v329, 122
          %v440 = vpop.permute.xlu0 %439
          %vm441 = vcmask 998400
          %v442 = vsel %vm441, %v436, %v438
          %v443 = vsel %vm441, %v438, %v440
          %v446 = vsel %vm293, %v442, 0.0
          %v447 = vsel %vm294, %v443, 0.0
          %v448 = vstv %s434
          %v449 = vmul.f32 %v448, %v446
          %v450 = vmul.f32 %v448, %v447
          %v451 = vadd.f32 %v432, %v449
          %v452 = vadd.f32 %v433, %v450
          %s453 = sld [smem:[#allocation9 + $0x7]]
          %454 = vrot.lane.b32.xlu0 %v321, 112
          %v455 = vpop.permute.xlu0 %454
          %456 = vrot.lane.b32.xlu0 %v325, 112
          %v457 = vpop.permute.xlu0 %456
          %458 = vrot.lane.b32.xlu0 %v329, 112
          %v459 = vpop.permute.xlu0 %458
          %vm460 = vcmask 916480
          %v461 = vsel %vm460, %v455, %v457
          %v462 = vsel %vm460, %v457, %v459
          %v465 = vsel %vm283, %v461, 0.0
          %v466 = vsel %vm284, %v462, 0.0
          %v467 = vstv %s453
          %v468 = vmul.f32 %v467, %v465
          %v469 = vmul.f32 %v467, %v466
          %v470 = vadd.f32 %v468, 0.0
          %v471 = vadd.f32 %v469, 0.0
          %s472 = sld [smem:[#allocation9 + $0x8]]
          %473 = vrot.lane.b32.xlu0 %v321, 111
          %v474 = vpop.permute.xlu0 %473
          %475 = vrot.lane.b32.xlu0 %v325, 111
          %v476 = vpop.permute.xlu0 %475
          %477 = vrot.lane.b32.xlu0 %v329, 111
          %v478 = vpop.permute.xlu0 %477
          %vm479 = vcmask 908288
          %v480 = vsel %vm479, %v474, %v476
          %v481 = vsel %vm479, %v476, %v478
          %v484 = vsel %vm285, %v480, 0.0
          %v485 = vsel %vm286, %v481, 0.0
          %v486 = vstv %s472
          %v487 = vmul.f32 %v486, %v484
          %v488 = vmul.f32 %v486, %v485
          %v489 = vadd.f32 %v470, %v487
          %v490 = vadd.f32 %v471, %v488
          %s491 = sld [smem:[#allocation9 + $0x9]]
          %492 = vrot.lane.b32.xlu0 %v321, 110
          %v493 = vpop.permute.xlu0 %492
          %494 = vrot.lane.b32.xlu0 %v325, 110
          %v495 = vpop.permute.xlu0 %494
          %496 = vrot.lane.b32.xlu0 %v329, 110
          %v497 = vpop.permute.xlu0 %496
          %vm498 = vcmask 900096
          %v499 = vsel %vm498, %v493, %v495
          %v500 = vsel %vm498, %v495, %v497
          %v503 = vsel %vm287, %v499, 0.0
          %v504 = vsel %vm288, %v500, 0.0
          %v505 = vstv %s491
          %v506 = vmul.f32 %v505, %v503
          %v507 = vmul.f32 %v505, %v504
          %v508 = vadd.f32 %v489, %v506
          %v509 = vadd.f32 %v490, %v507
          %s510 = sld [smem:[#allocation9 + $0xa]]
          %v511 = vstv %s510
          %v512 = vmul.f32 %v511, %v316
          %v514 = vlaneseq
          %v515 = vshrl.u32 %v514, 7
          %v516 = vsub.s32 0, %v515
          %v517 = vrot.slane %v512, %v516
          %v518 = vlaneseq
          %v519 = vshrl.u32 %v518, 7
          %v520 = vsub.s32 1, %v519
          %v521 = vrot.slane %v512, %v520
          %v522 = vlaneseq
          %v523 = vshrl.u32 %v522, 7
          %v524 = vsub.s32 2, %v523
          %v525 = vrot.slane %v512, %v524
          %526 = vrot.lane.b32.xlu0 %v517, 109
          %v527 = vpop.permute.xlu0 %526
          %528 = vrot.lane.b32.xlu0 %v521, 109
          %v529 = vpop.permute.xlu0 %528
          %530 = vrot.lane.b32.xlu0 %v525, 109
          %v531 = vpop.permute.xlu0 %530
          %vm532 = vcmask 891904
          %v533 = vsel %vm532, %v527, %v529
          %v534 = vsel %vm532, %v529, %v531
          %v537 = vadd.f32 %v508, %v533
          %v538 = vadd.f32 %v509, %v534
          %s539 = sld [smem:[#allocation9 + $0xb]]
          %540 = vrot.lane.b32.xlu0 %v321, 108
          %v541 = vpop.permute.xlu0 %540
          %542 = vrot.lane.b32.xlu0 %v325, 108
          %v543 = vpop.permute.xlu0 %542
          %544 = vrot.lane.b32.xlu0 %v329, 108
          %v545 = vpop.permute.xlu0 %544
          %vm546 = vcmask 883712
          %v547 = vsel %vm546, %v541, %v543
          %v548 = vsel %vm546, %v543, %v545
          %v551 = vsel %vm289, %v547, 0.0
          %v552 = vsel %vm290, %v548, 0.0
          %v553 = vstv %s539
          %v554 = vmul.f32 %v553, %v551
          %v555 = vmul.f32 %v553, %v552
          %v556 = vadd.f32 %v537, %v554
          %v557 = vadd.f32 %v538, %v555
          %s558 = sld [smem:[#allocation9 + $0xc]]
          %559 = vrot.lane.b32.xlu0 %v321, 107
          %v560 = vpop.permute.xlu0 %559
          %561 = vrot.lane.b32.xlu0 %v325, 107
          %v562 = vpop.permute.xlu0 %561
          %563 = vrot.lane.b32.xlu0 %v329, 107
          %v564 = vpop.permute.xlu0 %563
          %vm565 = vcmask 875520
          %v566 = vsel %vm565, %v560, %v562
          %v567 = vsel %vm565, %v562, %v564
          %v570 = vsel %vm291, %v566, 0.0
          %v571 = vsel %vm292, %v567, 0.0
          %v572 = vstv %s558
          %v573 = vmul.f32 %v572, %v570
          %v574 = vmul.f32 %v572, %v571
          %v575 = vadd.f32 %v556, %v573
          %v576 = vadd.f32 %v557, %v574
          %s577 = sld [smem:[#allocation9 + $0xd]]
          %578 = vrot.lane.b32.xlu0 %v321, 106
          %v579 = vpop.permute.xlu0 %578
          %580 = vrot.lane.b32.xlu0 %v325, 106
          %v581 = vpop.permute.xlu0 %580
          %582 = vrot.lane.b32.xlu0 %v329, 106
          %v583 = vpop.permute.xlu0 %582
          %vm584 = vcmask 867328
          %v585 = vsel %vm584, %v579, %v581
          %v586 = vsel %vm584, %v581, %v583
          %v589 = vsel %vm293, %v585, 0.0
          %v590 = vsel %vm294, %v586, 0.0
          %v591 = vstv %s577
          %v592 = vmul.f32 %v591, %v589
          %v593 = vmul.f32 %v591, %v590
          %v594 = vadd.f32 %v575, %v592
          %v595 = vadd.f32 %v576, %v593
          %s596 = sld [smem:[#allocation9 + $0xe]]
          %597 = vrot.lane.b32.xlu0 %v321, 96
          %v598 = vpop.permute.xlu0 %597
          %599 = vrot.lane.b32.xlu0 %v325, 96
          %v600 = vpop.permute.xlu0 %599
          %601 = vrot.lane.b32.xlu0 %v329, 96
          %v602 = vpop.permute.xlu0 %601
          %vm603 = vcmask 785408
          %v604 = vsel %vm603, %v598, %v600
          %v605 = vsel %vm603, %v600, %v602
          %v608 = vsel %vm283, %v604, 0.0
          %v609 = vsel %vm284, %v605, 0.0
          %v610 = vstv %s596
          %v611 = vmul.f32 %v610, %v608
          %v612 = vmul.f32 %v610, %v609
          %v613 = vadd.f32 %v451, %v611
          %v614 = vadd.f32 %v452, %v612
          %s615 = sld [smem:[#allocation9 + $0xf]]
          %616 = vrot.lane.b32.xlu0 %v321, 95
          %v617 = vpop.permute.xlu0 %616
          %618 = vrot.lane.b32.xlu0 %v325, 95
          %v619 = vpop.permute.xlu0 %618
          %620 = vrot.lane.b32.xlu0 %v329, 95
          %v621 = vpop.permute.xlu0 %620
          %vm622 = vcmask 777216
          %v623 = vsel %vm622, %v617, %v619
          %v624 = vsel %vm622, %v619, %v621
          %v627 = vsel %vm285, %v623, 0.0
          %v628 = vsel %vm286, %v624, 0.0
          %v629 = vstv %s615
          %v630 = vmul.f32 %v629, %v627
          %v631 = vmul.f32 %v629, %v628
          %v632 = vadd.f32 %v613, %v630
          %v633 = vadd.f32 %v614, %v631
          %s634 = sld [smem:[#allocation9 + $0x10]]
          %635 = vrot.lane.b32.xlu0 %v321, 94
          %v636 = vpop.permute.xlu0 %635
          %637 = vrot.lane.b32.xlu0 %v325, 94
          %v638 = vpop.permute.xlu0 %637
          %639 = vrot.lane.b32.xlu0 %v329, 94
          %v640 = vpop.permute.xlu0 %639
          %vm641 = vcmask 769024
          %v642 = vsel %vm641, %v636, %v638
          %v643 = vsel %vm641, %v638, %v640
          %v646 = vsel %vm287, %v642, 0.0
          %v647 = vsel %vm288, %v643, 0.0
          %v648 = vstv %s634
          %v649 = vmul.f32 %v648, %v646
          %v650 = vmul.f32 %v648, %v647
          %v651 = vadd.f32 %v632, %v649
          %v652 = vadd.f32 %v633, %v650
          %s653 = sld [smem:[#allocation9 + $0x11]]
          %v654 = vstv %s653
          %v655 = vmul.f32 %v654, %v316
          %v657 = vlaneseq
          %v658 = vshrl.u32 %v657, 7
          %v659 = vsub.s32 0, %v658
          %v660 = vrot.slane %v655, %v659
          %v661 = vlaneseq
          %v662 = vshrl.u32 %v661, 7
          %v663 = vsub.s32 1, %v662
          %v664 = vrot.slane %v655, %v663
          %v665 = vlaneseq
          %v666 = vshrl.u32 %v665, 7
          %v667 = vsub.s32 2, %v666
          %v668 = vrot.slane %v655, %v667
          %669 = vrot.lane.b32.xlu0 %v660, 93
          %v670 = vpop.permute.xlu0 %669
          %671 = vrot.lane.b32.xlu0 %v664, 93
          %v672 = vpop.permute.xlu0 %671
          %673 = vrot.lane.b32.xlu0 %v668, 93
          %v674 = vpop.permute.xlu0 %673
          %vm675 = vcmask 760832
          %v676 = vsel %vm675, %v670, %v672
          %v677 = vsel %vm675, %v672, %v674
          %v680 = vadd.f32 %v651, %v676
          %v681 = vadd.f32 %v652, %v677
          %s682 = sld [smem:[#allocation9 + $0x12]]
          %683 = vrot.lane.b32.xlu0 %v321, 92
          %v684 = vpop.permute.xlu0 %683
          %685 = vrot.lane.b32.xlu0 %v325, 92
          %v686 = vpop.permute.xlu0 %685
          %687 = vrot.lane.b32.xlu0 %v329, 92
          %v688 = vpop.permute.xlu0 %687
          %vm689 = vcmask 752640
          %v690 = vsel %vm689, %v684, %v686
          %v691 = vsel %vm689, %v686, %v688
          %v694 = vsel %vm289, %v690, 0.0
          %v695 = vsel %vm290, %v691, 0.0
          %v696 = vstv %s682
          %v697 = vmul.f32 %v696, %v694
          %v698 = vmul.f32 %v696, %v695
          %v699 = vadd.f32 %v680, %v697
          %v700 = vadd.f32 %v681, %v698
          %s701 = sld [smem:[#allocation9 + $0x13]]
          %702 = vrot.lane.b32.xlu0 %v321, 91
          %v703 = vpop.permute.xlu0 %702
          %704 = vrot.lane.b32.xlu0 %v325, 91
          %v705 = vpop.permute.xlu0 %704
          %706 = vrot.lane.b32.xlu0 %v329, 91
          %v707 = vpop.permute.xlu0 %706
          %vm708 = vcmask 744448
          %v709 = vsel %vm708, %v703, %v705
          %v710 = vsel %vm708, %v705, %v707
          %v713 = vsel %vm291, %v709, 0.0
          %v714 = vsel %vm292, %v710, 0.0
          %v715 = vstv %s701
          %v716 = vmul.f32 %v715, %v713
          %v717 = vmul.f32 %v715, %v714
          %v718 = vadd.f32 %v699, %v716
          %v719 = vadd.f32 %v700, %v717
          %s720 = sld [smem:[#allocation9 + $0x14]]
          %721 = vrot.lane.b32.xlu0 %v321, 90
          %v722 = vpop.permute.xlu0 %721
          %723 = vrot.lane.b32.xlu0 %v325, 90
          %v724 = vpop.permute.xlu0 %723
          %725 = vrot.lane.b32.xlu0 %v329, 90
          %v726 = vpop.permute.xlu0 %725
          %vm727 = vcmask 736256
          %v728 = vsel %vm727, %v722, %v724
          %v729 = vsel %vm727, %v724, %v726
          %v732 = vsel %vm293, %v728, 0.0
          %v733 = vsel %vm294, %v729, 0.0
          %v734 = vstv %s720
          %v735 = vmul.f32 %v734, %v732
          %v736 = vmul.f32 %v734, %v733
          %v737 = vadd.f32 %v718, %v735
          %v738 = vadd.f32 %v719, %v736
          %s739 = sld [smem:[#allocation9 + $0x15]]
          %740 = vrot.lane.b32.xlu0 %v321, 80
          %v741 = vpop.permute.xlu0 %740
          %742 = vrot.lane.b32.xlu0 %v325, 80
          %v743 = vpop.permute.xlu0 %742
          %744 = vrot.lane.b32.xlu0 %v329, 80
          %v745 = vpop.permute.xlu0 %744
          %vm746 = vcmask 654336
          %v747 = vsel %vm746, %v741, %v743
          %v748 = vsel %vm746, %v743, %v745
          %v751 = vsel %vm283, %v747, 0.0
          %v752 = vsel %vm284, %v748, 0.0
          %v753 = vstv %s739
          %v754 = vmul.f32 %v753, %v751
          %v755 = vmul.f32 %v753, %v752
          %v756 = vadd.f32 %v594, %v754
          %v757 = vadd.f32 %v595, %v755
          %s758 = sld [smem:[#allocation9 + $0x16]]
          %759 = vrot.lane.b32.xlu0 %v321, 79
          %v760 = vpop.permute.xlu0 %759
          %761 = vrot.lane.b32.xlu0 %v325, 79
          %v762 = vpop.permute.xlu0 %761
          %763 = vrot.lane.b32.xlu0 %v329, 79
          %v764 = vpop.permute.xlu0 %763
          %vm765 = vcmask 646144
          %v766 = vsel %vm765, %v760, %v762
          %v767 = vsel %vm765, %v762, %v764
          %v770 = vsel %vm285, %v766, 0.0
          %v771 = vsel %vm286, %v767, 0.0
          %v772 = vstv %s758
          %v773 = vmul.f32 %v772, %v770
          %v774 = vmul.f32 %v772, %v771
          %v775 = vadd.f32 %v756, %v773
          %v776 = vadd.f32 %v757, %v774
          %s777 = sld [smem:[#allocation9 + $0x17]]
          %778 = vrot.lane.b32.xlu0 %v321, 78
          %v779 = vpop.permute.xlu0 %778
          %780 = vrot.lane.b32.xlu0 %v325, 78
          %v781 = vpop.permute.xlu0 %780
          %782 = vrot.lane.b32.xlu0 %v329, 78
          %v783 = vpop.permute.xlu0 %782
          %vm784 = vcmask 637952
          %v785 = vsel %vm784, %v779, %v781
          %v786 = vsel %vm784, %v781, %v783
          %v789 = vsel %vm287, %v785, 0.0
          %v790 = vsel %vm288, %v786, 0.0
          %v791 = vstv %s777
          %v792 = vmul.f32 %v791, %v789
          %v793 = vmul.f32 %v791, %v790
          %v794 = vadd.f32 %v775, %v792
          %v795 = vadd.f32 %v776, %v793
          %s796 = sld [smem:[#allocation9 + $0x18]]
          %v797 = vstv %s796
          %v798 = vmul.f32 %v797, %v316
          %v800 = vlaneseq
          %v801 = vshrl.u32 %v800, 7
          %v802 = vsub.s32 0, %v801
          %v803 = vrot.slane %v798, %v802
          %v804 = vlaneseq
          %v805 = vshrl.u32 %v804, 7
          %v806 = vsub.s32 1, %v805
          %v807 = vrot.slane %v798, %v806
          %v808 = vlaneseq
          %v809 = vshrl.u32 %v808, 7
          %v810 = vsub.s32 2, %v809
          %v811 = vrot.slane %v798, %v810
          %812 = vrot.lane.b32.xlu0 %v803, 77
          %v813 = vpop.permute.xlu0 %812
          %814 = vrot.lane.b32.xlu0 %v807, 77
          %v815 = vpop.permute.xlu0 %814
          %816 = vrot.lane.b32.xlu0 %v811, 77
          %v817 = vpop.permute.xlu0 %816
          %vm818 = vcmask 629760
          %v819 = vsel %vm818, %v813, %v815
          %v820 = vsel %vm818, %v815, %v817
          %v823 = vadd.f32 %v794, %v819
          %v824 = vadd.f32 %v795, %v820
          %s825 = sld [smem:[#allocation9 + $0x19]]
          %826 = vrot.lane.b32.xlu0 %v321, 76
          %v827 = vpop.permute.xlu0 %826
          %828 = vrot.lane.b32.xlu0 %v325, 76
          %v829 = vpop.permute.xlu0 %828
          %830 = vrot.lane.b32.xlu0 %v329, 76
          %v831 = vpop.permute.xlu0 %830
          %vm832 = vcmask 621568
          %v833 = vsel %vm832, %v827, %v829
          %v834 = vsel %vm832, %v829, %v831
          %v837 = vsel %vm289, %v833, 0.0
          %v838 = vsel %vm290, %v834, 0.0
          %v839 = vstv %s825
          %v840 = vmul.f32 %v839, %v837
          %v841 = vmul.f32 %v839, %v838
          %v842 = vadd.f32 %v823, %v840
          %v843 = vadd.f32 %v824, %v841
          %s844 = sld [smem:[#allocation9 + $0x1a]]
          %845 = vrot.lane.b32.xlu0 %v321, 75
          %v846 = vpop.permute.xlu0 %845
          %847 = vrot.lane.b32.xlu0 %v325, 75
          %v848 = vpop.permute.xlu0 %847
          %849 = vrot.lane.b32.xlu0 %v329, 75
          %v850 = vpop.permute.xlu0 %849
          %vm851 = vcmask 613376
          %v852 = vsel %vm851, %v846, %v848
          %v853 = vsel %vm851, %v848, %v850
          %v856 = vsel %vm291, %v852, 0.0
          %v857 = vsel %vm292, %v853, 0.0
          %v858 = vstv %s844
          %v859 = vmul.f32 %v858, %v856
          %v860 = vmul.f32 %v858, %v857
          %v861 = vadd.f32 %v842, %v859
          %v862 = vadd.f32 %v843, %v860
          %s863 = sld [smem:[#allocation9 + $0x1b]]
          %864 = vrot.lane.b32.xlu0 %v321, 74
          %v865 = vpop.permute.xlu0 %864
          %866 = vrot.lane.b32.xlu0 %v325, 74
          %v867 = vpop.permute.xlu0 %866
          %868 = vrot.lane.b32.xlu0 %v329, 74
          %v869 = vpop.permute.xlu0 %868
          %vm870 = vcmask 605184
          %v871 = vsel %vm870, %v865, %v867
          %v872 = vsel %vm870, %v867, %v869
          %v875 = vsel %vm293, %v871, 0.0
          %v876 = vsel %vm294, %v872, 0.0
          %v877 = vstv %s863
          %v878 = vmul.f32 %v877, %v875
          %v879 = vmul.f32 %v877, %v876
          %v880 = vadd.f32 %v861, %v878
          %v881 = vadd.f32 %v862, %v879
          %s882 = sld [smem:[#allocation9 + $0x1c]]
          %883 = vrot.lane.b32.xlu0 %v321, 64
          %v884 = vpop.permute.xlu0 %883
          %885 = vrot.lane.b32.xlu0 %v325, 64
          %v886 = vpop.permute.xlu0 %885
          %887 = vrot.lane.b32.xlu0 %v329, 64
          %v888 = vpop.permute.xlu0 %887
          %vm889 = vcmask 523264
          %v890 = vsel %vm889, %v884, %v886
          %v891 = vsel %vm889, %v886, %v888
          %v894 = vsel %vm283, %v890, 0.0
          %v895 = vsel %vm284, %v891, 0.0
          %v896 = vstv %s882
          %v897 = vmul.f32 %v896, %v894
          %v898 = vmul.f32 %v896, %v895
          %v899 = vadd.f32 %v737, %v897
          %v900 = vadd.f32 %v738, %v898
          %s901 = sld [smem:[#allocation9 + $0x1d]]
          %902 = vrot.lane.b32.xlu0 %v321, 63
          %v903 = vpop.permute.xlu0 %902
          %904 = vrot.lane.b32.xlu0 %v325, 63
          %v905 = vpop.permute.xlu0 %904
          %906 = vrot.lane.b32.xlu0 %v329, 63
          %v907 = vpop.permute.xlu0 %906
          %vm908 = vcmask 515072
          %v909 = vsel %vm908, %v903, %v905
          %v910 = vsel %vm908, %v905, %v907
          %v913 = vsel %vm285, %v909, 0.0
          %v914 = vsel %vm286, %v910, 0.0
          %v915 = vstv %s901
          %v916 = vmul.f32 %v915, %v913
          %v917 = vmul.f32 %v915, %v914
          %v918 = vadd.f32 %v899, %v916
          %v919 = vadd.f32 %v900, %v917
          %s920 = sld [smem:[#allocation9 + $0x1e]]
          %921 = vrot.lane.b32.xlu0 %v321, 62
          %v922 = vpop.permute.xlu0 %921
          %923 = vrot.lane.b32.xlu0 %v325, 62
          %v924 = vpop.permute.xlu0 %923
          %925 = vrot.lane.b32.xlu0 %v329, 62
          %v926 = vpop.permute.xlu0 %925
          %vm927 = vcmask 506880
          %v928 = vsel %vm927, %v922, %v924
          %v929 = vsel %vm927, %v924, %v926
          %v932 = vsel %vm287, %v928, 0.0
          %v933 = vsel %vm288, %v929, 0.0
          %v934 = vstv %s920
          %v935 = vmul.f32 %v934, %v932
          %v936 = vmul.f32 %v934, %v933
          %v937 = vadd.f32 %v918, %v935
          %v938 = vadd.f32 %v919, %v936
          %s939 = sld [smem:[#allocation9 + $0x1f]]
          %v940 = vstv %s939
          %v941 = vmul.f32 %v940, %v316
          %v943 = vlaneseq
          %v944 = vshrl.u32 %v943, 7
          %v945 = vsub.s32 0, %v944
          %v946 = vrot.slane %v941, %v945
          %v947 = vlaneseq
          %v948 = vshrl.u32 %v947, 7
          %v949 = vsub.s32 1, %v948
          %v950 = vrot.slane %v941, %v949
          %v951 = vlaneseq
          %v952 = vshrl.u32 %v951, 7
          %v953 = vsub.s32 2, %v952
          %v954 = vrot.slane %v941, %v953
          %955 = vrot.lane.b32.xlu0 %v946, 61
          %v956 = vpop.permute.xlu0 %955
          %957 = vrot.lane.b32.xlu0 %v950, 61
          %v958 = vpop.permute.xlu0 %957
          %959 = vrot.lane.b32.xlu0 %v954, 61
          %v960 = vpop.permute.xlu0 %959
          %vm961 = vcmask 498688
          %v962 = vsel %vm961, %v956, %v958
          %v963 = vsel %vm961, %v958, %v960
          %v966 = vadd.f32 %v937, %v962
          %v967 = vadd.f32 %v938, %v963
          %s968 = sld [smem:[#allocation9 + $0x20]]
          %969 = vrot.lane.b32.xlu0 %v321, 60
          %v970 = vpop.permute.xlu0 %969
          %971 = vrot.lane.b32.xlu0 %v325, 60
          %v972 = vpop.permute.xlu0 %971
          %973 = vrot.lane.b32.xlu0 %v329, 60
          %v974 = vpop.permute.xlu0 %973
          %vm975 = vcmask 490496
          %v976 = vsel %vm975, %v970, %v972
          %v977 = vsel %vm975, %v972, %v974
          %v980 = vsel %vm289, %v976, 0.0
          %v981 = vsel %vm290, %v977, 0.0
          %v982 = vstv %s968
          %v983 = vmul.f32 %v982, %v980
          %v984 = vmul.f32 %v982, %v981
          %v985 = vadd.f32 %v966, %v983
          %v986 = vadd.f32 %v967, %v984
          %s987 = sld [smem:[#allocation9 + $0x21]]
          %988 = vrot.lane.b32.xlu0 %v321, 59
          %v989 = vpop.permute.xlu0 %988
          %990 = vrot.lane.b32.xlu0 %v325, 59
          %v991 = vpop.permute.xlu0 %990
          %992 = vrot.lane.b32.xlu0 %v329, 59
          %v993 = vpop.permute.xlu0 %992
          %vm994 = vcmask 482304
          %v995 = vsel %vm994, %v989, %v991
          %v996 = vsel %vm994, %v991, %v993
          %v999 = vsel %vm291, %v995, 0.0
          %v1000 = vsel %vm292, %v996, 0.0
          %v1001 = vstv %s987
          %v1002 = vmul.f32 %v1001, %v999
          %v1003 = vmul.f32 %v1001, %v1000
          %v1004 = vadd.f32 %v985, %v1002
          %v1005 = vadd.f32 %v986, %v1003
          %s1006 = sld [smem:[#allocation9 + $0x22]]
          %1007 = vrot.lane.b32.xlu0 %v321, 58
          %v1008 = vpop.permute.xlu0 %1007
          %1009 = vrot.lane.b32.xlu0 %v325, 58
          %v1010 = vpop.permute.xlu0 %1009
          %1011 = vrot.lane.b32.xlu0 %v329, 58
          %v1012 = vpop.permute.xlu0 %1011
          %vm1013 = vcmask 474112
          %v1014 = vsel %vm1013, %v1008, %v1010
          %v1015 = vsel %vm1013, %v1010, %v1012
          %v1018 = vsel %vm293, %v1014, 0.0
          %v1019 = vsel %vm294, %v1015, 0.0
          %v1020 = vstv %s1006
          %v1021 = vmul.f32 %v1020, %v1018
          %v1022 = vmul.f32 %v1020, %v1019
          %v1023 = vadd.f32 %v1004, %v1021
          %v1024 = vadd.f32 %v1005, %v1022
          %s1025 = sld [smem:[#allocation9 + $0x23]]
          %1026 = vrot.lane.b32.xlu0 %v321, 48
          %v1027 = vpop.permute.xlu0 %1026
          %1028 = vrot.lane.b32.xlu0 %v325, 48
          %v1029 = vpop.permute.xlu0 %1028
          %1030 = vrot.lane.b32.xlu0 %v329, 48
          %v1031 = vpop.permute.xlu0 %1030
          %vm1032 = vcmask 392192
          %v1033 = vsel %vm1032, %v1027, %v1029
          %v1034 = vsel %vm1032, %v1029, %v1031
          %v1037 = vsel %vm283, %v1033, 0.0
          %v1038 = vsel %vm284, %v1034, 0.0
          %v1039 = vstv %s1025
          %v1040 = vmul.f32 %v1039, %v1037
          %v1041 = vmul.f32 %v1039, %v1038
          %v1042 = vadd.f32 %v880, %v1040
          %v1043 = vadd.f32 %v881, %v1041
          %s1044 = sld [smem:[#allocation9 + $0x24]]
          %1045 = vrot.lane.b32.xlu0 %v321, 47
          %v1046 = vpop.permute.xlu0 %1045
          %1047 = vrot.lane.b32.xlu0 %v325, 47
          %v1048 = vpop.permute.xlu0 %1047
          %1049 = vrot.lane.b32.xlu0 %v329, 47
          %v1050 = vpop.permute.xlu0 %1049
          %vm1051 = vcmask 384000
          %v1052 = vsel %vm1051, %v1046, %v1048
          %v1053 = vsel %vm1051, %v1048, %v1050
          %v1056 = vsel %vm285, %v1052, 0.0
          %v1057 = vsel %vm286, %v1053, 0.0
          %v1058 = vstv %s1044
          %v1059 = vmul.f32 %v1058, %v1056
          %v1060 = vmul.f32 %v1058, %v1057
          %v1061 = vadd.f32 %v1042, %v1059
          %v1062 = vadd.f32 %v1043, %v1060
          %s1063 = sld [smem:[#allocation9 + $0x25]]
          %1064 = vrot.lane.b32.xlu0 %v321, 46
          %v1065 = vpop.permute.xlu0 %1064
          %1066 = vrot.lane.b32.xlu0 %v325, 46
          %v1067 = vpop.permute.xlu0 %1066
          %1068 = vrot.lane.b32.xlu0 %v329, 46
          %v1069 = vpop.permute.xlu0 %1068
          %vm1070 = vcmask 375808
          %v1071 = vsel %vm1070, %v1065, %v1067
          %v1072 = vsel %vm1070, %v1067, %v1069
          %v1075 = vsel %vm287, %v1071, 0.0
          %v1076 = vsel %vm288, %v1072, 0.0
          %v1077 = vstv %s1063
          %v1078 = vmul.f32 %v1077, %v1075
          %v1079 = vmul.f32 %v1077, %v1076
          %v1080 = vadd.f32 %v1061, %v1078
          %v1081 = vadd.f32 %v1062, %v1079
          %s1082 = sld [smem:[#allocation9 + $0x26]]
          %v1083 = vstv %s1082
          %v1084 = vmul.f32 %v1083, %v316
          %v1086 = vlaneseq
          %v1087 = vshrl.u32 %v1086, 7
          %v1088 = vsub.s32 0, %v1087
          %v1089 = vrot.slane %v1084, %v1088
          %v1090 = vlaneseq
          %v1091 = vshrl.u32 %v1090, 7
          %v1092 = vsub.s32 1, %v1091
          %v1093 = vrot.slane %v1084, %v1092
          %v1094 = vlaneseq
          %v1095 = vshrl.u32 %v1094, 7
          %v1096 = vsub.s32 2, %v1095
          %v1097 = vrot.slane %v1084, %v1096
          %1098 = vrot.lane.b32.xlu0 %v1089, 45
          %v1099 = vpop.permute.xlu0 %1098
          %1100 = vrot.lane.b32.xlu0 %v1093, 45
          %v1101 = vpop.permute.xlu0 %1100
          %1102 = vrot.lane.b32.xlu0 %v1097, 45
          %v1103 = vpop.permute.xlu0 %1102
          %vm1104 = vcmask 367616
          %v1105 = vsel %vm1104, %v1099, %v1101
          %v1106 = vsel %vm1104, %v1101, %v1103
          %v1109 = vadd.f32 %v1080, %v1105
          %v1110 = vadd.f32 %v1081, %v1106
          %s1111 = sld [smem:[#allocation9 + $0x27]]
          %1112 = vrot.lane.b32.xlu0 %v321, 44
          %v1113 = vpop.permute.xlu0 %1112
          %1114 = vrot.lane.b32.xlu0 %v325, 44
          %v1115 = vpop.permute.xlu0 %1114
          %1116 = vrot.lane.b32.xlu0 %v329, 44
          %v1117 = vpop.permute.xlu0 %1116
          %vm1118 = vcmask 359424
          %v1119 = vsel %vm1118, %v1113, %v1115
          %v1120 = vsel %vm1118, %v1115, %v1117
          %v1123 = vsel %vm289, %v1119, 0.0
          %v1124 = vsel %vm290, %v1120, 0.0
          %v1125 = vstv %s1111
          %v1126 = vmul.f32 %v1125, %v1123
          %v1127 = vmul.f32 %v1125, %v1124
          %v1128 = vadd.f32 %v1109, %v1126
          %v1129 = vadd.f32 %v1110, %v1127
          %s1130 = sld [smem:[#allocation9 + $0x28]]
          %1131 = vrot.lane.b32.xlu0 %v321, 43
          %v1132 = vpop.permute.xlu0 %1131
          %1133 = vrot.lane.b32.xlu0 %v325, 43
          %v1134 = vpop.permute.xlu0 %1133
          %1135 = vrot.lane.b32.xlu0 %v329, 43
          %v1136 = vpop.permute.xlu0 %1135
          %vm1137 = vcmask 351232
          %v1138 = vsel %vm1137, %v1132, %v1134
          %v1139 = vsel %vm1137, %v1134, %v1136
          %v1142 = vsel %vm291, %v1138, 0.0
          %v1143 = vsel %vm292, %v1139, 0.0
          %v1144 = vstv %s1130
          %v1145 = vmul.f32 %v1144, %v1142
          %v1146 = vmul.f32 %v1144, %v1143
          %v1147 = vadd.f32 %v1128, %v1145
          %v1148 = vadd.f32 %v1129, %v1146
          %s1149 = sld [smem:[#allocation9 + $0x29]]
          %1150 = vrot.lane.b32.xlu0 %v321, 42
          %v1151 = vpop.permute.xlu0 %1150
          %1152 = vrot.lane.b32.xlu0 %v325, 42
          %v1153 = vpop.permute.xlu0 %1152
          %1154 = vrot.lane.b32.xlu0 %v329, 42
          %v1155 = vpop.permute.xlu0 %1154
          %vm1156 = vcmask 343040
          %v1157 = vsel %vm1156, %v1151, %v1153
          %v1158 = vsel %vm1156, %v1153, %v1155
          %v1161 = vsel %vm293, %v1157, 0.0
          %v1162 = vsel %vm294, %v1158, 0.0
          %v1163 = vstv %s1149
          %v1164 = vmul.f32 %v1163, %v1161
          %v1165 = vmul.f32 %v1163, %v1162
          %v1166 = vadd.f32 %v1147, %v1164
          %v1167 = vadd.f32 %v1148, %v1165
          %s1168 = sld [smem:[#allocation9 + $0x2a]]
          %1169 = vrot.lane.b32.xlu0 %v321, 32
          %v1170 = vpop.permute.xlu0 %1169
          %1171 = vrot.lane.b32.xlu0 %v325, 32
          %v1172 = vpop.permute.xlu0 %1171
          %1173 = vrot.lane.b32.xlu0 %v329, 32
          %v1174 = vpop.permute.xlu0 %1173
          %vm1175 = vcmask 261120
          %v1176 = vsel %vm1175, %v1170, %v1172
          %v1177 = vsel %vm1175, %v1172, %v1174
          %v1180 = vsel %vm283, %v1176, 0.0
          %v1181 = vsel %vm284, %v1177, 0.0
          %v1182 = vstv %s1168
          %v1183 = vmul.f32 %v1182, %v1180
          %v1184 = vmul.f32 %v1182, %v1181
          %v1185 = vadd.f32 %v1023, %v1183
          %v1186 = vadd.f32 %v1024, %v1184
          %s1187 = sld [smem:[#allocation9 + $0x2b]]
          %1188 = vrot.lane.b32.xlu0 %v321, 31
          %v1189 = vpop.permute.xlu0 %1188
          %1190 = vrot.lane.b32.xlu0 %v325, 31
          %v1191 = vpop.permute.xlu0 %1190
          %1192 = vrot.lane.b32.xlu0 %v329, 31
          %v1193 = vpop.permute.xlu0 %1192
          %vm1194 = vcmask 252928
          %v1195 = vsel %vm1194, %v1189, %v1191
          %v1196 = vsel %vm1194, %v1191, %v1193
          %v1199 = vsel %vm285, %v1195, 0.0
          %v1200 = vsel %vm286, %v1196, 0.0
          %v1201 = vstv %s1187
          %v1202 = vmul.f32 %v1201, %v1199
          %v1203 = vmul.f32 %v1201, %v1200
          %v1204 = vadd.f32 %v1185, %v1202
          %v1205 = vadd.f32 %v1186, %v1203
          %s1206 = sld [smem:[#allocation9 + $0x2c]]
          %1207 = vrot.lane.b32.xlu0 %v321, 30
          %v1208 = vpop.permute.xlu0 %1207
          %1209 = vrot.lane.b32.xlu0 %v325, 30
          %v1210 = vpop.permute.xlu0 %1209
          %1211 = vrot.lane.b32.xlu0 %v329, 30
          %v1212 = vpop.permute.xlu0 %1211
          %vm1213 = vcmask 244736
          %v1214 = vsel %vm1213, %v1208, %v1210
          %v1215 = vsel %vm1213, %v1210, %v1212
          %v1218 = vsel %vm287, %v1214, 0.0
          %v1219 = vsel %vm288, %v1215, 0.0
          %v1220 = vstv %s1206
          %v1221 = vmul.f32 %v1220, %v1218
          %v1222 = vmul.f32 %v1220, %v1219
          %v1223 = vadd.f32 %v1204, %v1221
          %v1224 = vadd.f32 %v1205, %v1222
          %s1225 = sld [smem:[#allocation9 + $0x2d]]
          %v1226 = vstv %s1225
          %v1227 = vmul.f32 %v1226, %v316
          %v1229 = vlaneseq
          %v1230 = vshrl.u32 %v1229, 7
          %v1231 = vsub.s32 0, %v1230
          %v1232 = vrot.slane %v1227, %v1231
          %v1233 = vlaneseq
          %v1234 = vshrl.u32 %v1233, 7
          %v1235 = vsub.s32 1, %v1234
          %v1236 = vrot.slane %v1227, %v1235
          %v1237 = vlaneseq
          %v1238 = vshrl.u32 %v1237, 7
          %v1239 = vsub.s32 2, %v1238
          %v1240 = vrot.slane %v1227, %v1239
          %1241 = vrot.lane.b32.xlu0 %v1232, 29
          %v1242 = vpop.permute.xlu0 %1241
          %1243 = vrot.lane.b32.xlu0 %v1236, 29
          %v1244 = vpop.permute.xlu0 %1243
          %1245 = vrot.lane.b32.xlu0 %v1240, 29
          %v1246 = vpop.permute.xlu0 %1245
          %vm1247 = vcmask 236544
          %v1248 = vsel %vm1247, %v1242, %v1244
          %v1249 = vsel %vm1247, %v1244, %v1246
          %v1252 = vadd.f32 %v1223, %v1248
          %v1253 = vadd.f32 %v1224, %v1249
          %s1254 = sld [smem:[#allocation9 + $0x2e]]
          %1255 = vrot.lane.b32.xlu0 %v321, 28
          %v1256 = vpop.permute.xlu0 %1255
          %1257 = vrot.lane.b32.xlu0 %v325, 28
          %v1258 = vpop.permute.xlu0 %1257
          %1259 = vrot.lane.b32.xlu0 %v329, 28
          %v1260 = vpop.permute.xlu0 %1259
          %vm1261 = vcmask 228352
          %v1262 = vsel %vm1261, %v1256, %v1258
          %v1263 = vsel %vm1261, %v1258, %v1260
          %v1266 = vsel %vm289, %v1262, 0.0
          %v1267 = vsel %vm290, %v1263, 0.0
          %v1268 = vstv %s1254
          %v1269 = vmul.f32 %v1268, %v1266
          %v1270 = vmul.f32 %v1268, %v1267
          %v1271 = vadd.f32 %v1252, %v1269
          %v1272 = vadd.f32 %v1253, %v1270
          %s1273 = sld [smem:[#allocation9 + $0x2f]]
          %1274 = vrot.lane.b32.xlu0 %v321, 27
          %v1275 = vpop.permute.xlu0 %1274
          %1276 = vrot.lane.b32.xlu0 %v325, 27
          %v1277 = vpop.permute.xlu0 %1276
          %1278 = vrot.lane.b32.xlu0 %v329, 27
          %v1279 = vpop.permute.xlu0 %1278
          %vm1280 = vcmask 220160
          %v1281 = vsel %vm1280, %v1275, %v1277
          %v1282 = vsel %vm1280, %v1277, %v1279
          %v1285 = vsel %vm291, %v1281, 0.0
          %v1286 = vsel %vm292, %v1282, 0.0
          %v1287 = vstv %s1273
          %v1288 = vmul.f32 %v1287, %v1285
          %v1289 = vmul.f32 %v1287, %v1286
          %v1290 = vadd.f32 %v1271, %v1288
          %v1291 = vadd.f32 %v1272, %v1289
          %s1292 = sld [smem:[#allocation9 + $0x30]]
          %1293 = vrot.lane.b32.xlu0 %v321, 26
          %v1294 = vpop.permute.xlu0 %1293
          %1295 = vrot.lane.b32.xlu0 %v325, 26
          %v1296 = vpop.permute.xlu0 %1295
          %1297 = vrot.lane.b32.xlu0 %v329, 26
          %v1298 = vpop.permute.xlu0 %1297
          %vm1299 = vcmask 211968
          %v1300 = vsel %vm1299, %v1294, %v1296
          %v1301 = vsel %vm1299, %v1296, %v1298
          %v1304 = vsel %vm293, %v1300, 0.0
          %v1305 = vsel %vm294, %v1301, 0.0
          %v1306 = vstv %s1292
          %v1307 = vmul.f32 %v1306, %v1304
          %v1308 = vmul.f32 %v1306, %v1305
          %v1309 = vadd.f32 %v1290, %v1307
          %v1310 = vadd.f32 %v1291, %v1308
          %s1311 = sld [smem:[#allocation9 + $0x31]]
          %v1312 = vld [vmem:[%s254] sm:$0x3]
          %v1314 = vlaneseq
          %v1315 = vshrl.u32 %v1314, 7
          %v1316 = vsub.s32 0, %v1315
          %v1317 = vrot.slane %v1312, %v1316
          %v1318 = vlaneseq
          %v1319 = vshrl.u32 %v1318, 7
          %v1320 = vsub.s32 1, %v1319
          %v1321 = vrot.slane %v1312, %v1320
          %v1324 = vsel %vm283, %v1317, 0.0
          %v1325 = vsel %vm284, %v1321, 0.0
          %v1326 = vstv %s1311
          %v1327 = vmul.f32 %v1326, %v1324
          %v1328 = vmul.f32 %v1326, %v1325
          %v1329 = vadd.f32 %v1327, 0.0
          %v1330 = vadd.f32 %v1328, 0.0
          %s1331 = sld [smem:[#allocation9 + $0x32]]
          %v1332 = vld [vmem:[%s254] sm:$0x7]
          %v1334 = vlaneseq
          %v1335 = vshrl.u32 %v1334, 7
          %v1336 = vsub.s32 0, %v1335
          %v1337 = vrot.slane %v1332, %v1336
          %v1338 = vlaneseq
          %v1339 = vshrl.u32 %v1338, 7
          %v1340 = vsub.s32 1, %v1339
          %v1341 = vrot.slane %v1332, %v1340
          %v1342 = vlaneseq
          %v1343 = vshrl.u32 %v1342, 7
          %v1344 = vsub.s32 2, %v1343
          %v1345 = vrot.slane %v1332, %v1344
          %1346 = vrot.lane.b32.xlu0 %v1337, 127
          %v1347 = vpop.permute.xlu0 %1346
          %1348 = vrot.lane.b32.xlu0 %v1341, 127
          %v1349 = vpop.permute.xlu0 %1348
          %1350 = vrot.lane.b32.xlu0 %v1345, 127
          %v1351 = vpop.permute.xlu0 %1350
          %v1352 = vsel %vm336, %v1347, %v1349
          %v1353 = vsel %vm336, %v1349, %v1351
          %v1356 = vsel %vm285, %v1352, 0.0
          %v1357 = vsel %vm286, %v1353, 0.0
          %v1358 = vstv %s1331
          %v1359 = vmul.f32 %v1358, %v1356
          %v1360 = vmul.f32 %v1358, %v1357
          %v1361 = vadd.f32 %v1329, %v1359
          %v1362 = vadd.f32 %v1330, %v1360
          %s1363 = sld [smem:[#allocation9 + $0x33]]
          %1364 = vrot.lane.b32.xlu0 %v1337, 126
          %v1365 = vpop.permute.xlu0 %1364
          %1366 = vrot.lane.b32.xlu0 %v1341, 126
          %v1367 = vpop.permute.xlu0 %1366
          %1368 = vrot.lane.b32.xlu0 %v1345, 126
          %v1369 = vpop.permute.xlu0 %1368
          %v1370 = vsel %vm355, %v1365, %v1367
          %v1371 = vsel %vm355, %v1367, %v1369
          %v1374 = vsel %vm287, %v1370, 0.0
          %v1375 = vsel %vm288, %v1371, 0.0
          %v1376 = vstv %s1363
          %v1377 = vmul.f32 %v1376, %v1374
          %v1378 = vmul.f32 %v1376, %v1375
          %v1379 = vadd.f32 %v1361, %v1377
          %v1380 = vadd.f32 %v1362, %v1378
          %s1381 = sld [smem:[#allocation9 + $0x34]]
          %v1382 = vstv %s1381
          %v1383 = vmul.f32 %v1382, %v1332
          %v1385 = vlaneseq
          %v1386 = vshrl.u32 %v1385, 7
          %v1387 = vsub.s32 0, %v1386
          %v1388 = vrot.slane %v1383, %v1387
          %v1389 = vlaneseq
          %v1390 = vshrl.u32 %v1389, 7
          %v1391 = vsub.s32 1, %v1390
          %v1392 = vrot.slane %v1383, %v1391
          %v1393 = vlaneseq
          %v1394 = vshrl.u32 %v1393, 7
          %v1395 = vsub.s32 2, %v1394
          %v1396 = vrot.slane %v1383, %v1395
          %1397 = vrot.lane.b32.xlu0 %v1388, 125
          %v1398 = vpop.permute.xlu0 %1397
          %1399 = vrot.lane.b32.xlu0 %v1392, 125
          %v1400 = vpop.permute.xlu0 %1399
          %1401 = vrot.lane.b32.xlu0 %v1396, 125
          %v1402 = vpop.permute.xlu0 %1401
          %v1403 = vsel %vm389, %v1398, %v1400
          %v1404 = vsel %vm389, %v1400, %v1402
          %v1407 = vadd.f32 %v1379, %v1403
          %v1408 = vadd.f32 %v1380, %v1404
          %s1409 = sld [smem:[#allocation9 + $0x35]]
          %1410 = vrot.lane.b32.xlu0 %v1337, 124
          %v1411 = vpop.permute.xlu0 %1410
          %1412 = vrot.lane.b32.xlu0 %v1341, 124
          %v1413 = vpop.permute.xlu0 %1412
          %1414 = vrot.lane.b32.xlu0 %v1345, 124
          %v1415 = vpop.permute.xlu0 %1414
          %v1416 = vsel %vm403, %v1411, %v1413
          %v1417 = vsel %vm403, %v1413, %v1415
          %v1420 = vsel %vm289, %v1416, 0.0
          %v1421 = vsel %vm290, %v1417, 0.0
          %v1422 = vstv %s1409
          %v1423 = vmul.f32 %v1422, %v1420
          %v1424 = vmul.f32 %v1422, %v1421
          %v1425 = vadd.f32 %v1407, %v1423
          %v1426 = vadd.f32 %v1408, %v1424
          %s1427 = sld [smem:[#allocation9 + $0x36]]
          %1428 = vrot.lane.b32.xlu0 %v1337, 123
          %v1429 = vpop.permute.xlu0 %1428
          %1430 = vrot.lane.b32.xlu0 %v1341, 123
          %v1431 = vpop.permute.xlu0 %1430
          %1432 = vrot.lane.b32.xlu0 %v1345, 123
          %v1433 = vpop.permute.xlu0 %1432
          %v1434 = vsel %vm422, %v1429, %v1431
          %v1435 = vsel %vm422, %v1431, %v1433
          %v1438 = vsel %vm291, %v1434, 0.0
          %v1439 = vsel %vm292, %v1435, 0.0
          %v1440 = vstv %s1427
          %v1441 = vmul.f32 %v1440, %v1438
          %v1442 = vmul.f32 %v1440, %v1439
          %v1443 = vadd.f32 %v1425, %v1441
          %v1444 = vadd.f32 %v1426, %v1442
          %s1445 = sld [smem:[#allocation9 + $0x37]]
          %1446 = vrot.lane.b32.xlu0 %v1337, 122
          %v1447 = vpop.permute.xlu0 %1446
          %1448 = vrot.lane.b32.xlu0 %v1341, 122
          %v1449 = vpop.permute.xlu0 %1448
          %1450 = vrot.lane.b32.xlu0 %v1345, 122
          %v1451 = vpop.permute.xlu0 %1450
          %v1452 = vsel %vm441, %v1447, %v1449
          %v1453 = vsel %vm441, %v1449, %v1451
          %v1456 = vsel %vm293, %v1452, 0.0
          %v1457 = vsel %vm294, %v1453, 0.0
          %v1458 = vstv %s1445
          %v1459 = vmul.f32 %v1458, %v1456
          %v1460 = vmul.f32 %v1458, %v1457
          %v1461 = vadd.f32 %v1443, %v1459
          %v1462 = vadd.f32 %v1444, %v1460
          %s1463 = sld [smem:[#allocation9 + $0x38]]
          %1464 = vrot.lane.b32.xlu0 %v1337, 112
          %v1465 = vpop.permute.xlu0 %1464
          %1466 = vrot.lane.b32.xlu0 %v1341, 112
          %v1467 = vpop.permute.xlu0 %1466
          %1468 = vrot.lane.b32.xlu0 %v1345, 112
          %v1469 = vpop.permute.xlu0 %1468
          %v1470 = vsel %vm460, %v1465, %v1467
          %v1471 = vsel %vm460, %v1467, %v1469
          %v1474 = vsel %vm283, %v1470, 0.0
          %v1475 = vsel %vm284, %v1471, 0.0
          %v1476 = vstv %s1463
          %v1477 = vmul.f32 %v1476, %v1474
          %v1478 = vmul.f32 %v1476, %v1475
          %v1479 = vadd.f32 %v1477, 0.0
          %v1480 = vadd.f32 %v1478, 0.0
          %s1481 = sld [smem:[#allocation9 + $0x39]]
          %1482 = vrot.lane.b32.xlu0 %v1337, 111
          %v1483 = vpop.permute.xlu0 %1482
          %1484 = vrot.lane.b32.xlu0 %v1341, 111
          %v1485 = vpop.permute.xlu0 %1484
          %1486 = vrot.lane.b32.xlu0 %v1345, 111
          %v1487 = vpop.permute.xlu0 %1486
          %v1488 = vsel %vm479, %v1483, %v1485
          %v1489 = vsel %vm479, %v1485, %v1487
          %v1492 = vsel %vm285, %v1488, 0.0
          %v1493 = vsel %vm286, %v1489, 0.0
          %v1494 = vstv %s1481
          %v1495 = vmul.f32 %v1494, %v1492
          %v1496 = vmul.f32 %v1494, %v1493
          %v1497 = vadd.f32 %v1479, %v1495
          %v1498 = vadd.f32 %v1480, %v1496
          %s1499 = sld [smem:[#allocation9 + $0x3a]]
          %1500 = vrot.lane.b32.xlu0 %v1337, 110
          %v1501 = vpop.permute.xlu0 %1500
          %1502 = vrot.lane.b32.xlu0 %v1341, 110
          %v1503 = vpop.permute.xlu0 %1502
          %1504 = vrot.lane.b32.xlu0 %v1345, 110
          %v1505 = vpop.permute.xlu0 %1504
          %v1506 = vsel %vm498, %v1501, %v1503
          %v1507 = vsel %vm498, %v1503, %v1505
          %v1510 = vsel %vm287, %v1506, 0.0
          %v1511 = vsel %vm288, %v1507, 0.0
          %v1512 = vstv %s1499
          %v1513 = vmul.f32 %v1512, %v1510
          %v1514 = vmul.f32 %v1512, %v1511
          %v1515 = vadd.f32 %v1497, %v1513
          %v1516 = vadd.f32 %v1498, %v1514
          %s1517 = sld [smem:[#allocation9 + $0x3b]]
          %v1518 = vstv %s1517
          %v1519 = vmul.f32 %v1518, %v1332
          %v1521 = vlaneseq
          %v1522 = vshrl.u32 %v1521, 7
          %v1523 = vsub.s32 0, %v1522
          %v1524 = vrot.slane %v1519, %v1523
          %v1525 = vlaneseq
          %v1526 = vshrl.u32 %v1525, 7
          %v1527 = vsub.s32 1, %v1526
          %v1528 = vrot.slane %v1519, %v1527
          %v1529 = vlaneseq
          %v1530 = vshrl.u32 %v1529, 7
          %v1531 = vsub.s32 2, %v1530
          %v1532 = vrot.slane %v1519, %v1531
          %1533 = vrot.lane.b32.xlu0 %v1524, 109
          %v1534 = vpop.permute.xlu0 %1533
          %1535 = vrot.lane.b32.xlu0 %v1528, 109
          %v1536 = vpop.permute.xlu0 %1535
          %1537 = vrot.lane.b32.xlu0 %v1532, 109
          %v1538 = vpop.permute.xlu0 %1537
          %v1539 = vsel %vm532, %v1534, %v1536
          %v1540 = vsel %vm532, %v1536, %v1538
          %v1543 = vadd.f32 %v1515, %v1539
          %v1544 = vadd.f32 %v1516, %v1540
          %s1545 = sld [smem:[#allocation9 + $0x3c]]
          %1546 = vrot.lane.b32.xlu0 %v1337, 108
          %v1547 = vpop.permute.xlu0 %1546
          %1548 = vrot.lane.b32.xlu0 %v1341, 108
          %v1549 = vpop.permute.xlu0 %1548
          %1550 = vrot.lane.b32.xlu0 %v1345, 108
          %v1551 = vpop.permute.xlu0 %1550
          %v1552 = vsel %vm546, %v1547, %v1549
          %v1553 = vsel %vm546, %v1549, %v1551
          %v1556 = vsel %vm289, %v1552, 0.0
          %v1557 = vsel %vm290, %v1553, 0.0
          %v1558 = vstv %s1545
          %v1559 = vmul.f32 %v1558, %v1556
          %v1560 = vmul.f32 %v1558, %v1557
          %v1561 = vadd.f32 %v1543, %v1559
          %v1562 = vadd.f32 %v1544, %v1560
          %s1563 = sld [smem:[#allocation9 + $0x3d]]
          %1564 = vrot.lane.b32.xlu0 %v1337, 107
          %v1565 = vpop.permute.xlu0 %1564
          %1566 = vrot.lane.b32.xlu0 %v1341, 107
          %v1567 = vpop.permute.xlu0 %1566
          %1568 = vrot.lane.b32.xlu0 %v1345, 107
          %v1569 = vpop.permute.xlu0 %1568
          %v1570 = vsel %vm565, %v1565, %v1567
          %v1571 = vsel %vm565, %v1567, %v1569
          %v1574 = vsel %vm291, %v1570, 0.0
          %v1575 = vsel %vm292, %v1571, 0.0
          %v1576 = vstv %s1563
          %v1577 = vmul.f32 %v1576, %v1574
          %v1578 = vmul.f32 %v1576, %v1575
          %v1579 = vadd.f32 %v1561, %v1577
          %v1580 = vadd.f32 %v1562, %v1578
          %s1581 = sld [smem:[#allocation9 + $0x3e]]
          %1582 = vrot.lane.b32.xlu0 %v1337, 106
          %v1583 = vpop.permute.xlu0 %1582
          %1584 = vrot.lane.b32.xlu0 %v1341, 106
          %v1585 = vpop.permute.xlu0 %1584
          %1586 = vrot.lane.b32.xlu0 %v1345, 106
          %v1587 = vpop.permute.xlu0 %1586
          %v1588 = vsel %vm584, %v1583, %v1585
          %v1589 = vsel %vm584, %v1585, %v1587
          %v1592 = vsel %vm293, %v1588, 0.0
          %v1593 = vsel %vm294, %v1589, 0.0
          %v1594 = vstv %s1581
          %v1595 = vmul.f32 %v1594, %v1592
          %v1596 = vmul.f32 %v1594, %v1593
          %v1597 = vadd.f32 %v1579, %v1595
          %v1598 = vadd.f32 %v1580, %v1596
          %s1599 = sld [smem:[#allocation9 + $0x3f]]
          %1600 = vrot.lane.b32.xlu0 %v1337, 96
          %v1601 = vpop.permute.xlu0 %1600
          %1602 = vrot.lane.b32.xlu0 %v1341, 96
          %v1603 = vpop.permute.xlu0 %1602
          %1604 = vrot.lane.b32.xlu0 %v1345, 96
          %v1605 = vpop.permute.xlu0 %1604
          %v1606 = vsel %vm603, %v1601, %v1603
          %v1607 = vsel %vm603, %v1603, %v1605
          %v1610 = vsel %vm283, %v1606, 0.0
          %v1611 = vsel %vm284, %v1607, 0.0
          %v1612 = vstv %s1599
          %v1613 = vmul.f32 %v1612, %v1610
          %v1614 = vmul.f32 %v1612, %v1611
          %v1615 = vadd.f32 %v1461, %v1613
          %v1616 = vadd.f32 %v1462, %v1614
          %s1617 = sld [smem:[#allocation9 + $0x40]]
          %1618 = vrot.lane.b32.xlu0 %v1337, 95
          %v1619 = vpop.permute.xlu0 %1618
          %1620 = vrot.lane.b32.xlu0 %v1341, 95
          %v1621 = vpop.permute.xlu0 %1620
          %1622 = vrot.lane.b32.xlu0 %v1345, 95
          %v1623 = vpop.permute.xlu0 %1622
          %v1624 = vsel %vm622, %v1619, %v1621
          %v1625 = vsel %vm622, %v1621, %v1623
          %v1628 = vsel %vm285, %v1624, 0.0
          %v1629 = vsel %vm286, %v1625, 0.0
          %v1630 = vstv %s1617
          %v1631 = vmul.f32 %v1630, %v1628
          %v1632 = vmul.f32 %v1630, %v1629
          %v1633 = vadd.f32 %v1615, %v1631
          %v1634 = vadd.f32 %v1616, %v1632
          %s1635 = sld [smem:[#allocation9 + $0x41]]
          %1636 = vrot.lane.b32.xlu0 %v1337, 94
          %v1637 = vpop.permute.xlu0 %1636
          %1638 = vrot.lane.b32.xlu0 %v1341, 94
          %v1639 = vpop.permute.xlu0 %1638
          %1640 = vrot.lane.b32.xlu0 %v1345, 94
          %v1641 = vpop.permute.xlu0 %1640
          %v1642 = vsel %vm641, %v1637, %v1639
          %v1643 = vsel %vm641, %v1639, %v1641
          %v1646 = vsel %vm287, %v1642, 0.0
          %v1647 = vsel %vm288, %v1643, 0.0
          %v1648 = vstv %s1635
          %v1649 = vmul.f32 %v1648, %v1646
          %v1650 = vmul.f32 %v1648, %v1647
          %v1651 = vadd.f32 %v1633, %v1649
          %v1652 = vadd.f32 %v1634, %v1650
          %s1653 = sld [smem:[#allocation9 + $0x42]]
          %v1654 = vstv %s1653
          %v1655 = vmul.f32 %v1654, %v1332
          %v1657 = vlaneseq
          %v1658 = vshrl.u32 %v1657, 7
          %v1659 = vsub.s32 0, %v1658
          %v1660 = vrot.slane %v1655, %v1659
          %v1661 = vlaneseq
          %v1662 = vshrl.u32 %v1661, 7
          %v1663 = vsub.s32 1, %v1662
          %v1664 = vrot.slane %v1655, %v1663
          %v1665 = vlaneseq
          %v1666 = vshrl.u32 %v1665, 7
          %v1667 = vsub.s32 2, %v1666
          %v1668 = vrot.slane %v1655, %v1667
          %1669 = vrot.lane.b32.xlu0 %v1660, 93
          %v1670 = vpop.permute.xlu0 %1669
          %1671 = vrot.lane.b32.xlu0 %v1664, 93
          %v1672 = vpop.permute.xlu0 %1671
          %1673 = vrot.lane.b32.xlu0 %v1668, 93
          %v1674 = vpop.permute.xlu0 %1673
          %v1675 = vsel %vm675, %v1670, %v1672
          %v1676 = vsel %vm675, %v1672, %v1674
          %v1679 = vadd.f32 %v1651, %v1675
          %v1680 = vadd.f32 %v1652, %v1676
          %s1681 = sld [smem:[#allocation9 + $0x43]]
          %1682 = vrot.lane.b32.xlu0 %v1337, 92
          %v1683 = vpop.permute.xlu0 %1682
          %1684 = vrot.lane.b32.xlu0 %v1341, 92
          %v1685 = vpop.permute.xlu0 %1684
          %1686 = vrot.lane.b32.xlu0 %v1345, 92
          %v1687 = vpop.permute.xlu0 %1686
          %v1688 = vsel %vm689, %v1683, %v1685
          %v1689 = vsel %vm689, %v1685, %v1687
          %v1692 = vsel %vm289, %v1688, 0.0
          %v1693 = vsel %vm290, %v1689, 0.0
          %v1694 = vstv %s1681
          %v1695 = vmul.f32 %v1694, %v1692
          %v1696 = vmul.f32 %v1694, %v1693
          %v1697 = vadd.f32 %v1679, %v1695
          %v1698 = vadd.f32 %v1680, %v1696
          %s1699 = sld [smem:[#allocation9 + $0x44]]
          %1700 = vrot.lane.b32.xlu0 %v1337, 91
          %v1701 = vpop.permute.xlu0 %1700
          %1702 = vrot.lane.b32.xlu0 %v1341, 91
          %v1703 = vpop.permute.xlu0 %1702
          %1704 = vrot.lane.b32.xlu0 %v1345, 91
          %v1705 = vpop.permute.xlu0 %1704
          %v1706 = vsel %vm708, %v1701, %v1703
          %v1707 = vsel %vm708, %v1703, %v1705
          %v1710 = vsel %vm291, %v1706, 0.0
          %v1711 = vsel %vm292, %v1707, 0.0
          %v1712 = vstv %s1699
          %v1713 = vmul.f32 %v1712, %v1710
          %v1714 = vmul.f32 %v1712, %v1711
          %v1715 = vadd.f32 %v1697, %v1713
          %v1716 = vadd.f32 %v1698, %v1714
          %s1717 = sld [smem:[#allocation9 + $0x45]]
          %1718 = vrot.lane.b32.xlu0 %v1337, 90
          %v1719 = vpop.permute.xlu0 %1718
          %1720 = vrot.lane.b32.xlu0 %v1341, 90
          %v1721 = vpop.permute.xlu0 %1720
          %1722 = vrot.lane.b32.xlu0 %v1345, 90
          %v1723 = vpop.permute.xlu0 %1722
          %v1724 = vsel %vm727, %v1719, %v1721
          %v1725 = vsel %vm727, %v1721, %v1723
          %v1728 = vsel %vm293, %v1724, 0.0
          %v1729 = vsel %vm294, %v1725, 0.0
          %v1730 = vstv %s1717
          %v1731 = vmul.f32 %v1730, %v1728
          %v1732 = vmul.f32 %v1730, %v1729
          %v1733 = vadd.f32 %v1715, %v1731
          %v1734 = vadd.f32 %v1716, %v1732
          %s1735 = sld [smem:[#allocation9 + $0x46]]
          %1736 = vrot.lane.b32.xlu0 %v1337, 80
          %v1737 = vpop.permute.xlu0 %1736
          %1738 = vrot.lane.b32.xlu0 %v1341, 80
          %v1739 = vpop.permute.xlu0 %1738
          %1740 = vrot.lane.b32.xlu0 %v1345, 80
          %v1741 = vpop.permute.xlu0 %1740
          %v1742 = vsel %vm746, %v1737, %v1739
          %v1743 = vsel %vm746, %v1739, %v1741
          %v1746 = vsel %vm283, %v1742, 0.0
          %v1747 = vsel %vm284, %v1743, 0.0
          %v1748 = vstv %s1735
          %v1749 = vmul.f32 %v1748, %v1746
          %v1750 = vmul.f32 %v1748, %v1747
          %v1751 = vadd.f32 %v1597, %v1749
          %v1752 = vadd.f32 %v1598, %v1750
          %s1753 = sld [smem:[#allocation9 + $0x47]]
          %1754 = vrot.lane.b32.xlu0 %v1337, 79
          %v1755 = vpop.permute.xlu0 %1754
          %1756 = vrot.lane.b32.xlu0 %v1341, 79
          %v1757 = vpop.permute.xlu0 %1756
          %1758 = vrot.lane.b32.xlu0 %v1345, 79
          %v1759 = vpop.permute.xlu0 %1758
          %v1760 = vsel %vm765, %v1755, %v1757
          %v1761 = vsel %vm765, %v1757, %v1759
          %v1764 = vsel %vm285, %v1760, 0.0
          %v1765 = vsel %vm286, %v1761, 0.0
          %v1766 = vstv %s1753
          %v1767 = vmul.f32 %v1766, %v1764
          %v1768 = vmul.f32 %v1766, %v1765
          %v1769 = vadd.f32 %v1751, %v1767
          %v1770 = vadd.f32 %v1752, %v1768
          %s1771 = sld [smem:[#allocation9 + $0x48]]
          %1772 = vrot.lane.b32.xlu0 %v1337, 78
          %v1773 = vpop.permute.xlu0 %1772
          %1774 = vrot.lane.b32.xlu0 %v1341, 78
          %v1775 = vpop.permute.xlu0 %1774
          %1776 = vrot.lane.b32.xlu0 %v1345, 78
          %v1777 = vpop.permute.xlu0 %1776
          %v1778 = vsel %vm784, %v1773, %v1775
          %v1779 = vsel %vm784, %v1775, %v1777
          %v1782 = vsel %vm287, %v1778, 0.0
          %v1783 = vsel %vm288, %v1779, 0.0
          %v1784 = vstv %s1771
          %v1785 = vmul.f32 %v1784, %v1782
          %v1786 = vmul.f32 %v1784, %v1783
          %v1787 = vadd.f32 %v1769, %v1785
          %v1788 = vadd.f32 %v1770, %v1786
          %s1789 = sld [smem:[#allocation9 + $0x49]]
          %v1790 = vstv %s1789
          %v1791 = vmul.f32 %v1790, %v1332
          %v1793 = vlaneseq
          %v1794 = vshrl.u32 %v1793, 7
          %v1795 = vsub.s32 0, %v1794
          %v1796 = vrot.slane %v1791, %v1795
          %v1797 = vlaneseq
          %v1798 = vshrl.u32 %v1797, 7
          %v1799 = vsub.s32 1, %v1798
          %v1800 = vrot.slane %v1791, %v1799
          %v1801 = vlaneseq
          %v1802 = vshrl.u32 %v1801, 7
          %v1803 = vsub.s32 2, %v1802
          %v1804 = vrot.slane %v1791, %v1803
          %1805 = vrot.lane.b32.xlu0 %v1796, 77
          %v1806 = vpop.permute.xlu0 %1805
          %1807 = vrot.lane.b32.xlu0 %v1800, 77
          %v1808 = vpop.permute.xlu0 %1807
          %1809 = vrot.lane.b32.xlu0 %v1804, 77
          %v1810 = vpop.permute.xlu0 %1809
          %v1811 = vsel %vm818, %v1806, %v1808
          %v1812 = vsel %vm818, %v1808, %v1810
          %v1815 = vadd.f32 %v1787, %v1811
          %v1816 = vadd.f32 %v1788, %v1812
          %s1817 = sld [smem:[#allocation9 + $0x4a]]
          %1818 = vrot.lane.b32.xlu0 %v1337, 76
          %v1819 = vpop.permute.xlu0 %1818
          %1820 = vrot.lane.b32.xlu0 %v1341, 76
          %v1821 = vpop.permute.xlu0 %1820
          %1822 = vrot.lane.b32.xlu0 %v1345, 76
          %v1823 = vpop.permute.xlu0 %1822
          %v1824 = vsel %vm832, %v1819, %v1821
          %v1825 = vsel %vm832, %v1821, %v1823
          %v1828 = vsel %vm289, %v1824, 0.0
          %v1829 = vsel %vm290, %v1825, 0.0
          %v1830 = vstv %s1817
          %v1831 = vmul.f32 %v1830, %v1828
          %v1832 = vmul.f32 %v1830, %v1829
          %v1833 = vadd.f32 %v1815, %v1831
          %v1834 = vadd.f32 %v1816, %v1832
          %s1835 = sld [smem:[#allocation9 + $0x4b]]
          %1836 = vrot.lane.b32.xlu0 %v1337, 75
          %v1837 = vpop.permute.xlu0 %1836
          %1838 = vrot.lane.b32.xlu0 %v1341, 75
          %v1839 = vpop.permute.xlu0 %1838
          %1840 = vrot.lane.b32.xlu0 %v1345, 75
          %v1841 = vpop.permute.xlu0 %1840
          %v1842 = vsel %vm851, %v1837, %v1839
          %v1843 = vsel %vm851, %v1839, %v1841
          %v1846 = vsel %vm291, %v1842, 0.0
          %v1847 = vsel %vm292, %v1843, 0.0
          %v1848 = vstv %s1835
          %v1849 = vmul.f32 %v1848, %v1846
          %v1850 = vmul.f32 %v1848, %v1847
          %v1851 = vadd.f32 %v1833, %v1849
          %v1852 = vadd.f32 %v1834, %v1850
          %s1853 = sld [smem:[#allocation9 + $0x4c]]
          %1854 = vrot.lane.b32.xlu0 %v1337, 74
          %v1855 = vpop.permute.xlu0 %1854
          %1856 = vrot.lane.b32.xlu0 %v1341, 74
          %v1857 = vpop.permute.xlu0 %1856
          %1858 = vrot.lane.b32.xlu0 %v1345, 74
          %v1859 = vpop.permute.xlu0 %1858
          %v1860 = vsel %vm870, %v1855, %v1857
          %v1861 = vsel %vm870, %v1857, %v1859
          %v1864 = vsel %vm293, %v1860, 0.0
          %v1865 = vsel %vm294, %v1861, 0.0
          %v1866 = vstv %s1853
          %v1867 = vmul.f32 %v1866, %v1864
          %v1868 = vmul.f32 %v1866, %v1865
          %v1869 = vadd.f32 %v1851, %v1867
          %v1870 = vadd.f32 %v1852, %v1868
          %s1871 = sld [smem:[#allocation9 + $0x4d]]
          %1872 = vrot.lane.b32.xlu0 %v1337, 64
          %v1873 = vpop.permute.xlu0 %1872
          %1874 = vrot.lane.b32.xlu0 %v1341, 64
          %v1875 = vpop.permute.xlu0 %1874
          %1876 = vrot.lane.b32.xlu0 %v1345, 64
          %v1877 = vpop.permute.xlu0 %1876
          %v1878 = vsel %vm889, %v1873, %v1875
          %v1879 = vsel %vm889, %v1875, %v1877
          %v1882 = vsel %vm283, %v1878, 0.0
          %v1883 = vsel %vm284, %v1879, 0.0
          %v1884 = vstv %s1871
          %v1885 = vmul.f32 %v1884, %v1882
          %v1886 = vmul.f32 %v1884, %v1883
          %v1887 = vadd.f32 %v1733, %v1885
          %v1888 = vadd.f32 %v1734, %v1886
          %s1889 = sld [smem:[#allocation9 + $0x4e]]
          %1890 = vrot.lane.b32.xlu0 %v1337, 63
          %v1891 = vpop.permute.xlu0 %1890
          %1892 = vrot.lane.b32.xlu0 %v1341, 63
          %v1893 = vpop.permute.xlu0 %1892
          %1894 = vrot.lane.b32.xlu0 %v1345, 63
          %v1895 = vpop.permute.xlu0 %1894
          %v1896 = vsel %vm908, %v1891, %v1893
          %v1897 = vsel %vm908, %v1893, %v1895
          %v1900 = vsel %vm285, %v1896, 0.0
          %v1901 = vsel %vm286, %v1897, 0.0
          %v1902 = vstv %s1889
          %v1903 = vmul.f32 %v1902, %v1900
          %v1904 = vmul.f32 %v1902, %v1901
          %v1905 = vadd.f32 %v1887, %v1903
          %v1906 = vadd.f32 %v1888, %v1904
          %s1907 = sld [smem:[#allocation9 + $0x4f]]
          %1908 = vrot.lane.b32.xlu0 %v1337, 62
          %v1909 = vpop.permute.xlu0 %1908
          %1910 = vrot.lane.b32.xlu0 %v1341, 62
          %v1911 = vpop.permute.xlu0 %1910
          %1912 = vrot.lane.b32.xlu0 %v1345, 62
          %v1913 = vpop.permute.xlu0 %1912
          %v1914 = vsel %vm927, %v1909, %v1911
          %v1915 = vsel %vm927, %v1911, %v1913
          %v1918 = vsel %vm287, %v1914, 0.0
          %v1919 = vsel %vm288, %v1915, 0.0
          %v1920 = vstv %s1907
          %v1921 = vmul.f32 %v1920, %v1918
          %v1922 = vmul.f32 %v1920, %v1919
          %v1923 = vadd.f32 %v1905, %v1921
          %v1924 = vadd.f32 %v1906, %v1922
          %s1925 = sld [smem:[#allocation9 + $0x50]]
          %v1926 = vstv %s1925
          %v1927 = vmul.f32 %v1926, %v1332
          %v1929 = vlaneseq
          %v1930 = vshrl.u32 %v1929, 7
          %v1931 = vsub.s32 0, %v1930
          %v1932 = vrot.slane %v1927, %v1931
          %v1933 = vlaneseq
          %v1934 = vshrl.u32 %v1933, 7
          %v1935 = vsub.s32 1, %v1934
          %v1936 = vrot.slane %v1927, %v1935
          %v1937 = vlaneseq
          %v1938 = vshrl.u32 %v1937, 7
          %v1939 = vsub.s32 2, %v1938
          %v1940 = vrot.slane %v1927, %v1939
          %1941 = vrot.lane.b32.xlu0 %v1932, 61
          %v1942 = vpop.permute.xlu0 %1941
          %1943 = vrot.lane.b32.xlu0 %v1936, 61
          %v1944 = vpop.permute.xlu0 %1943
          %1945 = vrot.lane.b32.xlu0 %v1940, 61
          %v1946 = vpop.permute.xlu0 %1945
          %v1947 = vsel %vm961, %v1942, %v1944
          %v1948 = vsel %vm961, %v1944, %v1946
          %v1951 = vadd.f32 %v1923, %v1947
          %v1952 = vadd.f32 %v1924, %v1948
          %s1953 = sld [smem:[#allocation9 + $0x51]]
          %1954 = vrot.lane.b32.xlu0 %v1337, 60
          %v1955 = vpop.permute.xlu0 %1954
          %1956 = vrot.lane.b32.xlu0 %v1341, 60
          %v1957 = vpop.permute.xlu0 %1956
          %1958 = vrot.lane.b32.xlu0 %v1345, 60
          %v1959 = vpop.permute.xlu0 %1958
          %v1960 = vsel %vm975, %v1955, %v1957
          %v1961 = vsel %vm975, %v1957, %v1959
          %v1964 = vsel %vm289, %v1960, 0.0
          %v1965 = vsel %vm290, %v1961, 0.0
          %v1966 = vstv %s1953
          %v1967 = vmul.f32 %v1966, %v1964
          %v1968 = vmul.f32 %v1966, %v1965
          %v1969 = vadd.f32 %v1951, %v1967
          %v1970 = vadd.f32 %v1952, %v1968
          %s1971 = sld [smem:[#allocation9 + $0x52]]
          %1972 = vrot.lane.b32.xlu0 %v1337, 59
          %v1973 = vpop.permute.xlu0 %1972
          %1974 = vrot.lane.b32.xlu0 %v1341, 59
          %v1975 = vpop.permute.xlu0 %1974
          %1976 = vrot.lane.b32.xlu0 %v1345, 59
          %v1977 = vpop.permute.xlu0 %1976
          %v1978 = vsel %vm994, %v1973, %v1975
          %v1979 = vsel %vm994, %v1975, %v1977
          %v1982 = vsel %vm291, %v1978, 0.0
          %v1983 = vsel %vm292, %v1979, 0.0
          %v1984 = vstv %s1971
          %v1985 = vmul.f32 %v1984, %v1982
          %v1986 = vmul.f32 %v1984, %v1983
          %v1987 = vadd.f32 %v1969, %v1985
          %v1988 = vadd.f32 %v1970, %v1986
          %s1989 = sld [smem:[#allocation9 + $0x53]]
          %1990 = vrot.lane.b32.xlu0 %v1337, 58
          %v1991 = vpop.permute.xlu0 %1990
          %1992 = vrot.lane.b32.xlu0 %v1341, 58
          %v1993 = vpop.permute.xlu0 %1992
          %1994 = vrot.lane.b32.xlu0 %v1345, 58
          %v1995 = vpop.permute.xlu0 %1994
          %v1996 = vsel %vm1013, %v1991, %v1993
          %v1997 = vsel %vm1013, %v1993, %v1995
          %v2000 = vsel %vm293, %v1996, 0.0
          %v2001 = vsel %vm294, %v1997, 0.0
          %v2002 = vstv %s1989
          %v2003 = vmul.f32 %v2002, %v2000
          %v2004 = vmul.f32 %v2002, %v2001
          %v2005 = vadd.f32 %v1987, %v2003
          %v2006 = vadd.f32 %v1988, %v2004
          %s2007 = sld [smem:[#allocation9 + $0x54]]
          %2008 = vrot.lane.b32.xlu0 %v1337, 48
          %v2009 = vpop.permute.xlu0 %2008
          %2010 = vrot.lane.b32.xlu0 %v1341, 48
          %v2011 = vpop.permute.xlu0 %2010
          %2012 = vrot.lane.b32.xlu0 %v1345, 48
          %v2013 = vpop.permute.xlu0 %2012
          %v2014 = vsel %vm1032, %v2009, %v2011
          %v2015 = vsel %vm1032, %v2011, %v2013
          %v2018 = vsel %vm283, %v2014, 0.0
          %v2019 = vsel %vm284, %v2015, 0.0
          %v2020 = vstv %s2007
          %v2021 = vmul.f32 %v2020, %v2018
          %v2022 = vmul.f32 %v2020, %v2019
          %v2023 = vadd.f32 %v1869, %v2021
          %v2024 = vadd.f32 %v1870, %v2022
          %s2025 = sld [smem:[#allocation9 + $0x55]]
          %2026 = vrot.lane.b32.xlu0 %v1337, 47
          %v2027 = vpop.permute.xlu0 %2026
          %2028 = vrot.lane.b32.xlu0 %v1341, 47
          %v2029 = vpop.permute.xlu0 %2028
          %2030 = vrot.lane.b32.xlu0 %v1345, 47
          %v2031 = vpop.permute.xlu0 %2030
          %v2032 = vsel %vm1051, %v2027, %v2029
          %v2033 = vsel %vm1051, %v2029, %v2031
          %v2036 = vsel %vm285, %v2032, 0.0
          %v2037 = vsel %vm286, %v2033, 0.0
          %v2038 = vstv %s2025
          %v2039 = vmul.f32 %v2038, %v2036
          %v2040 = vmul.f32 %v2038, %v2037
          %v2041 = vadd.f32 %v2023, %v2039
          %v2042 = vadd.f32 %v2024, %v2040
          %s2043 = sld [smem:[#allocation9 + $0x56]]
          %2044 = vrot.lane.b32.xlu0 %v1337, 46
          %v2045 = vpop.permute.xlu0 %2044
          %2046 = vrot.lane.b32.xlu0 %v1341, 46
          %v2047 = vpop.permute.xlu0 %2046
          %2048 = vrot.lane.b32.xlu0 %v1345, 46
          %v2049 = vpop.permute.xlu0 %2048
          %v2050 = vsel %vm1070, %v2045, %v2047
          %v2051 = vsel %vm1070, %v2047, %v2049
          %v2054 = vsel %vm287, %v2050, 0.0
          %v2055 = vsel %vm288, %v2051, 0.0
          %v2056 = vstv %s2043
          %v2057 = vmul.f32 %v2056, %v2054
          %v2058 = vmul.f32 %v2056, %v2055
          %v2059 = vadd.f32 %v2041, %v2057
          %v2060 = vadd.f32 %v2042, %v2058
          %s2061 = sld [smem:[#allocation9 + $0x57]]
          %v2062 = vstv %s2061
          %v2063 = vmul.f32 %v2062, %v1332
          %v2065 = vlaneseq
          %v2066 = vshrl.u32 %v2065, 7
          %v2067 = vsub.s32 0, %v2066
          %v2068 = vrot.slane %v2063, %v2067
          %v2069 = vlaneseq
          %v2070 = vshrl.u32 %v2069, 7
          %v2071 = vsub.s32 1, %v2070
          %v2072 = vrot.slane %v2063, %v2071
          %v2073 = vlaneseq
          %v2074 = vshrl.u32 %v2073, 7
          %v2075 = vsub.s32 2, %v2074
          %v2076 = vrot.slane %v2063, %v2075
          %2077 = vrot.lane.b32.xlu0 %v2068, 45
          %v2078 = vpop.permute.xlu0 %2077
          %2079 = vrot.lane.b32.xlu0 %v2072, 45
          %v2080 = vpop.permute.xlu0 %2079
          %2081 = vrot.lane.b32.xlu0 %v2076, 45
          %v2082 = vpop.permute.xlu0 %2081
          %v2083 = vsel %vm1104, %v2078, %v2080
          %v2084 = vsel %vm1104, %v2080, %v2082
          %v2087 = vadd.f32 %v2059, %v2083
          %v2088 = vadd.f32 %v2060, %v2084
          %s2089 = sld [smem:[#allocation9 + $0x58]]
          %2090 = vrot.lane.b32.xlu0 %v1337, 44
          %v2091 = vpop.permute.xlu0 %2090
          %2092 = vrot.lane.b32.xlu0 %v1341, 44
          %v2093 = vpop.permute.xlu0 %2092
          %2094 = vrot.lane.b32.xlu0 %v1345, 44
          %v2095 = vpop.permute.xlu0 %2094
          %v2096 = vsel %vm1118, %v2091, %v2093
          %v2097 = vsel %vm1118, %v2093, %v2095
          %v2100 = vsel %vm289, %v2096, 0.0
          %v2101 = vsel %vm290, %v2097, 0.0
          %v2102 = vstv %s2089
          %v2103 = vmul.f32 %v2102, %v2100
          %v2104 = vmul.f32 %v2102, %v2101
          %v2105 = vadd.f32 %v2087, %v2103
          %v2106 = vadd.f32 %v2088, %v2104
          %s2107 = sld [smem:[#allocation9 + $0x59]]
          %2108 = vrot.lane.b32.xlu0 %v1337, 43
          %v2109 = vpop.permute.xlu0 %2108
          %2110 = vrot.lane.b32.xlu0 %v1341, 43
          %v2111 = vpop.permute.xlu0 %2110
          %2112 = vrot.lane.b32.xlu0 %v1345, 43
          %v2113 = vpop.permute.xlu0 %2112
          %v2114 = vsel %vm1137, %v2109, %v2111
          %v2115 = vsel %vm1137, %v2111, %v2113
          %v2118 = vsel %vm291, %v2114, 0.0
          %v2119 = vsel %vm292, %v2115, 0.0
          %v2120 = vstv %s2107
          %v2121 = vmul.f32 %v2120, %v2118
          %v2122 = vmul.f32 %v2120, %v2119
          %v2123 = vadd.f32 %v2105, %v2121
          %v2124 = vadd.f32 %v2106, %v2122
          %s2125 = sld [smem:[#allocation9 + $0x5a]]
          %2126 = vrot.lane.b32.xlu0 %v1337, 42
          %v2127 = vpop.permute.xlu0 %2126
          %2128 = vrot.lane.b32.xlu0 %v1341, 42
          %v2129 = vpop.permute.xlu0 %2128
          %2130 = vrot.lane.b32.xlu0 %v1345, 42
          %v2131 = vpop.permute.xlu0 %2130
          %v2132 = vsel %vm1156, %v2127, %v2129
          %v2133 = vsel %vm1156, %v2129, %v2131
          %v2136 = vsel %vm293, %v2132, 0.0
          %v2137 = vsel %vm294, %v2133, 0.0
          %v2138 = vstv %s2125
          %v2139 = vmul.f32 %v2138, %v2136
          %v2140 = vmul.f32 %v2138, %v2137
          %v2141 = vadd.f32 %v2123, %v2139
          %v2142 = vadd.f32 %v2124, %v2140
          %s2143 = sld [smem:[#allocation9 + $0x5b]]
          %2144 = vrot.lane.b32.xlu0 %v1337, 32
          %v2145 = vpop.permute.xlu0 %2144
          %2146 = vrot.lane.b32.xlu0 %v1341, 32
          %v2147 = vpop.permute.xlu0 %2146
          %2148 = vrot.lane.b32.xlu0 %v1345, 32
          %v2149 = vpop.permute.xlu0 %2148
          %v2150 = vsel %vm1175, %v2145, %v2147
          %v2151 = vsel %vm1175, %v2147, %v2149
          %v2154 = vsel %vm283, %v2150, 0.0
          %v2155 = vsel %vm284, %v2151, 0.0
          %v2156 = vstv %s2143
          %v2157 = vmul.f32 %v2156, %v2154
          %v2158 = vmul.f32 %v2156, %v2155
          %v2159 = vadd.f32 %v2005, %v2157
          %v2160 = vadd.f32 %v2006, %v2158
          %s2161 = sld [smem:[#allocation9 + $0x5c]]
          %2162 = vrot.lane.b32.xlu0 %v1337, 31
          %v2163 = vpop.permute.xlu0 %2162
          %2164 = vrot.lane.b32.xlu0 %v1341, 31
          %v2165 = vpop.permute.xlu0 %2164
          %2166 = vrot.lane.b32.xlu0 %v1345, 31
          %v2167 = vpop.permute.xlu0 %2166
          %v2168 = vsel %vm1194, %v2163, %v2165
          %v2169 = vsel %vm1194, %v2165, %v2167
          %v2172 = vsel %vm285, %v2168, 0.0
          %v2173 = vsel %vm286, %v2169, 0.0
          %v2174 = vstv %s2161
          %v2175 = vmul.f32 %v2174, %v2172
          %v2176 = vmul.f32 %v2174, %v2173
          %v2177 = vadd.f32 %v2159, %v2175
          %v2178 = vadd.f32 %v2160, %v2176
          %s2179 = sld [smem:[#allocation9 + $0x5d]]
          %2180 = vrot.lane.b32.xlu0 %v1337, 30
          %v2181 = vpop.permute.xlu0 %2180
          %2182 = vrot.lane.b32.xlu0 %v1341, 30
          %v2183 = vpop.permute.xlu0 %2182
          %2184 = vrot.lane.b32.xlu0 %v1345, 30
          %v2185 = vpop.permute.xlu0 %2184
          %v2186 = vsel %vm1213, %v2181, %v2183
          %v2187 = vsel %vm1213, %v2183, %v2185
          %v2190 = vsel %vm287, %v2186, 0.0
          %v2191 = vsel %vm288, %v2187, 0.0
          %v2192 = vstv %s2179
          %v2193 = vmul.f32 %v2192, %v2190
          %v2194 = vmul.f32 %v2192, %v2191
          %v2195 = vadd.f32 %v2177, %v2193
          %v2196 = vadd.f32 %v2178, %v2194
          %s2197 = sld [smem:[#allocation9 + $0x5e]]
          %v2198 = vstv %s2197
          %v2199 = vmul.f32 %v2198, %v1332
          %v2201 = vlaneseq
          %v2202 = vshrl.u32 %v2201, 7
          %v2203 = vsub.s32 0, %v2202
          %v2204 = vrot.slane %v2199, %v2203
          %v2205 = vlaneseq
          %v2206 = vshrl.u32 %v2205, 7
          %v2207 = vsub.s32 1, %v2206
          %v2208 = vrot.slane %v2199, %v2207
          %v2209 = vlaneseq
          %v2210 = vshrl.u32 %v2209, 7
          %v2211 = vsub.s32 2, %v2210
          %v2212 = vrot.slane %v2199, %v2211
          %2213 = vrot.lane.b32.xlu0 %v2204, 29
          %v2214 = vpop.permute.xlu0 %2213
          %2215 = vrot.lane.b32.xlu0 %v2208, 29
          %v2216 = vpop.permute.xlu0 %2215
          %2217 = vrot.lane.b32.xlu0 %v2212, 29
          %v2218 = vpop.permute.xlu0 %2217
          %v2219 = vsel %vm1247, %v2214, %v2216
          %v2220 = vsel %vm1247, %v2216, %v2218
          %v2223 = vadd.f32 %v2195, %v2219
          %v2224 = vadd.f32 %v2196, %v2220
          %s2225 = sld [smem:[#allocation9 + $0x5f]]
          %2226 = vrot.lane.b32.xlu0 %v1337, 28
          %v2227 = vpop.permute.xlu0 %2226
          %2228 = vrot.lane.b32.xlu0 %v1341, 28
          %v2229 = vpop.permute.xlu0 %2228
          %2230 = vrot.lane.b32.xlu0 %v1345, 28
          %v2231 = vpop.permute.xlu0 %2230
          %v2232 = vsel %vm1261, %v2227, %v2229
          %v2233 = vsel %vm1261, %v2229, %v2231
          %v2236 = vsel %vm289, %v2232, 0.0
          %v2237 = vsel %vm290, %v2233, 0.0
          %v2238 = vstv %s2225
          %v2239 = vmul.f32 %v2238, %v2236
          %v2240 = vmul.f32 %v2238, %v2237
          %v2241 = vadd.f32 %v2223, %v2239
          %v2242 = vadd.f32 %v2224, %v2240
          %s2243 = sld [smem:[#allocation9 + $0x60]]
          %2244 = vrot.lane.b32.xlu0 %v1337, 27
          %v2245 = vpop.permute.xlu0 %2244
          %2246 = vrot.lane.b32.xlu0 %v1341, 27
          %v2247 = vpop.permute.xlu0 %2246
          %2248 = vrot.lane.b32.xlu0 %v1345, 27
          %v2249 = vpop.permute.xlu0 %2248
          %v2250 = vsel %vm1280, %v2245, %v2247
          %v2251 = vsel %vm1280, %v2247, %v2249
          %v2254 = vsel %vm291, %v2250, 0.0
          %v2255 = vsel %vm292, %v2251, 0.0
          %v2256 = vstv %s2243
          %v2257 = vmul.f32 %v2256, %v2254
          %v2258 = vmul.f32 %v2256, %v2255
          %v2259 = vadd.f32 %v2241, %v2257
          %v2260 = vadd.f32 %v2242, %v2258
          %s2261 = sld [smem:[#allocation9 + $0x61]]
          %2262 = vrot.lane.b32.xlu0 %v1337, 26
          %v2263 = vpop.permute.xlu0 %2262
          %2264 = vrot.lane.b32.xlu0 %v1341, 26
          %v2265 = vpop.permute.xlu0 %2264
          %2266 = vrot.lane.b32.xlu0 %v1345, 26
          %v2267 = vpop.permute.xlu0 %2266
          %v2268 = vsel %vm1299, %v2263, %v2265
          %v2269 = vsel %vm1299, %v2265, %v2267
          %v2272 = vsel %vm293, %v2268, 0.0
          %v2273 = vsel %vm294, %v2269, 0.0
          %v2274 = vstv %s2261
          %v2275 = vmul.f32 %v2274, %v2272
          %v2276 = vmul.f32 %v2274, %v2273
          %v2277 = vadd.f32 %v2259, %v2275
          %v2278 = vadd.f32 %v2260, %v2276
          %v2279 = vadd.f32 %v1309, %v1166
          %v2280 = vadd.f32 %v1310, %v1167
          %v2281 = vadd.f32 %v2277, %v2141
          %v2282 = vadd.f32 %v2278, %v2142
          %v2283 = vadd.f32 %v2279, %v2281
          %v2284 = vadd.f32 %v2280, %v2282
          %v2285 = vxor.u32 %v2283, 2147483648
          %v2286 = vxor.u32 %v2284, 2147483648
          %v2287 = vmul.f32 %v2285, 1.442695
          %v2288 = vpow.pop %v2287
          %v2289 = vmul.f32 %v2286, 1.442695
          %v2290 = vpow.pop %v2289
          %v2291 = vadd.f32 %v2288, 1.0
          %v2292 = vadd.f32 %v2290, 1.0
          %v2293 = vrcp.pop %v2291
          %v2294 = vmul.f32 1.0, %v2293
          %v2295 = vrcp.pop %v2292
          %v2296 = vmul.f32 1.0, %v2295
          %v2299 = vcombine.low %v2294, %v2296
          %v2301 = vunpack.c.l.s4 1966171168
          %v2302 = vunpack.c.0.s8 %v2301
          %v2303 = vlaneseq
          %v2304 = vshrl.u32 %v2303, 7
          %v2305 = vsub.s32 %v2302, %v2304
          %v2306 = vrot.slane %v2299, %v2305
          %v2308 = vunpack.c.l.s4 1966171168
          %v2309 = vunpack.c.0.s8 %v2308
          %v2310 = vlaneseq
          %v2311 = vshrl.u32 %v2310, 7
          %v2312 = vsub.s32 %v2309, %v2311
          %v2313 = vrot.slane %v2306, %v2312
          %2315 = vst.msk [vmem:[%s189] sm:$0x3] %vm220, %v2313
        $region44: #{tpu_custom_call.1} parent=27 // pred_fallthru
          _
        %s2316 = sand.u32 %s89, 1
        %s2317 = scalar_lea.sflag [#allocation7], %s2316
        %s2318 = sand.u32 %s89, 1
        %s2319 = smul.addr %s2318, 2
        %s2320 = scalar_lea.vmem [#allocation10], %s2319
        // Predicated region
        $region45: #{tpu_custom_call.1} parent=27 // pred_check
          %p2321 = pneg %p99
        $region46: #{tpu_custom_call.1} parent=27 // pred_check_branch
          %2323 = sbr.rel (%p2321) target = $region48
        $region47: #{tpu_custom_call.1} parent=27 // pred_region
          %s2325 = ssub.s32 32, 32
          %2326 = vsyncadd %s2317, %s2325
          %s2327 = smul.addr %s24, 2
          %s2328 = smul.addr %s2327, 16
          %s2329 = scalar_lea.hbm %s2, %s2328
          %s2331 = sshll.u32 %s2320, 4
          %s2332 = int_to_ptr.vmem [resolvable:$true] %s2331
          %2334 = dma.vmem_to_hbm [thread:$0]  %s2332, 32, %s2329, %s2317
        $region48: #{tpu_custom_call.1} parent=27 // pred_fallthru
          _
      $region28: #{tpu_custom_call.1} parent=5 // pred_fallthru
        _
      %p2335 = scmp.le.s32.totalorder 2, %s15
      // Predicated region
      $region49: #{tpu_custom_call.1} parent=5 // pred_check
        %p2336 = pneg %p2335
      $region50: #{tpu_custom_call.1} parent=5 // pred_check_branch
        %2338 = sbr.rel (%p2336) target = $region52
      $region51: #{tpu_custom_call.1} parent=5 // pred_region
        %s2339 = ssub.s32 %s15, 2
        // Predicated region
        $region53: #{tpu_custom_call.1} parent=51 // pred_check
          %p2340 = pneg %p105
        $region54: #{tpu_custom_call.1} parent=51 // pred_check_branch
          %2342 = sbr.rel (%p2340) target = $region56
        $region55: #{tpu_custom_call.1} parent=51 // pred_region
          %s2343 = sand.u32 %s90, 1
          %s2344 = scalar_lea.sflag [#allocation7], %s2343
          %s2345 = sand.u32 %s90, 1
          %s2346 = smul.addr %s2345, 2
          %s2347 = scalar_lea.vmem [#allocation10], %s2346
          %2348 = dma.done %s2344, 32
        $region56: #{tpu_custom_call.1} parent=51 // pred_fallthru
          _
      $region52: #{tpu_custom_call.1} parent=5 // pred_fallthru
        _
    $region6: #{tpu_custom_call.1} parent=1 // loop_footer
      %s19 = sadd.s32 1, %s15
    $region7: #{tpu_custom_call.1} parent=1 // loop_footer_branch
      %14 = sbr.rel target = $region3
    $region8: #{tpu_custom_call.1} parent=1 // loop_exit
      _
    %2349 = vsyncpa [#allocation6], 1
    %s2350 = scalar_lea.sflag [#allocation6], 1
    %2351 = vsyncpa %s2350, 1
    %2352 = vsyncpa [#allocation7], 1
    %s2353 = scalar_lea.sflag [#allocation7], 1
    %2354 = vsyncpa %s2353, 1
    %2355 = vsyncpa [#allocation8], 1
    %s2356 = scalar_lea.sflag [#allocation8], 1
    %2357 = vsyncpa %s2356, 1

</llo_original>
